<compile_context>
chip_gen: v7x
topology: tpu7x:2x2x1
jax: 0.10.0
libtpu: 0.0.40
codegen_flags: <defaults>
</compile_context>

<pallas_src>
import jax
import jax.numpy as jnp
import numpy as np
from jax import lax
from jax.experimental import pallas as pl
from jax.experimental.pallas import tpu as pltpu

F_IN = 8       # n_input_features
P = 16         # n_channels_preproc
C = 32         # n_channels
HG = 16        # edge_gate_hidden_dim
N_LAYERS = 2   # n_gnn_layers
EPS = 1e-5     # GraphNorm eps


def _graphnorm(x, w, b, ms):
    # torch_geometric GraphNorm for a single graph (data.batch == 0 everywhere).
    mean = jnp.mean(x, axis=0, keepdims=True)
    out = x - ms * mean
    var = jnp.mean(out * out, axis=0, keepdims=True)
    return w * out * lax.rsqrt(var + EPS) + b


# ------------------------------------------------------------------- kernel --
def ggnn_fused_kernel(
        # scalar-prefetch (SMEM) edge indices
        row_ref, col_ref,
        # VMEM inputs
        x_ref, norm_ref, ea_ref,
        wp_ref, bp_ref, gnp_w_ref, gnp_b_ref, gnp_ms_ref,
        fc1_w_ref, fc1_b_ref, fc2_w_ref, fc2_b_ref,
        eg_w1i_ref, eg_w1j_ref, eg_w1e_ref, eg_b1_ref,
        eg_w2_ref, eg_b2_ref, eg_w3t_ref, eg_b3_ref,
        gru_wzx_ref, gru_wza_ref, gru_bz_ref,
        gru_wrx_ref, gru_wra_ref, gru_br_ref,
        gru_whx_ref, gru_wha_ref, gru_bh_ref,
        dense_wni_ref, dense_wh_ref, dense_b_ref,
        fin1_wni_ref, fin1_wh_ref, fin1_b_ref,
        gnf_w_ref, gnf_b_ref, gnf_ms_ref,
        fin2_w_ref, fin2_b_ref,
        # output
        out_ref,
        # VMEM scratch
        h_ref, aggr_ref, xj_ref, xi_ref):
    f32 = jnp.float32
    num_e = xj_ref.shape[0]

    # ------------------------------ preproc block ------------------------------
    y = jnp.dot(x_ref[...], wp_ref[...], preferred_element_type=f32) + bp_ref[...]
    y = _graphnorm(y, gnp_w_ref[...], gnp_b_ref[...], gnp_ms_ref[...])
    y = jax.nn.relu(y)                                   # preproc_activation
    # fc_input_1 / fc_input_2 kept as separate matmuls (no fuse-then-lane-slice).
    ni = jax.nn.relu(
        jnp.dot(y, fc1_w_ref[...], preferred_element_type=f32) + fc1_b_ref[...])
    h_ref[...] = jax.nn.relu(
        jnp.dot(y, fc2_w_ref[...], preferred_element_type=f32) + fc2_b_ref[...])

    # -------- layer-invariant terms hoisted out of the tied-layer loop --------
    ea_w1 = ea_ref[...] * eg_w1e_ref[...] + eg_b1_ref[...]              # (E, HG)
    norm_e = norm_ref[...]                                              # (E, 1)
    ni_dense = (jnp.dot(ni, dense_wni_ref[...], preferred_element_type=f32)
                + dense_b_ref[...])                                     # (N, C)

    # tie_gnn_layers=True -> shared weights, static unroll.
    for _ in range(N_LAYERS):
        # TODO(synk): dropout layers are identity (dropout_rate=0.0 / eval mode).

        # ---- gather x_j = h[row], x_i = h[col] via SMEM indices, O(E*C) ----
        def gather_body(e, carry):
            r = row_ref[e]
            c = col_ref[e]
            xj_ref[pl.ds(e, 1), :] = h_ref[pl.ds(r, 1), :]
            xi_ref[pl.ds(e, 1), :] = h_ref[pl.ds(c, 1), :]
            return carry
        lax.fori_loop(0, num_e, gather_body, 0)

        x_j = xj_ref[...]
        x_i = xi_ref[...]
        # edge-gate MLP: first layer as two K=C matmuls (no (E,2C) concat copy);
        # the edge_attr column + bias is the hoisted ea_w1 term.
        g = jax.nn.relu(
            jnp.dot(x_i, eg_w1i_ref[...], preferred_element_type=f32)
            + jnp.dot(x_j, eg_w1j_ref[...], preferred_element_type=f32)
            + ea_w1)
        g = jax.nn.relu(
            jnp.dot(g, eg_w2_ref[...], preferred_element_type=f32) + eg_b2_ref[...])
        logit = jnp.sum(g * eg_w3t_ref[...], axis=-1, keepdims=True) + eg_b3_ref[...]
        gate = jax.nn.sigmoid(logit)                                    # (E, 1)
        # fold gate & GCN norm into one (E,1) scale; messages stay in f32.
        xj_ref[...] = (gate * norm_e) * x_j          # reuse x_j buffer as msg buf

        # ---- scatter-add aggr[col] += msg via SMEM indices, O(E*C) ----
        aggr_ref[...] = jnp.zeros_like(aggr_ref)

        def scatter_body(e, carry):
            c = col_ref[e]
            aggr_ref[pl.ds(c, 1), :] = (aggr_ref[pl.ds(c, 1), :]
                                        + xj_ref[pl.ds(e, 1), :])
            return carry
        lax.fori_loop(0, num_e, scatter_body, 0)

        # ---- GRU-style update: separate per-gate matmuls, no lane-slices ----
        aggr = aggr_ref[...]
        h = h_ref[...]
        z = jax.nn.sigmoid(
            jnp.dot(h, gru_wzx_ref[...], preferred_element_type=f32)
            + jnp.dot(aggr, gru_wza_ref[...], preferred_element_type=f32)
            + gru_bz_ref[...])
        r = jax.nn.sigmoid(
            jnp.dot(h, gru_wrx_ref[...], preferred_element_type=f32)
            + jnp.dot(aggr, gru_wra_ref[...], preferred_element_type=f32)
            + gru_br_ref[...])
        hc = jax.nn.relu(
            jnp.dot(r * h, gru_whx_ref[...], preferred_element_type=f32)
            + jnp.dot(aggr, gru_wha_ref[...], preferred_element_type=f32)
            + gru_bh_ref[...])
        conv = (1.0 - z) * h + z * hc
        # tied dense layer on concat([node_identity, conv]); ni half hoisted.
        h_ref[...] = jax.nn.relu(
            ni_dense + jnp.dot(conv, dense_wh_ref[...], preferred_element_type=f32))

    # ------------------------------ prediction head ----------------------------
    h = h_ref[...]
    t = (jnp.dot(ni, fin1_wni_ref[...], preferred_element_type=f32)
         + jnp.dot(h, fin1_wh_ref[...], preferred_element_type=f32)
         + fin1_b_ref[...])
    t = _graphnorm(t, gnf_w_ref[...], gnf_b_ref[...], gnf_ms_ref[...])
    t = jax.nn.relu(t)
    out_ref[...] = (jnp.dot(t, fin2_w_ref[...], preferred_element_type=f32)
                    + fin2_b_ref[...])


# ---------------------------------------------------------------- graph prep --
def build_graph_tensors(edge_index, edge_attr, num_nodes):
    # self-loops + symmetric GCN norm (matches add_self_loops / degree in torch).
    loops = jnp.arange(num_nodes, dtype=edge_index.dtype)
    row = jnp.concatenate([edge_index[0], loops]).astype(jnp.int32)   # source j
    col = jnp.concatenate([edge_index[1], loops]).astype(jnp.int32)   # target i
    ea = jnp.concatenate(
        [edge_attr, jnp.ones((num_nodes, 1), jnp.float32)], axis=0)
    deg = jnp.zeros((num_nodes,), jnp.float32).at[col].add(1.0)
    deg_inv_sqrt = jnp.where(deg > 0, lax.rsqrt(deg), 0.0)
    norm = (deg_inv_sqrt[row] * deg_inv_sqrt[col]).reshape(-1, 1)
    return row, col, norm, ea


# ------------------------------------------------------------------- wrapper --
def ggnn_model_forward(x, edge_index, edge_attr, p):
    n = x.shape[0]
    row, col, norm, ea = build_graph_tensors(edge_index, edge_attr, n)
    e = int(row.shape[0])

    # Weight splits at ROW (sublane) boundaries -> no lane-offset slicing inside
    # the kernel (x_i / x_j / aggr halves get their own (C, out) matrices).
    eg_w1_i = p['eg_w1'][:C]                 # (C, HG)   multiplies x_i
    eg_w1_j = p['eg_w1'][C:2 * C]            # (C, HG)   multiplies x_j
    eg_w1_e = p['eg_w1'][2 * C:]             # (1, HG)   multiplies edge_attr
    eg_w3t = jnp.transpose(p['eg_w3'])       # (1, HG)
    gru_wzx, gru_wza = p['gru_wz'][:C], p['gru_wz'][C:]
    gru_wrx, gru_wra = p['gru_wr'][:C], p['gru_wr'][C:]
    gru_whx, gru_wha = p['gru_wh'][:C], p['gru_wh'][C:]
    dense_wni, dense_wh = p['dense_w'][:C], p['dense_w'][C:]
    fin1_wni, fin1_wh = p['fin1_w'][:C], p['fin1_w'][C:]

    array_args = (
        x, norm, ea,
        p['preproc_w'], p['preproc_b'],
        p['gn_pre_w'], p['gn_pre_b'], p['gn_pre_ms'],
        p['fc1_w'], p['fc1_b'], p['fc2_w'], p['fc2_b'],
        eg_w1_i, eg_w1_j, eg_w1_e, p['eg_b1'],
        p['eg_w2'], p['eg_b2'], eg_w3t, p['eg_b3'],
        gru_wzx, gru_wza, p['gru_bz'],
        gru_wrx, gru_wra, p['gru_br'],
        gru_whx, gru_wha, p['gru_bh'],
        dense_wni, dense_wh, p['dense_b'],
        fin1_wni, fin1_wh, p['fin1_b'],
        p['gn_fin_w'], p['gn_fin_b'], p['gn_fin_ms'],
        p['fin2_w'], p['fin2_b'],
    )

    in_specs = [pl.BlockSpec(memory_space=pltpu.MemorySpace.VMEM)
                for _ in array_args]
    out_spec = pl.BlockSpec(memory_space=pltpu.MemorySpace.VMEM)
    scratch_shapes = [
        pltpu.VMEM((n, C), jnp.float32),   # h  (node state, f32)
        pltpu.VMEM((n, C), jnp.float32),   # aggr accumulator
        pltpu.VMEM((e, C), jnp.float32),   # x_j / msg buffer
        pltpu.VMEM((e, C), jnp.float32),   # x_i buffer
    ]

    # VMEM budget: resident args + scratch + output with headroom, capped below
    # v7x's 64 MiB physical VMEM (default scoped limit is only 16/32 MiB).
    arg_bytes = sum(int(a.size) * a.dtype.itemsize for a in array_args)
    scratch_bytes = (2 * n * C + 2 * e * C) * 4
    out_bytes = n * 2 * 4
    vmem_limit = int(min(max(4 * (arg_bytes + scratch_bytes + out_bytes),
                             8 * 1024 * 1024),
                         48 * 1024 * 1024))

    # Advisory cost estimate (edge ops are now O(E*C), node ops O(N*C^2)).
    flops = int(
        2 * n * F_IN * P + 2 * (2 * n * P * C)
        + N_LAYERS * (2 * (2 * e * C * HG) + 2 * e * HG * HG + 2 * e * HG
                      + 3 * e * C
                      + 6 * (2 * n * C * C) + 2 * n * C * C)
        + 2 * (2 * n * C * C) + 2 * n * C * 2)
    transcendentals = int(N_LAYERS * (e + 2 * n * C))
    bytes_accessed = int(arg_bytes + out_bytes + 2 * e * 4)

    grid_spec = pltpu.PrefetchScalarGridSpec(
        num_scalar_prefetch=2,          # row, col edge indices -> SMEM
        grid=(1,),
        in_specs=in_specs,
        out_specs=out_spec,
        scratch_shapes=scratch_shapes,
    )

    # TODO(synk): for multi-graph batches / large E, add an edge-tiled grid axis
    # (pl.Buffered pipelining, "arbitrary" accumulator axis) plus a "parallel"
    # axis so both v7x TensorCores are used.
    return pl.pallas_call(
        ggnn_fused_kernel,
        out_shape=jax.ShapeDtypeStruct((n, 2), jnp.float32),
        grid_spec=grid_spec,
        compiler_params=pltpu.CompilerParams(
            dimension_semantics=("arbitrary",),
            vmem_limit_bytes=vmem_limit),
        cost_estimate=pl.CostEstimate(flops=flops,
                                      transcendentals=transcendentals,
                                      bytes_accessed=bytes_accessed),
    )(row, col, *array_args)


# -------------------------------------------------------- pure-JAX reference --
def reference_forward(x, edge_index, edge_attr, p):
    n = x.shape[0]
    loops = jnp.arange(n, dtype=edge_index.dtype)
    row = jnp.concatenate([edge_index[0], loops])
    col = jnp.concatenate([edge_index[1], loops])
    ea = jnp.concatenate([edge_attr, jnp.ones((n, 1), jnp.float32)], axis=0)
    deg = jnp.zeros((n,), jnp.float32).at[col].add(1.0)
    dis = jnp.where(deg > 0, lax.rsqrt(deg), 0.0)
    norm = (dis[row] * dis[col]).reshape(-1, 1)

    y = x @ p['preproc_w'] + p['preproc_b']
    y = _graphnorm(y, p['gn_pre_w'], p['gn_pre_b'], p['gn_pre_ms'])
    y = jax.nn.relu(y)
    ni = jax.nn.relu(y @ p['fc1_w'] + p['fc1_b'])
    h = jax.nn.relu(y @ p['fc2_w'] + p['fc2_b'])
    for _ in range(N_LAYERS):
        x_j = h[row]
        x_i = h[col]
        gate_in = jnp.concatenate([x_i, x_j, ea], axis=-1)
        g = jax.nn.relu(gate_in @ p['eg_w1'] + p['eg_b1'])
        g = jax.nn.relu(g @ p['eg_w2'] + p['eg_b2'])
        gate = jax.nn.sigmoid(g @ p['eg_w3'] + p['eg_b3'])
        msg = gate * (norm * x_j)
        aggr = jnp.zeros((n, C), jnp.float32).at[col].add(msg)
        xa = jnp.concatenate([h, aggr], axis=-1)
        z = jax.nn.sigmoid(xa @ p['gru_wz'] + p['gru_bz'])
        r = jax.nn.sigmoid(xa @ p['gru_wr'] + p['gru_br'])
        hc = jax.nn.relu(jnp.concatenate([r * h, aggr], axis=-1) @ p['gru_wh']
                         + p['gru_bh'])
        conv = (1.0 - z) * h + z * hc
        h = jax.nn.relu(jnp.concatenate([ni, conv], axis=-1) @ p['dense_w']
                        + p['dense_b'])
    t = jnp.concatenate([ni, h], axis=-1) @ p['fin1_w'] + p['fin1_b']
    t = _graphnorm(t, p['gn_fin_w'], p['gn_fin_b'], p['gn_fin_ms'])
    t = jax.nn.relu(t)
    return t @ p['fin2_w'] + p['fin2_b']


def init_params(key):
    keys = jax.random.split(key, 12)

    def lin(k, i, o, scale=0.1):
        kw, kb = jax.random.split(k)
        w = jax.random.normal(kw, (i, o), jnp.float32) * scale
        b = jax.random.normal(kb, (1, o), jnp.float32) * scale
        return w, b

    p = {}
    p['preproc_w'], p['preproc_b'] = lin(keys[0], F_IN, P)
    p['gn_pre_w'] = jnp.ones((1, P), jnp.float32)
    p['gn_pre_b'] = jnp.zeros((1, P), jnp.float32)
    p['gn_pre_ms'] = jnp.ones((1, P), jnp.float32)
    p['fc1_w'], p['fc1_b'] = lin(keys[1], P, C)
    p['fc2_w'], p['fc2_b'] = lin(keys[2], P, C)
    # edge gate: Linear(2C+1,HG) -> ReLU -> Linear(HG,HG) -> ReLU -> Linear(HG,1)
    p['eg_w1'], p['eg_b1'] = lin(keys[3], 2 * C + 1, HG)
    p['eg_w2'], p['eg_b2'] = lin(keys[4], HG, HG)
    p['eg_w3'], p['eg_b3'] = lin(keys[5], HG, 1)
    # GRU update linears on concat([x, aggr])
    p['gru_wz'], p['gru_bz'] = lin(keys[6], 2 * C, C)
    p['gru_wr'], p['gru_br'] = lin(keys[7], 2 * C, C)
    p['gru_wh'], p['gru_bh'] = lin(keys[8], 2 * C, C)
    # tied dense layer on concat([node_identity, h])
    p['dense_w'], p['dense_b'] = lin(keys[9], 2 * C, C)
    # prediction head
    p['fin1_w'], p['fin1_b'] = lin(keys[10], 2 * C, C)
    p['gn_fin_w'] = jnp.ones((1, C), jnp.float32)
    p['gn_fin_b'] = jnp.zeros((1, C), jnp.float32)
    p['gn_fin_ms'] = jnp.ones((1, C), jnp.float32)
    p['fin2_w'], p['fin2_b'] = lin(keys[11], C, 2)
    return p


if __name__ == "__main__":
    key = jax.random.PRNGKey(0)
    k_x, k_ea, k_params = jax.random.split(key, 3)

    num_nodes = 32
    # deterministic ring graph, both directions (64 directed edges)
    src = np.arange(num_nodes)
    dst = (src + 1) % num_nodes
    row = np.concatenate([src, dst])
    col = np.concatenate([dst, src])
    edge_index = jnp.asarray(np.stack([row, col]), dtype=jnp.int32)   # (2, 64)

    x = jax.random.normal(k_x, (num_nodes, F_IN), jnp.float32)
    edge_attr = jax.random.normal(k_ea, (edge_index.shape[1], 1), jnp.float32)
    params = init_params(k_params)

    out = ggnn_model_forward(x, edge_index, edge_attr, params)
    out = jax.block_until_ready(out)

    ref = jax.block_until_ready(reference_forward(x, edge_index, edge_attr, params))
    # All hidden state is f32 now; remaining divergence comes from MXU matmul
    # pass-precision differences vs XLA's default f32 matmul and summation order.
    np.testing.assert_allclose(np.asarray(out), np.asarray(ref),
                               rtol=1e-2, atol=1e-2)
    assert out.shape == (num_nodes, 2)
    print("KERNEL_OK")
</pallas_src>

<mosaic_0001>
module attributes {stable_mosaic.version = 11 : i64} {
  func.func @ggnn_fused_kernel(%arg0: i32, %arg1: memref<96xi32, #tpu.memory_space<smem>>, %arg2: memref<96xi32, #tpu.memory_space<smem>>, %arg3: memref<32x8xf32, #tpu.memory_space<vmem>>, %arg4: memref<96x1xf32, #tpu.memory_space<vmem>>, %arg5: memref<96x1xf32, #tpu.memory_space<vmem>>, %arg6: memref<8x16xf32, #tpu.memory_space<vmem>>, %arg7: memref<1x16xf32, #tpu.memory_space<vmem>>, %arg8: memref<1x16xf32, #tpu.memory_space<vmem>>, %arg9: memref<1x16xf32, #tpu.memory_space<vmem>>, %arg10: memref<1x16xf32, #tpu.memory_space<vmem>>, %arg11: memref<16x32xf32, #tpu.memory_space<vmem>>, %arg12: memref<1x32xf32, #tpu.memory_space<vmem>>, %arg13: memref<16x32xf32, #tpu.memory_space<vmem>>, %arg14: memref<1x32xf32, #tpu.memory_space<vmem>>, %arg15: memref<32x16xf32, #tpu.memory_space<vmem>>, %arg16: memref<32x16xf32, #tpu.memory_space<vmem>>, %arg17: memref<1x16xf32, #tpu.memory_space<vmem>>, %arg18: memref<1x16xf32, #tpu.memory_space<vmem>>, %arg19: memref<16x16xf32, #tpu.memory_space<vmem>>, %arg20: memref<1x16xf32, #tpu.memory_space<vmem>>, %arg21: memref<1x16xf32, #tpu.memory_space<vmem>>, %arg22: memref<1x1xf32, #tpu.memory_space<vmem>>, %arg23: memref<32x32xf32, #tpu.memory_space<vmem>>, %arg24: memref<32x32xf32, #tpu.memory_space<vmem>>, %arg25: memref<1x32xf32, #tpu.memory_space<vmem>>, %arg26: memref<32x32xf32, #tpu.memory_space<vmem>>, %arg27: memref<32x32xf32, #tpu.memory_space<vmem>>, %arg28: memref<1x32xf32, #tpu.memory_space<vmem>>, %arg29: memref<32x32xf32, #tpu.memory_space<vmem>>, %arg30: memref<32x32xf32, #tpu.memory_space<vmem>>, %arg31: memref<1x32xf32, #tpu.memory_space<vmem>>, %arg32: memref<32x32xf32, #tpu.memory_space<vmem>>, %arg33: memref<32x32xf32, #tpu.memory_space<vmem>>, %arg34: memref<1x32xf32, #tpu.memory_space<vmem>>, %arg35: memref<32x32xf32, #tpu.memory_space<vmem>>, %arg36: memref<32x32xf32, #tpu.memory_space<vmem>>, %arg37: memref<1x32xf32, #tpu.memory_space<vmem>>, %arg38: memref<1x32xf32, #tpu.memory_space<vmem>>, %arg39: memref<1x32xf32, #tpu.memory_space<vmem>>, %arg40: memref<1x32xf32, #tpu.memory_space<vmem>>, %arg41: memref<32x2xf32, #tpu.memory_space<vmem>>, %arg42: memref<1x2xf32, #tpu.memory_space<vmem>>, %arg43: memref<32x2xf32, #tpu.memory_space<vmem>>, %arg44: memref<32x32xf32, #tpu.memory_space<vmem>>, %arg45: memref<32x32xf32, #tpu.memory_space<vmem>>, %arg46: memref<96x32xf32, #tpu.memory_space<vmem>>, %arg47: memref<96x32xf32, #tpu.memory_space<vmem>>) attributes {dimension_semantics = [#tpu.dimension_semantics<arbitrary>], iteration_bounds = array<i64: 1>, scalar_prefetch = 2 : i64, scratch_operands = 4 : i64, tpu.core_type = #tpu.core_type<tc>, window_params = [{pipeline_mode = #tpu.pipeline_mode<synchronous>, transform_indices = @transform_0, window_bounds = array<i64: 32, 8>}, {pipeline_mode = #tpu.pipeline_mode<synchronous>, transform_indices = @transform_1, window_bounds = array<i64: 96, 1>}, {pipeline_mode = #tpu.pipeline_mode<synchronous>, transform_indices = @transform_2, window_bounds = array<i64: 96, 1>}, {pipeline_mode = #tpu.pipeline_mode<synchronous>, transform_indices = @transform_3, window_bounds = array<i64: 8, 16>}, {pipeline_mode = #tpu.pipeline_mode<synchronous>, transform_indices = @transform_4, window_bounds = array<i64: 1, 16>}, {pipeline_mode = #tpu.pipeline_mode<synchronous>, transform_indices = @transform_5, window_bounds = array<i64: 1, 16>}, {pipeline_mode = #tpu.pipeline_mode<synchronous>, transform_indices = @transform_6, window_bounds = array<i64: 1, 16>}, {pipeline_mode = #tpu.pipeline_mode<synchronous>, transform_indices = @transform_7, window_bounds = array<i64: 1, 16>}, {pipeline_mode = #tpu.pipeline_mode<synchronous>, transform_indices = @transform_8, window_bounds = array<i64: 16, 32>}, {pipeline_mode = #tpu.pipeline_mode<synchronous>, transform_indices = @transform_9, window_bounds = array<i64: 1, 32>}, {pipeline_mode = #tpu.pipeline_mode<synchronous>, transform_indices = @transform_10, window_bounds = array<i64: 16, 32>}, {pipeline_mode = #tpu.pipeline_mode<synchronous>, transform_indices = @transform_11, window_bounds = array<i64: 1, 32>}, {pipeline_mode = #tpu.pipeline_mode<synchronous>, transform_indices = @transform_12, window_bounds = array<i64: 32, 16>}, {pipeline_mode = #tpu.pipeline_mode<synchronous>, transform_indices = @transform_13, window_bounds = array<i64: 32, 16>}, {pipeline_mode = #tpu.pipeline_mode<synchronous>, transform_indices = @transform_14, window_bounds = array<i64: 1, 16>}, {pipeline_mode = #tpu.pipeline_mode<synchronous>, transform_indices = @transform_15, window_bounds = array<i64: 1, 16>}, {pipeline_mode = #tpu.pipeline_mode<synchronous>, transform_indices = @transform_16, window_bounds = array<i64: 16, 16>}, {pipeline_mode = #tpu.pipeline_mode<synchronous>, transform_indices = @transform_17, window_bounds = array<i64: 1, 16>}, {pipeline_mode = #tpu.pipeline_mode<synchronous>, transform_indices = @transform_18, window_bounds = array<i64: 1, 16>}, {pipeline_mode = #tpu.pipeline_mode<synchronous>, transform_indices = @transform_19, window_bounds = array<i64: 1, 1>}, {pipeline_mode = #tpu.pipeline_mode<synchronous>, transform_indices = @transform_20, window_bounds = array<i64: 32, 32>}, {pipeline_mode = #tpu.pipeline_mode<synchronous>, transform_indices = @transform_21, window_bounds = array<i64: 32, 32>}, {pipeline_mode = #tpu.pipeline_mode<synchronous>, transform_indices = @transform_22, window_bounds = array<i64: 1, 32>}, {pipeline_mode = #tpu.pipeline_mode<synchronous>, transform_indices = @transform_23, window_bounds = array<i64: 32, 32>}, {pipeline_mode = #tpu.pipeline_mode<synchronous>, transform_indices = @transform_24, window_bounds = array<i64: 32, 32>}, {pipeline_mode = #tpu.pipeline_mode<synchronous>, transform_indices = @transform_25, window_bounds = array<i64: 1, 32>}, {pipeline_mode = #tpu.pipeline_mode<synchronous>, transform_indices = @transform_26, window_bounds = array<i64: 32, 32>}, {pipeline_mode = #tpu.pipeline_mode<synchronous>, transform_indices = @transform_27, window_bounds = array<i64: 32, 32>}, {pipeline_mode = #tpu.pipeline_mode<synchronous>, transform_indices = @transform_28, window_bounds = array<i64: 1, 32>}, {pipeline_mode = #tpu.pipeline_mode<synchronous>, transform_indices = @transform_29, window_bounds = array<i64: 32, 32>}, {pipeline_mode = #tpu.pipeline_mode<synchronous>, transform_indices = @transform_30, window_bounds = array<i64: 32, 32>}, {pipeline_mode = #tpu.pipeline_mode<synchronous>, transform_indices = @transform_31, window_bounds = array<i64: 1, 32>}, {pipeline_mode = #tpu.pipeline_mode<synchronous>, transform_indices = @transform_32, window_bounds = array<i64: 32, 32>}, {pipeline_mode = #tpu.pipeline_mode<synchronous>, transform_indices = @transform_33, window_bounds = array<i64: 32, 32>}, {pipeline_mode = #tpu.pipeline_mode<synchronous>, transform_indices = @transform_34, window_bounds = array<i64: 1, 32>}, {pipeline_mode = #tpu.pipeline_mode<synchronous>, transform_indices = @transform_35, window_bounds = array<i64: 1, 32>}, {pipeline_mode = #tpu.pipeline_mode<synchronous>, transform_indices = @transform_36, window_bounds = array<i64: 1, 32>}, {pipeline_mode = #tpu.pipeline_mode<synchronous>, transform_indices = @transform_37, window_bounds = array<i64: 1, 32>}, {pipeline_mode = #tpu.pipeline_mode<synchronous>, transform_indices = @transform_38, window_bounds = array<i64: 32, 2>}, {pipeline_mode = #tpu.pipeline_mode<synchronous>, transform_indices = @transform_39, window_bounds = array<i64: 1, 2>}, {pipeline_mode = #tpu.pipeline_mode<synchronous>, transform_indices = @transform_40, window_bounds = array<i64: 32, 2>}]} {
    %c0 = arith.constant 0 : index
    %c0_0 = arith.constant 0 : index
    %0 = vector.load %arg3[%c0, %c0_0] : memref<32x8xf32, #tpu.memory_space<vmem>>, vector<32x8xf32>
    %c0_1 = arith.constant 0 : index
    %c0_2 = arith.constant 0 : index
    %1 = vector.load %arg6[%c0_1, %c0_2] : memref<8x16xf32, #tpu.memory_space<vmem>>, vector<8x16xf32>
    %cst = arith.constant dense<0.000000e+00> : vector<32x16xf32>
    %2 = tpu.matmul %0, %1, %cst {dimension_numbers = #tpu.dot_dimension_numbers<[1], [0], [0], [1], [0, 0, 1, 1], [], []>} : vector<32x8xf32>, vector<8x16xf32>, vector<32x16xf32> -> vector<32x16xf32>
    %c0_3 = arith.constant 0 : index
    %c0_4 = arith.constant 0 : index
    %3 = vector.load %arg7[%c0_3, %c0_4] : memref<1x16xf32, #tpu.memory_space<vmem>>, vector<1x16xf32>
    %4 = vector.broadcast %3 : vector<1x16xf32> to vector<32x16xf32>
    %5 = arith.addf %2, %4 : vector<32x16xf32>
    %c0_5 = arith.constant 0 : index
    %c0_6 = arith.constant 0 : index
    %6 = vector.load %arg8[%c0_5, %c0_6] : memref<1x16xf32, #tpu.memory_space<vmem>>, vector<1x16xf32>
    %c0_7 = arith.constant 0 : index
    %c0_8 = arith.constant 0 : index
    %7 = vector.load %arg9[%c0_7, %c0_8] : memref<1x16xf32, #tpu.memory_space<vmem>>, vector<1x16xf32>
    %c0_9 = arith.constant 0 : index
    %c0_10 = arith.constant 0 : index
    %8 = vector.load %arg10[%c0_9, %c0_10] : memref<1x16xf32, #tpu.memory_space<vmem>>, vector<1x16xf32>
    %cst_11 = arith.constant dense<0.000000e+00> : vector<16xf32>
    %9 = vector.multi_reduction <add>, %5, %cst_11 [0] : vector<32x16xf32> to vector<16xf32>
    %10 = vector.shape_cast %9 : vector<16xf32> to vector<1x16xf32>
    %cst_12 = arith.constant 3.200000e+01 : f32
    %11 = vector.broadcast %cst_12 : f32 to vector<1x16xf32>
    %12 = arith.divf %10, %11 : vector<1x16xf32>
    %13 = arith.mulf %8, %12 : vector<1x16xf32>
    %14 = vector.broadcast %13 : vector<1x16xf32> to vector<32x16xf32>
    %15 = arith.subf %5, %14 : vector<32x16xf32>
    %16 = arith.mulf %15, %15 : vector<32x16xf32>
    %cst_13 = arith.constant dense<0.000000e+00> : vector<16xf32>
    %17 = vector.multi_reduction <add>, %16, %cst_13 [0] : vector<32x16xf32> to vector<16xf32>
    %18 = vector.shape_cast %17 : vector<16xf32> to vector<1x16xf32>
    %cst_14 = arith.constant 3.200000e+01 : f32
    %19 = vector.broadcast %cst_14 : f32 to vector<1x16xf32>
    %20 = arith.divf %18, %19 : vector<1x16xf32>
    %21 = vector.broadcast %6 : vector<1x16xf32> to vector<32x16xf32>
    %22 = arith.mulf %21, %15 : vector<32x16xf32>
    %cst_15 = arith.constant 9.99999974E-6 : f32
    %23 = vector.broadcast %cst_15 : f32 to vector<1x16xf32>
    %24 = arith.addf %20, %23 : vector<1x16xf32>
    %25 = math.rsqrt %24 : vector<1x16xf32>
    %26 = vector.broadcast %25 : vector<1x16xf32> to vector<32x16xf32>
    %27 = arith.mulf %22, %26 : vector<32x16xf32>
    %28 = vector.broadcast %7 : vector<1x16xf32> to vector<32x16xf32>
    %29 = arith.addf %27, %28 : vector<32x16xf32>
    %cst_16 = arith.constant 0.000000e+00 : f32
    %30 = vector.broadcast %cst_16 : f32 to vector<32x16xf32>
    %31 = arith.maximumf %29, %30 : vector<32x16xf32>
    %c0_17 = arith.constant 0 : index
    %c0_18 = arith.constant 0 : index
    %32 = vector.load %arg11[%c0_17, %c0_18] : memref<16x32xf32, #tpu.memory_space<vmem>>, vector<16x32xf32>
    %cst_19 = arith.constant dense<0.000000e+00> : vector<32x32xf32>
    %33 = tpu.matmul %31, %32, %cst_19 {dimension_numbers = #tpu.dot_dimension_numbers<[1], [0], [0], [1], [0, 0, 1, 1], [], []>} : vector<32x16xf32>, vector<16x32xf32>, vector<32x32xf32> -> vector<32x32xf32>
    %c0_20 = arith.constant 0 : index
    %c0_21 = arith.constant 0 : index
    %34 = vector.load %arg12[%c0_20, %c0_21] : memref<1x32xf32, #tpu.memory_space<vmem>>, vector<1x32xf32>
    %35 = vector.broadcast %34 : vector<1x32xf32> to vector<32x32xf32>
    %36 = arith.addf %33, %35 : vector<32x32xf32>
    %cst_22 = arith.constant 0.000000e+00 : f32
    %37 = vector.broadcast %cst_22 : f32 to vector<32x32xf32>
    %38 = arith.maximumf %36, %37 : vector<32x32xf32>
    %c0_23 = arith.constant 0 : index
    %c0_24 = arith.constant 0 : index
    %39 = vector.load %arg13[%c0_23, %c0_24] : memref<16x32xf32, #tpu.memory_space<vmem>>, vector<16x32xf32>
    %cst_25 = arith.constant dense<0.000000e+00> : vector<32x32xf32>
    %40 = tpu.matmul %31, %39, %cst_25 {dimension_numbers = #tpu.dot_dimension_numbers<[1], [0], [0], [1], [0, 0, 1, 1], [], []>} : vector<32x16xf32>, vector<16x32xf32>, vector<32x32xf32> -> vector<32x32xf32>
    %c0_26 = arith.constant 0 : index
    %c0_27 = arith.constant 0 : index
    %41 = vector.load %arg14[%c0_26, %c0_27] : memref<1x32xf32, #tpu.memory_space<vmem>>, vector<1x32xf32>
    %42 = vector.broadcast %41 : vector<1x32xf32> to vector<32x32xf32>
    %43 = arith.addf %40, %42 : vector<32x32xf32>
    %cst_28 = arith.constant 0.000000e+00 : f32
    %44 = vector.broadcast %cst_28 : f32 to vector<32x32xf32>
    %45 = arith.maximumf %43, %44 : vector<32x32xf32>
    %c0_29 = arith.constant 0 : index
    %c0_30 = arith.constant 0 : index
    %46 = vector.load %arg44[%c0_29, %c0_30] : memref<32x32xf32, #tpu.memory_space<vmem>>, vector<32x32xf32>
    tpu.vector_store %arg44[%c0_29, %c0_30], %45 {strides = array<i32>} : memref<32x32xf32, #tpu.memory_space<vmem>>, vector<32x32xf32>,
    %c0_31 = arith.constant 0 : index
    %c0_32 = arith.constant 0 : index
    %47 = vector.load %arg5[%c0_31, %c0_32] : memref<96x1xf32, #tpu.memory_space<vmem>>, vector<96x1xf32>
    %c0_33 = arith.constant 0 : index
    %c0_34 = arith.constant 0 : index
    %48 = vector.load %arg17[%c0_33, %c0_34] : memref<1x16xf32, #tpu.memory_space<vmem>>, vector<1x16xf32>
    %49 = vector.broadcast %47 : vector<96x1xf32> to vector<96x16xf32>
    %50 = vector.broadcast %48 : vector<1x16xf32> to vector<96x16xf32>
    %51 = arith.mulf %49, %50 : vector<96x16xf32>
    %c0_35 = arith.constant 0 : index
    %c0_36 = arith.constant 0 : index
    %52 = vector.load %arg18[%c0_35, %c0_36] : memref<1x16xf32, #tpu.memory_space<vmem>>, vector<1x16xf32>
    %53 = vector.broadcast %52 : vector<1x16xf32> to vector<96x16xf32>
    %54 = arith.addf %51, %53 : vector<96x16xf32>
    %c0_37 = arith.constant 0 : index
    %c0_38 = arith.constant 0 : index
    %55 = vector.load %arg4[%c0_37, %c0_38] : memref<96x1xf32, #tpu.memory_space<vmem>>, vector<96x1xf32>
    %c0_39 = arith.constant 0 : index
    %c0_40 = arith.constant 0 : index
    %56 = vector.load %arg32[%c0_39, %c0_40] : memref<32x32xf32, #tpu.memory_space<vmem>>, vector<32x32xf32>
    %cst_41 = arith.constant dense<0.000000e+00> : vector<32x32xf32>
    %57 = tpu.matmul %38, %56, %cst_41 {dimension_numbers = #tpu.dot_dimension_numbers<[1], [0], [0], [1], [0, 0, 1, 1], [], []>} : vector<32x32xf32>, vector<32x32xf32>, vector<32x32xf32> -> vector<32x32xf32>
    %c0_42 = arith.constant 0 : index
    %c0_43 = arith.constant 0 : index
    %58 = vector.load %arg34[%c0_42, %c0_43] : memref<1x32xf32, #tpu.memory_space<vmem>>, vector<1x32xf32>
    %59 = vector.broadcast %58 : vector<1x32xf32> to vector<32x32xf32>
    %60 = arith.addf %57, %59 : vector<32x32xf32>
    %c0_i32 = arith.constant 0 : i32
    %c96_i32 = arith.constant 96 : i32
    %61 = arith.addi %c0_i32, %c96_i32 : i32
    %c1_i32 = arith.constant 1 : i32
    scf.for %arg48 = %c0_i32 to %61 step %c1_i32  : i32 {
      %278 = arith.index_cast %arg48 : i32 to index
      %279 = memref.load %arg1[%278] : memref<96xi32, #tpu.memory_space<smem>>
      %280 = arith.index_cast %arg48 : i32 to index
      %281 = memref.load %arg2[%280] : memref<96xi32, #tpu.memory_space<smem>>
      %282 = arith.index_cast %279 : i32 to index
      %c0_218 = arith.constant 0 : index
      %283 = vector.load %arg44[%282, %c0_218] : memref<32x32xf32, #tpu.memory_space<vmem>>, vector<1x32xf32>
      %284 = arith.index_cast %arg48 : i32 to index
      %c0_219 = arith.constant 0 : index
      %285 = vector.load %arg46[%284, %c0_219] : memref<96x32xf32, #tpu.memory_space<vmem>>, vector<1x32xf32>
      tpu.vector_store %arg46[%284, %c0_219], %283 {strides = array<i32>} : memref<96x32xf32, #tpu.memory_space<vmem>>, vector<1x32xf32>,
      %286 = arith.index_cast %281 : i32 to index
      %c0_220 = arith.constant 0 : index
      %287 = vector.load %arg44[%286, %c0_220] : memref<32x32xf32, #tpu.memory_space<vmem>>, vector<1x32xf32>
      %288 = arith.index_cast %arg48 : i32 to index
      %c0_221 = arith.constant 0 : index
      %289 = vector.load %arg47[%288, %c0_221] : memref<96x32xf32, #tpu.memory_space<vmem>>, vector<1x32xf32>
      tpu.vector_store %arg47[%288, %c0_221], %287 {strides = array<i32>} : memref<96x32xf32, #tpu.memory_space<vmem>>, vector<1x32xf32>,
    }
    %c96_i32_44 = arith.constant 96 : i32
    %c0_45 = arith.constant 0 : index
    %c0_46 = arith.constant 0 : index
    %62 = vector.load %arg46[%c0_45, %c0_46] : memref<96x32xf32, #tpu.memory_space<vmem>>, vector<96x32xf32>
    %c0_47 = arith.constant 0 : index
    %c0_48 = arith.constant 0 : index
    %63 = vector.load %arg47[%c0_47, %c0_48] : memref<96x32xf32, #tpu.memory_space<vmem>>, vector<96x32xf32>
    %c0_49 = arith.constant 0 : index
    %c0_50 = arith.constant 0 : index
    %64 = vector.load %arg15[%c0_49, %c0_50] : memref<32x16xf32, #tpu.memory_space<vmem>>, vector<32x16xf32>
    %cst_51 = arith.constant dense<0.000000e+00> : vector<96x16xf32>
    %65 = tpu.matmul %63, %64, %cst_51 {dimension_numbers = #tpu.dot_dimension_numbers<[1], [0], [0], [1], [0, 0, 1, 1], [], []>} : vector<96x32xf32>, vector<32x16xf32>, vector<96x16xf32> -> vector<96x16xf32>
    %c0_52 = arith.constant 0 : index
    %c0_53 = arith.constant 0 : index
    %66 = vector.load %arg16[%c0_52, %c0_53] : memref<32x16xf32, #tpu.memory_space<vmem>>, vector<32x16xf32>
    %cst_54 = arith.constant dense<0.000000e+00> : vector<96x16xf32>
    %67 = tpu.matmul %62, %66, %cst_54 {dimension_numbers = #tpu.dot_dimension_numbers<[1], [0], [0], [1], [0, 0, 1, 1], [], []>} : vector<96x32xf32>, vector<32x16xf32>, vector<96x16xf32> -> vector<96x16xf32>
    %68 = arith.addf %65, %67 : vector<96x16xf32>
    %69 = arith.addf %68, %54 : vector<96x16xf32>
    %cst_55 = arith.constant 0.000000e+00 : f32
    %70 = vector.broadcast %cst_55 : f32 to vector<96x16xf32>
    %71 = arith.maximumf %69, %70 : vector<96x16xf32>
    %c0_56 = arith.constant 0 : index
    %c0_57 = arith.constant 0 : index
    %72 = vector.load %arg19[%c0_56, %c0_57] : memref<16x16xf32, #tpu.memory_space<vmem>>, vector<16x16xf32>
    %cst_58 = arith.constant dense<0.000000e+00> : vector<96x16xf32>
    %73 = tpu.matmul %71, %72, %cst_58 {dimension_numbers = #tpu.dot_dimension_numbers<[1], [0], [0], [1], [0, 0, 1, 1], [], []>} : vector<96x16xf32>, vector<16x16xf32>, vector<96x16xf32> -> vector<96x16xf32>
    %c0_59 = arith.constant 0 : index
    %c0_60 = arith.constant 0 : index
    %74 = vector.load %arg20[%c0_59, %c0_60] : memref<1x16xf32, #tpu.memory_space<vmem>>, vector<1x16xf32>
    %75 = vector.broadcast %74 : vector<1x16xf32> to vector<96x16xf32>
    %76 = arith.addf %73, %75 : vector<96x16xf32>
    %cst_61 = arith.constant 0.000000e+00 : f32
    %77 = vector.broadcast %cst_61 : f32 to vector<96x16xf32>
    %78 = arith.maximumf %76, %77 : vector<96x16xf32>
    %c0_62 = arith.constant 0 : index
    %c0_63 = arith.constant 0 : index
    %79 = vector.load %arg21[%c0_62, %c0_63] : memref<1x16xf32, #tpu.memory_space<vmem>>, vector<1x16xf32>
    %80 = vector.broadcast %79 : vector<1x16xf32> to vector<96x16xf32>
    %81 = arith.mulf %78, %80 : vector<96x16xf32>
    %cst_64 = arith.constant dense<0.000000e+00> : vector<96xf32>
    %82 = vector.multi_reduction <add>, %81, %cst_64 [1] : vector<96x16xf32> to vector<96xf32>
    %83 = vector.shape_cast %82 : vector<96xf32> to vector<96x1xf32>
    %c0_65 = arith.constant 0 : index
    %c0_66 = arith.constant 0 : index
    %84 = vector.load %arg22[%c0_65, %c0_66] : memref<1x1xf32, #tpu.memory_space<vmem>>, vector<1x1xf32>
    %85 = vector.broadcast %84 : vector<1x1xf32> to vector<96x1xf32>
    %86 = arith.addf %83, %85 : vector<96x1xf32>
    %87 = arith.negf %86 : vector<96x1xf32>
    %88 = math.exp %87 : vector<96x1xf32>
    %cst_67 = arith.constant 1.000000e+00 : f32
    %89 = vector.broadcast %cst_67 : f32 to vector<96x1xf32>
    %90 = arith.addf %89, %88 : vector<96x1xf32>
    %91 = arith.divf %89, %90 : vector<96x1xf32>
    %92 = arith.mulf %91, %55 : vector<96x1xf32>
    %93 = vector.broadcast %92 : vector<96x1xf32> to vector<96x32xf32>
    %94 = arith.mulf %93, %62 : vector<96x32xf32>
    %c0_68 = arith.constant 0 : index
    %c0_69 = arith.constant 0 : index
    %95 = vector.load %arg46[%c0_68, %c0_69] : memref<96x32xf32, #tpu.memory_space<vmem>>, vector<96x32xf32>
    tpu.vector_store %arg46[%c0_68, %c0_69], %94 {strides = array<i32>} : memref<96x32xf32, #tpu.memory_space<vmem>>, vector<96x32xf32>,
    %cst_70 = arith.constant 0.000000e+00 : f32
    %96 = vector.broadcast %cst_70 : f32 to vector<32x32xf32>
    %c0_71 = arith.constant 0 : index
    %c0_72 = arith.constant 0 : index
    %97 = vector.load %arg45[%c0_71, %c0_72] : memref<32x32xf32, #tpu.memory_space<vmem>>, vector<32x32xf32>
    tpu.vector_store %arg45[%c0_71, %c0_72], %96 {strides = array<i32>} : memref<32x32xf32, #tpu.memory_space<vmem>>, vector<32x32xf32>,
    %c0_i32_73 = arith.constant 0 : i32
    %c96_i32_74 = arith.constant 96 : i32
    %98 = arith.addi %c0_i32_73, %c96_i32_74 : i32
    %c1_i32_75 = arith.constant 1 : i32
    scf.for %arg48 = %c0_i32_73 to %98 step %c1_i32_75  : i32 {
      %278 = arith.index_cast %arg48 : i32 to index
      %279 = memref.load %arg2[%278] : memref<96xi32, #tpu.memory_space<smem>>
      %280 = arith.index_cast %279 : i32 to index
      %c0_218 = arith.constant 0 : index
      %281 = vector.load %arg45[%280, %c0_218] : memref<32x32xf32, #tpu.memory_space<vmem>>, vector<1x32xf32>
      %282 = arith.index_cast %arg48 : i32 to index
      %c0_219 = arith.constant 0 : index
      %283 = vector.load %arg46[%282, %c0_219] : memref<96x32xf32, #tpu.memory_space<vmem>>, vector<1x32xf32>
      %284 = arith.addf %281, %283 : vector<1x32xf32>
      %285 = arith.index_cast %279 : i32 to index
      %c0_220 = arith.constant 0 : index
      %286 = vector.load %arg45[%285, %c0_220] : memref<32x32xf32, #tpu.memory_space<vmem>>, vector<1x32xf32>
      tpu.vector_store %arg45[%285, %c0_220], %284 {strides = array<i32>} : memref<32x32xf32, #tpu.memory_space<vmem>>, vector<1x32xf32>,
    }
    %c96_i32_76 = arith.constant 96 : i32
    %c0_77 = arith.constant 0 : index
    %c0_78 = arith.constant 0 : index
    %99 = vector.load %arg45[%c0_77, %c0_78] : memref<32x32xf32, #tpu.memory_space<vmem>>, vector<32x32xf32>
    %c0_79 = arith.constant 0 : index
    %c0_80 = arith.constant 0 : index
    %100 = vector.load %arg44[%c0_79, %c0_80] : memref<32x32xf32, #tpu.memory_space<vmem>>, vector<32x32xf32>
    %c0_81 = arith.constant 0 : index
    %c0_82 = arith.constant 0 : index
    %101 = vector.load %arg23[%c0_81, %c0_82] : memref<32x32xf32, #tpu.memory_space<vmem>>, vector<32x32xf32>
    %cst_83 = arith.constant dense<0.000000e+00> : vector<32x32xf32>
    %102 = tpu.matmul %100, %101, %cst_83 {dimension_numbers = #tpu.dot_dimension_numbers<[1], [0], [0], [1], [0, 0, 1, 1], [], []>} : vector<32x32xf32>, vector<32x32xf32>, vector<32x32xf32> -> vector<32x32xf32>
    %c0_84 = arith.constant 0 : index
    %c0_85 = arith.constant 0 : index
    %103 = vector.load %arg24[%c0_84, %c0_85] : memref<32x32xf32, #tpu.memory_space<vmem>>, vector<32x32xf32>
    %cst_86 = arith.constant dense<0.000000e+00> : vector<32x32xf32>
    %104 = tpu.matmul %99, %103, %cst_86 {dimension_numbers = #tpu.dot_dimension_numbers<[1], [0], [0], [1], [0, 0, 1, 1], [], []>} : vector<32x32xf32>, vector<32x32xf32>, vector<32x32xf32> -> vector<32x32xf32>
    %105 = arith.addf %102, %104 : vector<32x32xf32>
    %c0_87 = arith.constant 0 : index
    %c0_88 = arith.constant 0 : index
    %106 = vector.load %arg25[%c0_87, %c0_88] : memref<1x32xf32, #tpu.memory_space<vmem>>, vector<1x32xf32>
    %107 = vector.broadcast %106 : vector<1x32xf32> to vector<32x32xf32>
    %108 = arith.addf %105, %107 : vector<32x32xf32>
    %109 = arith.negf %108 : vector<32x32xf32>
    %110 = math.exp %109 : vector<32x32xf32>
    %cst_89 = arith.constant 1.000000e+00 : f32
    %111 = vector.broadcast %cst_89 : f32 to vector<32x32xf32>
    %112 = arith.addf %111, %110 : vector<32x32xf32>
    %113 = arith.divf %111, %112 : vector<32x32xf32>
    %c0_90 = arith.constant 0 : index
    %c0_91 = arith.constant 0 : index
    %114 = vector.load %arg26[%c0_90, %c0_91] : memref<32x32xf32, #tpu.memory_space<vmem>>, vector<32x32xf32>
    %cst_92 = arith.constant dense<0.000000e+00> : vector<32x32xf32>
    %115 = tpu.matmul %100, %114, %cst_92 {dimension_numbers = #tpu.dot_dimension_numbers<[1], [0], [0], [1], [0, 0, 1, 1], [], []>} : vector<32x32xf32>, vector<32x32xf32>, vector<32x32xf32> -> vector<32x32xf32>
    %c0_93 = arith.constant 0 : index
    %c0_94 = arith.constant 0 : index
    %116 = vector.load %arg27[%c0_93, %c0_94] : memref<32x32xf32, #tpu.memory_space<vmem>>, vector<32x32xf32>
    %cst_95 = arith.constant dense<0.000000e+00> : vector<32x32xf32>
    %117 = tpu.matmul %99, %116, %cst_95 {dimension_numbers = #tpu.dot_dimension_numbers<[1], [0], [0], [1], [0, 0, 1, 1], [], []>} : vector<32x32xf32>, vector<32x32xf32>, vector<32x32xf32> -> vector<32x32xf32>
    %118 = arith.addf %115, %117 : vector<32x32xf32>
    %c0_96 = arith.constant 0 : index
    %c0_97 = arith.constant 0 : index
    %119 = vector.load %arg28[%c0_96, %c0_97] : memref<1x32xf32, #tpu.memory_space<vmem>>, vector<1x32xf32>
    %120 = vector.broadcast %119 : vector<1x32xf32> to vector<32x32xf32>
    %121 = arith.addf %118, %120 : vector<32x32xf32>
    %122 = arith.negf %121 : vector<32x32xf32>
    %123 = math.exp %122 : vector<32x32xf32>
    %cst_98 = arith.constant 1.000000e+00 : f32
    %124 = vector.broadcast %cst_98 : f32 to vector<32x32xf32>
    %125 = arith.addf %124, %123 : vector<32x32xf32>
    %126 = arith.divf %124, %125 : vector<32x32xf32>
    %127 = arith.mulf %126, %100 : vector<32x32xf32>
    %c0_99 = arith.constant 0 : index
    %c0_100 = arith.constant 0 : index
    %128 = vector.load %arg29[%c0_99, %c0_100] : memref<32x32xf32, #tpu.memory_space<vmem>>, vector<32x32xf32>
    %cst_101 = arith.constant dense<0.000000e+00> : vector<32x32xf32>
    %129 = tpu.matmul %127, %128, %cst_101 {dimension_numbers = #tpu.dot_dimension_numbers<[1], [0], [0], [1], [0, 0, 1, 1], [], []>} : vector<32x32xf32>, vector<32x32xf32>, vector<32x32xf32> -> vector<32x32xf32>
    %c0_102 = arith.constant 0 : index
    %c0_103 = arith.constant 0 : index
    %130 = vector.load %arg30[%c0_102, %c0_103] : memref<32x32xf32, #tpu.memory_space<vmem>>, vector<32x32xf32>
    %cst_104 = arith.constant dense<0.000000e+00> : vector<32x32xf32>
    %131 = tpu.matmul %99, %130, %cst_104 {dimension_numbers = #tpu.dot_dimension_numbers<[1], [0], [0], [1], [0, 0, 1, 1], [], []>} : vector<32x32xf32>, vector<32x32xf32>, vector<32x32xf32> -> vector<32x32xf32>
    %132 = arith.addf %129, %131 : vector<32x32xf32>
    %c0_105 = arith.constant 0 : index
    %c0_106 = arith.constant 0 : index
    %133 = vector.load %arg31[%c0_105, %c0_106] : memref<1x32xf32, #tpu.memory_space<vmem>>, vector<1x32xf32>
    %134 = vector.broadcast %133 : vector<1x32xf32> to vector<32x32xf32>
    %135 = arith.addf %132, %134 : vector<32x32xf32>
    %cst_107 = arith.constant 0.000000e+00 : f32
    %136 = vector.broadcast %cst_107 : f32 to vector<32x32xf32>
    %137 = arith.maximumf %135, %136 : vector<32x32xf32>
    %cst_108 = arith.constant 1.000000e+00 : f32
    %138 = vector.broadcast %cst_108 : f32 to vector<32x32xf32>
    %139 = arith.subf %138, %113 : vector<32x32xf32>
    %140 = arith.mulf %139, %100 : vector<32x32xf32>
    %141 = arith.mulf %113, %137 : vector<32x32xf32>
    %142 = arith.addf %140, %141 : vector<32x32xf32>
    %c0_109 = arith.constant 0 : index
    %c0_110 = arith.constant 0 : index
    %143 = vector.load %arg33[%c0_109, %c0_110] : memref<32x32xf32, #tpu.memory_space<vmem>>, vector<32x32xf32>
    %cst_111 = arith.constant dense<0.000000e+00> : vector<32x32xf32>
    %144 = tpu.matmul %142, %143, %cst_111 {dimension_numbers = #tpu.dot_dimension_numbers<[1], [0], [0], [1], [0, 0, 1, 1], [], []>} : vector<32x32xf32>, vector<32x32xf32>, vector<32x32xf32> -> vector<32x32xf32>
    %145 = arith.addf %60, %144 : vector<32x32xf32>
    %cst_112 = arith.constant 0.000000e+00 : f32
    %146 = vector.broadcast %cst_112 : f32 to vector<32x32xf32>
    %147 = arith.maximumf %145, %146 : vector<32x32xf32>
    %c0_113 = arith.constant 0 : index
    %c0_114 = arith.constant 0 : index
    %148 = vector.load %arg44[%c0_113, %c0_114] : memref<32x32xf32, #tpu.memory_space<vmem>>, vector<32x32xf32>
    tpu.vector_store %arg44[%c0_113, %c0_114], %147 {strides = array<i32>} : memref<32x32xf32, #tpu.memory_space<vmem>>, vector<32x32xf32>,
    %c0_i32_115 = arith.constant 0 : i32
    %c96_i32_116 = arith.constant 96 : i32
    %149 = arith.addi %c0_i32_115, %c96_i32_116 : i32
    %c1_i32_117 = arith.constant 1 : i32
    scf.for %arg48 = %c0_i32_115 to %149 step %c1_i32_117  : i32 {
      %278 = arith.index_cast %arg48 : i32 to index
      %279 = memref.load %arg1[%278] : memref<96xi32, #tpu.memory_space<smem>>
      %280 = arith.index_cast %arg48 : i32 to index
      %281 = memref.load %arg2[%280] : memref<96xi32, #tpu.memory_space<smem>>
      %282 = arith.index_cast %279 : i32 to index
      %c0_218 = arith.constant 0 : index
      %283 = vector.load %arg44[%282, %c0_218] : memref<32x32xf32, #tpu.memory_space<vmem>>, vector<1x32xf32>
      %284 = arith.index_cast %arg48 : i32 to index
      %c0_219 = arith.constant 0 : index
      %285 = vector.load %arg46[%284, %c0_219] : memref<96x32xf32, #tpu.memory_space<vmem>>, vector<1x32xf32>
      tpu.vector_store %arg46[%284, %c0_219], %283 {strides = array<i32>} : memref<96x32xf32, #tpu.memory_space<vmem>>, vector<1x32xf32>,
      %286 = arith.index_cast %281 : i32 to index
      %c0_220 = arith.constant 0 : index
      %287 = vector.load %arg44[%286, %c0_220] : memref<32x32xf32, #tpu.memory_space<vmem>>, vector<1x32xf32>
      %288 = arith.index_cast %arg48 : i32 to index
      %c0_221 = arith.constant 0 : index
      %289 = vector.load %arg47[%288, %c0_221] : memref<96x32xf32, #tpu.memory_space<vmem>>, vector<1x32xf32>
      tpu.vector_store %arg47[%288, %c0_221], %287 {strides = array<i32>} : memref<96x32xf32, #tpu.memory_space<vmem>>, vector<1x32xf32>,
    }
    %c96_i32_118 = arith.constant 96 : i32
    %c0_119 = arith.constant 0 : index
    %c0_120 = arith.constant 0 : index
    %150 = vector.load %arg46[%c0_119, %c0_120] : memref<96x32xf32, #tpu.memory_space<vmem>>, vector<96x32xf32>
    %c0_121 = arith.constant 0 : index
    %c0_122 = arith.constant 0 : index
    %151 = vector.load %arg47[%c0_121, %c0_122] : memref<96x32xf32, #tpu.memory_space<vmem>>, vector<96x32xf32>
    %c0_123 = arith.constant 0 : index
    %c0_124 = arith.constant 0 : index
    %152 = vector.load %arg15[%c0_123, %c0_124] : memref<32x16xf32, #tpu.memory_space<vmem>>, vector<32x16xf32>
    %cst_125 = arith.constant dense<0.000000e+00> : vector<96x16xf32>
    %153 = tpu.matmul %151, %152, %cst_125 {dimension_numbers = #tpu.dot_dimension_numbers<[1], [0], [0], [1], [0, 0, 1, 1], [], []>} : vector<96x32xf32>, vector<32x16xf32>, vector<96x16xf32> -> vector<96x16xf32>
    %c0_126 = arith.constant 0 : index
    %c0_127 = arith.constant 0 : index
    %154 = vector.load %arg16[%c0_126, %c0_127] : memref<32x16xf32, #tpu.memory_space<vmem>>, vector<32x16xf32>
    %cst_128 = arith.constant dense<0.000000e+00> : vector<96x16xf32>
    %155 = tpu.matmul %150, %154, %cst_128 {dimension_numbers = #tpu.dot_dimension_numbers<[1], [0], [0], [1], [0, 0, 1, 1], [], []>} : vector<96x32xf32>, vector<32x16xf32>, vector<96x16xf32> -> vector<96x16xf32>
    %156 = arith.addf %153, %155 : vector<96x16xf32>
    %157 = arith.addf %156, %54 : vector<96x16xf32>
    %cst_129 = arith.constant 0.000000e+00 : f32
    %158 = vector.broadcast %cst_129 : f32 to vector<96x16xf32>
    %159 = arith.maximumf %157, %158 : vector<96x16xf32>
    %c0_130 = arith.constant 0 : index
    %c0_131 = arith.constant 0 : index
    %160 = vector.load %arg19[%c0_130, %c0_131] : memref<16x16xf32, #tpu.memory_space<vmem>>, vector<16x16xf32>
    %cst_132 = arith.constant dense<0.000000e+00> : vector<96x16xf32>
    %161 = tpu.matmul %159, %160, %cst_132 {dimension_numbers = #tpu.dot_dimension_numbers<[1], [0], [0], [1], [0, 0, 1, 1], [], []>} : vector<96x16xf32>, vector<16x16xf32>, vector<96x16xf32> -> vector<96x16xf32>
    %c0_133 = arith.constant 0 : index
    %c0_134 = arith.constant 0 : index
    %162 = vector.load %arg20[%c0_133, %c0_134] : memref<1x16xf32, #tpu.memory_space<vmem>>, vector<1x16xf32>
    %163 = vector.broadcast %162 : vector<1x16xf32> to vector<96x16xf32>
    %164 = arith.addf %161, %163 : vector<96x16xf32>
    %cst_135 = arith.constant 0.000000e+00 : f32
    %165 = vector.broadcast %cst_135 : f32 to vector<96x16xf32>
    %166 = arith.maximumf %164, %165 : vector<96x16xf32>
    %c0_136 = arith.constant 0 : index
    %c0_137 = arith.constant 0 : index
    %167 = vector.load %arg21[%c0_136, %c0_137] : memref<1x16xf32, #tpu.memory_space<vmem>>, vector<1x16xf32>
    %168 = vector.broadcast %167 : vector<1x16xf32> to vector<96x16xf32>
    %169 = arith.mulf %166, %168 : vector<96x16xf32>
    %cst_138 = arith.constant dense<0.000000e+00> : vector<96xf32>
    %170 = vector.multi_reduction <add>, %169, %cst_138 [1] : vector<96x16xf32> to vector<96xf32>
    %171 = vector.shape_cast %170 : vector<96xf32> to vector<96x1xf32>
    %c0_139 = arith.constant 0 : index
    %c0_140 = arith.constant 0 : index
    %172 = vector.load %arg22[%c0_139, %c0_140] : memref<1x1xf32, #tpu.memory_space<vmem>>, vector<1x1xf32>
    %173 = vector.broadcast %172 : vector<1x1xf32> to vector<96x1xf32>
    %174 = arith.addf %171, %173 : vector<96x1xf32>
    %175 = arith.negf %174 : vector<96x1xf32>
    %176 = math.exp %175 : vector<96x1xf32>
    %cst_141 = arith.constant 1.000000e+00 : f32
    %177 = vector.broadcast %cst_141 : f32 to vector<96x1xf32>
    %178 = arith.addf %177, %176 : vector<96x1xf32>
    %179 = arith.divf %177, %178 : vector<96x1xf32>
    %180 = arith.mulf %179, %55 : vector<96x1xf32>
    %181 = vector.broadcast %180 : vector<96x1xf32> to vector<96x32xf32>
    %182 = arith.mulf %181, %150 : vector<96x32xf32>
    %c0_142 = arith.constant 0 : index
    %c0_143 = arith.constant 0 : index
    %183 = vector.load %arg46[%c0_142, %c0_143] : memref<96x32xf32, #tpu.memory_space<vmem>>, vector<96x32xf32>
    tpu.vector_store %arg46[%c0_142, %c0_143], %182 {strides = array<i32>} : memref<96x32xf32, #tpu.memory_space<vmem>>, vector<96x32xf32>,
    %cst_144 = arith.constant 0.000000e+00 : f32
    %184 = vector.broadcast %cst_144 : f32 to vector<32x32xf32>
    %c0_145 = arith.constant 0 : index
    %c0_146 = arith.constant 0 : index
    %185 = vector.load %arg45[%c0_145, %c0_146] : memref<32x32xf32, #tpu.memory_space<vmem>>, vector<32x32xf32>
    tpu.vector_store %arg45[%c0_145, %c0_146], %184 {strides = array<i32>} : memref<32x32xf32, #tpu.memory_space<vmem>>, vector<32x32xf32>,
    %c0_i32_147 = arith.constant 0 : i32
    %c96_i32_148 = arith.constant 96 : i32
    %186 = arith.addi %c0_i32_147, %c96_i32_148 : i32
    %c1_i32_149 = arith.constant 1 : i32
    scf.for %arg48 = %c0_i32_147 to %186 step %c1_i32_149  : i32 {
      %278 = arith.index_cast %arg48 : i32 to index
      %279 = memref.load %arg2[%278] : memref<96xi32, #tpu.memory_space<smem>>
      %280 = arith.index_cast %279 : i32 to index
      %c0_218 = arith.constant 0 : index
      %281 = vector.load %arg45[%280, %c0_218] : memref<32x32xf32, #tpu.memory_space<vmem>>, vector<1x32xf32>
      %282 = arith.index_cast %arg48 : i32 to index
      %c0_219 = arith.constant 0 : index
      %283 = vector.load %arg46[%282, %c0_219] : memref<96x32xf32, #tpu.memory_space<vmem>>, vector<1x32xf32>
      %284 = arith.addf %281, %283 : vector<1x32xf32>
      %285 = arith.index_cast %279 : i32 to index
      %c0_220 = arith.constant 0 : index
      %286 = vector.load %arg45[%285, %c0_220] : memref<32x32xf32, #tpu.memory_space<vmem>>, vector<1x32xf32>
      tpu.vector_store %arg45[%285, %c0_220], %284 {strides = array<i32>} : memref<32x32xf32, #tpu.memory_space<vmem>>, vector<1x32xf32>,
    }
    %c96_i32_150 = arith.constant 96 : i32
    %c0_151 = arith.constant 0 : index
    %c0_152 = arith.constant 0 : index
    %187 = vector.load %arg45[%c0_151, %c0_152] : memref<32x32xf32, #tpu.memory_space<vmem>>, vector<32x32xf32>
    %c0_153 = arith.constant 0 : index
    %c0_154 = arith.constant 0 : index
    %188 = vector.load %arg44[%c0_153, %c0_154] : memref<32x32xf32, #tpu.memory_space<vmem>>, vector<32x32xf32>
    %c0_155 = arith.constant 0 : index
    %c0_156 = arith.constant 0 : index
    %189 = vector.load %arg23[%c0_155, %c0_156] : memref<32x32xf32, #tpu.memory_space<vmem>>, vector<32x32xf32>
    %cst_157 = arith.constant dense<0.000000e+00> : vector<32x32xf32>
    %190 = tpu.matmul %188, %189, %cst_157 {dimension_numbers = #tpu.dot_dimension_numbers<[1], [0], [0], [1], [0, 0, 1, 1], [], []>} : vector<32x32xf32>, vector<32x32xf32>, vector<32x32xf32> -> vector<32x32xf32>
    %c0_158 = arith.constant 0 : index
    %c0_159 = arith.constant 0 : index
    %191 = vector.load %arg24[%c0_158, %c0_159] : memref<32x32xf32, #tpu.memory_space<vmem>>, vector<32x32xf32>
    %cst_160 = arith.constant dense<0.000000e+00> : vector<32x32xf32>
    %192 = tpu.matmul %187, %191, %cst_160 {dimension_numbers = #tpu.dot_dimension_numbers<[1], [0], [0], [1], [0, 0, 1, 1], [], []>} : vector<32x32xf32>, vector<32x32xf32>, vector<32x32xf32> -> vector<32x32xf32>
    %193 = arith.addf %190, %192 : vector<32x32xf32>
    %c0_161 = arith.constant 0 : index
    %c0_162 = arith.constant 0 : index
    %194 = vector.load %arg25[%c0_161, %c0_162] : memref<1x32xf32, #tpu.memory_space<vmem>>, vector<1x32xf32>
    %195 = vector.broadcast %194 : vector<1x32xf32> to vector<32x32xf32>
    %196 = arith.addf %193, %195 : vector<32x32xf32>
    %197 = arith.negf %196 : vector<32x32xf32>
    %198 = math.exp %197 : vector<32x32xf32>
    %cst_163 = arith.constant 1.000000e+00 : f32
    %199 = vector.broadcast %cst_163 : f32 to vector<32x32xf32>
    %200 = arith.addf %199, %198 : vector<32x32xf32>
    %201 = arith.divf %199, %200 : vector<32x32xf32>
    %c0_164 = arith.constant 0 : index
    %c0_165 = arith.constant 0 : index
    %202 = vector.load %arg26[%c0_164, %c0_165] : memref<32x32xf32, #tpu.memory_space<vmem>>, vector<32x32xf32>
    %cst_166 = arith.constant dense<0.000000e+00> : vector<32x32xf32>
    %203 = tpu.matmul %188, %202, %cst_166 {dimension_numbers = #tpu.dot_dimension_numbers<[1], [0], [0], [1], [0, 0, 1, 1], [], []>} : vector<32x32xf32>, vector<32x32xf32>, vector<32x32xf32> -> vector<32x32xf32>
    %c0_167 = arith.constant 0 : index
    %c0_168 = arith.constant 0 : index
    %204 = vector.load %arg27[%c0_167, %c0_168] : memref<32x32xf32, #tpu.memory_space<vmem>>, vector<32x32xf32>
    %cst_169 = arith.constant dense<0.000000e+00> : vector<32x32xf32>
    %205 = tpu.matmul %187, %204, %cst_169 {dimension_numbers = #tpu.dot_dimension_numbers<[1], [0], [0], [1], [0, 0, 1, 1], [], []>} : vector<32x32xf32>, vector<32x32xf32>, vector<32x32xf32> -> vector<32x32xf32>
    %206 = arith.addf %203, %205 : vector<32x32xf32>
    %c0_170 = arith.constant 0 : index
    %c0_171 = arith.constant 0 : index
    %207 = vector.load %arg28[%c0_170, %c0_171] : memref<1x32xf32, #tpu.memory_space<vmem>>, vector<1x32xf32>
    %208 = vector.broadcast %207 : vector<1x32xf32> to vector<32x32xf32>
    %209 = arith.addf %206, %208 : vector<32x32xf32>
    %210 = arith.negf %209 : vector<32x32xf32>
    %211 = math.exp %210 : vector<32x32xf32>
    %cst_172 = arith.constant 1.000000e+00 : f32
    %212 = vector.broadcast %cst_172 : f32 to vector<32x32xf32>
    %213 = arith.addf %212, %211 : vector<32x32xf32>
    %214 = arith.divf %212, %213 : vector<32x32xf32>
    %215 = arith.mulf %214, %188 : vector<32x32xf32>
    %c0_173 = arith.constant 0 : index
    %c0_174 = arith.constant 0 : index
    %216 = vector.load %arg29[%c0_173, %c0_174] : memref<32x32xf32, #tpu.memory_space<vmem>>, vector<32x32xf32>
    %cst_175 = arith.constant dense<0.000000e+00> : vector<32x32xf32>
    %217 = tpu.matmul %215, %216, %cst_175 {dimension_numbers = #tpu.dot_dimension_numbers<[1], [0], [0], [1], [0, 0, 1, 1], [], []>} : vector<32x32xf32>, vector<32x32xf32>, vector<32x32xf32> -> vector<32x32xf32>
    %c0_176 = arith.constant 0 : index
    %c0_177 = arith.constant 0 : index
    %218 = vector.load %arg30[%c0_176, %c0_177] : memref<32x32xf32, #tpu.memory_space<vmem>>, vector<32x32xf32>
    %cst_178 = arith.constant dense<0.000000e+00> : vector<32x32xf32>
    %219 = tpu.matmul %187, %218, %cst_178 {dimension_numbers = #tpu.dot_dimension_numbers<[1], [0], [0], [1], [0, 0, 1, 1], [], []>} : vector<32x32xf32>, vector<32x32xf32>, vector<32x32xf32> -> vector<32x32xf32>
    %220 = arith.addf %217, %219 : vector<32x32xf32>
    %c0_179 = arith.constant 0 : index
    %c0_180 = arith.constant 0 : index
    %221 = vector.load %arg31[%c0_179, %c0_180] : memref<1x32xf32, #tpu.memory_space<vmem>>, vector<1x32xf32>
    %222 = vector.broadcast %221 : vector<1x32xf32> to vector<32x32xf32>
    %223 = arith.addf %220, %222 : vector<32x32xf32>
    %cst_181 = arith.constant 0.000000e+00 : f32
    %224 = vector.broadcast %cst_181 : f32 to vector<32x32xf32>
    %225 = arith.maximumf %223, %224 : vector<32x32xf32>
    %cst_182 = arith.constant 1.000000e+00 : f32
    %226 = vector.broadcast %cst_182 : f32 to vector<32x32xf32>
    %227 = arith.subf %226, %201 : vector<32x32xf32>
    %228 = arith.mulf %227, %188 : vector<32x32xf32>
    %229 = arith.mulf %201, %225 : vector<32x32xf32>
    %230 = arith.addf %228, %229 : vector<32x32xf32>
    %c0_183 = arith.constant 0 : index
    %c0_184 = arith.constant 0 : index
    %231 = vector.load %arg33[%c0_183, %c0_184] : memref<32x32xf32, #tpu.memory_space<vmem>>, vector<32x32xf32>
    %cst_185 = arith.constant dense<0.000000e+00> : vector<32x32xf32>
    %232 = tpu.matmul %230, %231, %cst_185 {dimension_numbers = #tpu.dot_dimension_numbers<[1], [0], [0], [1], [0, 0, 1, 1], [], []>} : vector<32x32xf32>, vector<32x32xf32>, vector<32x32xf32> -> vector<32x32xf32>
    %233 = arith.addf %60, %232 : vector<32x32xf32>
    %cst_186 = arith.constant 0.000000e+00 : f32
    %234 = vector.broadcast %cst_186 : f32 to vector<32x32xf32>
    %235 = arith.maximumf %233, %234 : vector<32x32xf32>
    %c0_187 = arith.constant 0 : index
    %c0_188 = arith.constant 0 : index
    %236 = vector.load %arg44[%c0_187, %c0_188] : memref<32x32xf32, #tpu.memory_space<vmem>>, vector<32x32xf32>
    tpu.vector_store %arg44[%c0_187, %c0_188], %235 {strides = array<i32>} : memref<32x32xf32, #tpu.memory_space<vmem>>, vector<32x32xf32>,
    %c0_189 = arith.constant 0 : index
    %c0_190 = arith.constant 0 : index
    %237 = vector.load %arg44[%c0_189, %c0_190] : memref<32x32xf32, #tpu.memory_space<vmem>>, vector<32x32xf32>
    %c0_191 = arith.constant 0 : index
    %c0_192 = arith.constant 0 : index
    %238 = vector.load %arg35[%c0_191, %c0_192] : memref<32x32xf32, #tpu.memory_space<vmem>>, vector<32x32xf32>
    %cst_193 = arith.constant dense<0.000000e+00> : vector<32x32xf32>
    %239 = tpu.matmul %38, %238, %cst_193 {dimension_numbers = #tpu.dot_dimension_numbers<[1], [0], [0], [1], [0, 0, 1, 1], [], []>} : vector<32x32xf32>, vector<32x32xf32>, vector<32x32xf32> -> vector<32x32xf32>
    %c0_194 = arith.constant 0 : index
    %c0_195 = arith.constant 0 : index
    %240 = vector.load %arg36[%c0_194, %c0_195] : memref<32x32xf32, #tpu.memory_space<vmem>>, vector<32x32xf32>
    %cst_196 = arith.constant dense<0.000000e+00> : vector<32x32xf32>
    %241 = tpu.matmul %237, %240, %cst_196 {dimension_numbers = #tpu.dot_dimension_numbers<[1], [0], [0], [1], [0, 0, 1, 1], [], []>} : vector<32x32xf32>, vector<32x32xf32>, vector<32x32xf32> -> vector<32x32xf32>
    %242 = arith.addf %239, %241 : vector<32x32xf32>
    %c0_197 = arith.constant 0 : index
    %c0_198 = arith.constant 0 : index
    %243 = vector.load %arg37[%c0_197, %c0_198] : memref<1x32xf32, #tpu.memory_space<vmem>>, vector<1x32xf32>
    %244 = vector.broadcast %243 : vector<1x32xf32> to vector<32x32xf32>
    %245 = arith.addf %242, %244 : vector<32x32xf32>
    %c0_199 = arith.constant 0 : index
    %c0_200 = arith.constant 0 : index
    %246 = vector.load %arg38[%c0_199, %c0_200] : memref<1x32xf32, #tpu.memory_space<vmem>>, vector<1x32xf32>
    %c0_201 = arith.constant 0 : index
    %c0_202 = arith.constant 0 : index
    %247 = vector.load %arg39[%c0_201, %c0_202] : memref<1x32xf32, #tpu.memory_space<vmem>>, vector<1x32xf32>
    %c0_203 = arith.constant 0 : index
    %c0_204 = arith.constant 0 : index
    %248 = vector.load %arg40[%c0_203, %c0_204] : memref<1x32xf32, #tpu.memory_space<vmem>>, vector<1x32xf32>
    %cst_205 = arith.constant dense<0.000000e+00> : vector<32xf32>
    %249 = vector.multi_reduction <add>, %245, %cst_205 [0] : vector<32x32xf32> to vector<32xf32>
    %250 = vector.shape_cast %249 : vector<32xf32> to vector<1x32xf32>
    %cst_206 = arith.constant 3.200000e+01 : f32
    %251 = vector.broadcast %cst_206 : f32 to vector<1x32xf32>
    %252 = arith.divf %250, %251 : vector<1x32xf32>
    %253 = arith.mulf %248, %252 : vector<1x32xf32>
    %254 = vector.broadcast %253 : vector<1x32xf32> to vector<32x32xf32>
    %255 = arith.subf %245, %254 : vector<32x32xf32>
    %256 = arith.mulf %255, %255 : vector<32x32xf32>
    %cst_207 = arith.constant dense<0.000000e+00> : vector<32xf32>
    %257 = vector.multi_reduction <add>, %256, %cst_207 [0] : vector<32x32xf32> to vector<32xf32>
    %258 = vector.shape_cast %257 : vector<32xf32> to vector<1x32xf32>
    %cst_208 = arith.constant 3.200000e+01 : f32
    %259 = vector.broadcast %cst_208 : f32 to vector<1x32xf32>
    %260 = arith.divf %258, %259 : vector<1x32xf32>
    %261 = vector.broadcast %246 : vector<1x32xf32> to vector<32x32xf32>
    %262 = arith.mulf %261, %255 : vector<32x32xf32>
    %cst_209 = arith.constant 9.99999974E-6 : f32
    %263 = vector.broadcast %cst_209 : f32 to vector<1x32xf32>
    %264 = arith.addf %260, %263 : vector<1x32xf32>
    %265 = math.rsqrt %264 : vector<1x32xf32>
    %266 = vector.broadcast %265 : vector<1x32xf32> to vector<32x32xf32>
    %267 = arith.mulf %262, %266 : vector<32x32xf32>
    %268 = vector.broadcast %247 : vector<1x32xf32> to vector<32x32xf32>
    %269 = arith.addf %267, %268 : vector<32x32xf32>
    %cst_210 = arith.constant 0.000000e+00 : f32
    %270 = vector.broadcast %cst_210 : f32 to vector<32x32xf32>
    %271 = arith.maximumf %269, %270 : vector<32x32xf32>
    %c0_211 = arith.constant 0 : index
    %c0_212 = arith.constant 0 : index
    %272 = vector.load %arg41[%c0_211, %c0_212] : memref<32x2xf32, #tpu.memory_space<vmem>>, vector<32x2xf32>
    %cst_213 = arith.constant dense<0.000000e+00> : vector<32x2xf32>
    %273 = tpu.matmul %271, %272, %cst_213 {dimension_numbers = #tpu.dot_dimension_numbers<[1], [0], [0], [1], [0, 0, 1, 1], [], []>} : vector<32x32xf32>, vector<32x2xf32>, vector<32x2xf32> -> vector<32x2xf32>
    %c0_214 = arith.constant 0 : index
    %c0_215 = arith.constant 0 : index
    %274 = vector.load %arg42[%c0_214, %c0_215] : memref<1x2xf32, #tpu.memory_space<vmem>>, vector<1x2xf32>
    %275 = vector.broadcast %274 : vector<1x2xf32> to vector<32x2xf32>
    %276 = arith.addf %273, %275 : vector<32x2xf32>
    %c0_216 = arith.constant 0 : index
    %c0_217 = arith.constant 0 : index
    %277 = vector.load %arg43[%c0_216, %c0_217] : memref<32x2xf32, #tpu.memory_space<vmem>>, vector<32x2xf32>
    tpu.vector_store %arg43[%c0_216, %c0_217], %276 {strides = array<i32>} : memref<32x2xf32, #tpu.memory_space<vmem>>, vector<32x2xf32>,
    return
  }
  func.func @transform_0(%arg0: i32, %arg1: memref<96xi32, #tpu.memory_space<smem>>, %arg2: memref<96xi32, #tpu.memory_space<smem>>) -> (i32, i32) {
    %c0_i32 = arith.constant 0 : i32
    %c0_i32_0 = arith.constant 0 : i32
    %c0_i32_1 = arith.constant 0 : i32
    return %c0_i32, %c0_i32_0 : i32, i32
  }
  func.func @transform_1(%arg0: i32, %arg1: memref<96xi32, #tpu.memory_space<smem>>, %arg2: memref<96xi32, #tpu.memory_space<smem>>) -> (i32, i32) {
    %c0_i32 = arith.constant 0 : i32
    %c0_i32_0 = arith.constant 0 : i32
    %c0_i32_1 = arith.constant 0 : i32
    return %c0_i32, %c0_i32_0 : i32, i32
  }
  func.func @transform_2(%arg0: i32, %arg1: memref<96xi32, #tpu.memory_space<smem>>, %arg2: memref<96xi32, #tpu.memory_space<smem>>) -> (i32, i32) {
    %c0_i32 = arith.constant 0 : i32
    %c0_i32_0 = arith.constant 0 : i32
    %c0_i32_1 = arith.constant 0 : i32
    return %c0_i32, %c0_i32_0 : i32, i32
  }
  func.func @transform_3(%arg0: i32, %arg1: memref<96xi32, #tpu.memory_space<smem>>, %arg2: memref<96xi32, #tpu.memory_space<smem>>) -> (i32, i32) {
    %c0_i32 = arith.constant 0 : i32
    %c0_i32_0 = arith.constant 0 : i32
    %c0_i32_1 = arith.constant 0 : i32
    return %c0_i32, %c0_i32_0 : i32, i32
  }
  func.func @transform_4(%arg0: i32, %arg1: memref<96xi32, #tpu.memory_space<smem>>, %arg2: memref<96xi32, #tpu.memory_space<smem>>) -> (i32, i32) {
    %c0_i32 = arith.constant 0 : i32
    %c0_i32_0 = arith.constant 0 : i32
    %c0_i32_1 = arith.constant 0 : i32
    return %c0_i32, %c0_i32_0 : i32, i32
  }
  func.func @transform_5(%arg0: i32, %arg1: memref<96xi32, #tpu.memory_space<smem>>, %arg2: memref<96xi32, #tpu.memory_space<smem>>) -> (i32, i32) {
    %c0_i32 = arith.constant 0 : i32
    %c0_i32_0 = arith.constant 0 : i32
    %c0_i32_1 = arith.constant 0 : i32
    return %c0_i32, %c0_i32_0 : i32, i32
  }
  func.func @transform_6(%arg0: i32, %arg1: memref<96xi32, #tpu.memory_space<smem>>, %arg2: memref<96xi32, #tpu.memory_space<smem>>) -> (i32, i32) {
    %c0_i32 = arith.constant 0 : i32
    %c0_i32_0 = arith.constant 0 : i32
    %c0_i32_1 = arith.constant 0 : i32
    return %c0_i32, %c0_i32_0 : i32, i32
  }
  func.func @transform_7(%arg0: i32, %arg1: memref<96xi32, #tpu.memory_space<smem>>, %arg2: memref<96xi32, #tpu.memory_space<smem>>) -> (i32, i32) {
    %c0_i32 = arith.constant 0 : i32
    %c0_i32_0 = arith.constant 0 : i32
    %c0_i32_1 = arith.constant 0 : i32
    return %c0_i32, %c0_i32_0 : i32, i32
  }
  func.func @transform_8(%arg0: i32, %arg1: memref<96xi32, #tpu.memory_space<smem>>, %arg2: memref<96xi32, #tpu.memory_space<smem>>) -> (i32, i32) {
    %c0_i32 = arith.constant 0 : i32
    %c0_i32_0 = arith.constant 0 : i32
    %c0_i32_1 = arith.constant 0 : i32
    return %c0_i32, %c0_i32_0 : i32, i32
  }
  func.func @transform_9(%arg0: i32, %arg1: memref<96xi32, #tpu.memory_space<smem>>, %arg2: memref<96xi32, #tpu.memory_space<smem>>) -> (i32, i32) {
    %c0_i32 = arith.constant 0 : i32
    %c0_i32_0 = arith.constant 0 : i32
    %c0_i32_1 = arith.constant 0 : i32
    return %c0_i32, %c0_i32_0 : i32, i32
  }
  func.func @transform_10(%arg0: i32, %arg1: memref<96xi32, #tpu.memory_space<smem>>, %arg2: memref<96xi32, #tpu.memory_space<smem>>) -> (i32, i32) {
    %c0_i32 = arith.constant 0 : i32
    %c0_i32_0 = arith.constant 0 : i32
    %c0_i32_1 = arith.constant 0 : i32
    return %c0_i32, %c0_i32_0 : i32, i32
  }
  func.func @transform_11(%arg0: i32, %arg1: memref<96xi32, #tpu.memory_space<smem>>, %arg2: memref<96xi32, #tpu.memory_space<smem>>) -> (i32, i32) {
    %c0_i32 = arith.constant 0 : i32
    %c0_i32_0 = arith.constant 0 : i32
    %c0_i32_1 = arith.constant 0 : i32
    return %c0_i32, %c0_i32_0 : i32, i32
  }
  func.func @transform_12(%arg0: i32, %arg1: memref<96xi32, #tpu.memory_space<smem>>, %arg2: memref<96xi32, #tpu.memory_space<smem>>) -> (i32, i32) {
    %c0_i32 = arith.constant 0 : i32
    %c0_i32_0 = arith.constant 0 : i32
    %c0_i32_1 = arith.constant 0 : i32
    return %c0_i32, %c0_i32_0 : i32, i32
  }
  func.func @transform_13(%arg0: i32, %arg1: memref<96xi32, #tpu.memory_space<smem>>, %arg2: memref<96xi32, #tpu.memory_space<smem>>) -> (i32, i32) {
    %c0_i32 = arith.constant 0 : i32
    %c0_i32_0 = arith.constant 0 : i32
    %c0_i32_1 = arith.constant 0 : i32
    return %c0_i32, %c0_i32_0 : i32, i32
  }
  func.func @transform_14(%arg0: i32, %arg1: memref<96xi32, #tpu.memory_space<smem>>, %arg2: memref<96xi32, #tpu.memory_space<smem>>) -> (i32, i32) {
    %c0_i32 = arith.constant 0 : i32
    %c0_i32_0 = arith.constant 0 : i32
    %c0_i32_1 = arith.constant 0 : i32
    return %c0_i32, %c0_i32_0 : i32, i32
  }
  func.func @transform_15(%arg0: i32, %arg1: memref<96xi32, #tpu.memory_space<smem>>, %arg2: memref<96xi32, #tpu.memory_space<smem>>) -> (i32, i32) {
    %c0_i32 = arith.constant 0 : i32
    %c0_i32_0 = arith.constant 0 : i32
    %c0_i32_1 = arith.constant 0 : i32
    return %c0_i32, %c0_i32_0 : i32, i32
  }
  func.func @transform_16(%arg0: i32, %arg1: memref<96xi32, #tpu.memory_space<smem>>, %arg2: memref<96xi32, #tpu.memory_space<smem>>) -> (i32, i32) {
    %c0_i32 = arith.constant 0 : i32
    %c0_i32_0 = arith.constant 0 : i32
    %c0_i32_1 = arith.constant 0 : i32
    return %c0_i32, %c0_i32_0 : i32, i32
  }
  func.func @transform_17(%arg0: i32, %arg1: memref<96xi32, #tpu.memory_space<smem>>, %arg2: memref<96xi32, #tpu.memory_space<smem>>) -> (i32, i32) {
    %c0_i32 = arith.constant 0 : i32
    %c0_i32_0 = arith.constant 0 : i32
    %c0_i32_1 = arith.constant 0 : i32
    return %c0_i32, %c0_i32_0 : i32, i32
  }
  func.func @transform_18(%arg0: i32, %arg1: memref<96xi32, #tpu.memory_space<smem>>, %arg2: memref<96xi32, #tpu.memory_space<smem>>) -> (i32, i32) {
    %c0_i32 = arith.constant 0 : i32
    %c0_i32_0 = arith.constant 0 : i32
    %c0_i32_1 = arith.constant 0 : i32
    return %c0_i32, %c0_i32_0 : i32, i32
  }
  func.func @transform_19(%arg0: i32, %arg1: memref<96xi32, #tpu.memory_space<smem>>, %arg2: memref<96xi32, #tpu.memory_space<smem>>) -> (i32, i32) {
    %c0_i32 = arith.constant 0 : i32
    %c0_i32_0 = arith.constant 0 : i32
    %c0_i32_1 = arith.constant 0 : i32
    return %c0_i32, %c0_i32_0 : i32, i32
  }
  func.func @transform_20(%arg0: i32, %arg1: memref<96xi32, #tpu.memory_space<smem>>, %arg2: memref<96xi32, #tpu.memory_space<smem>>) -> (i32, i32) {
    %c0_i32 = arith.constant 0 : i32
    %c0_i32_0 = arith.constant 0 : i32
    %c0_i32_1 = arith.constant 0 : i32
    return %c0_i32, %c0_i32_0 : i32, i32
  }
  func.func @transform_21(%arg0: i32, %arg1: memref<96xi32, #tpu.memory_space<smem>>, %arg2: memref<96xi32, #tpu.memory_space<smem>>) -> (i32, i32) {
    %c0_i32 = arith.constant 0 : i32
    %c0_i32_0 = arith.constant 0 : i32
    %c0_i32_1 = arith.constant 0 : i32
    return %c0_i32, %c0_i32_0 : i32, i32
  }
  func.func @transform_22(%arg0: i32, %arg1: memref<96xi32, #tpu.memory_space<smem>>, %arg2: memref<96xi32, #tpu.memory_space<smem>>) -> (i32, i32) {
    %c0_i32 = arith.constant 0 : i32
    %c0_i32_0 = arith.constant 0 : i32
    %c0_i32_1 = arith.constant 0 : i32
    return %c0_i32, %c0_i32_0 : i32, i32
  }
  func.func @transform_23(%arg0: i32, %arg1: memref<96xi32, #tpu.memory_space<smem>>, %arg2: memref<96xi32, #tpu.memory_space<smem>>) -> (i32, i32) {
    %c0_i32 = arith.constant 0 : i32
    %c0_i32_0 = arith.constant 0 : i32
    %c0_i32_1 = arith.constant 0 : i32
    return %c0_i32, %c0_i32_0 : i32, i32
  }
  func.func @transform_24(%arg0: i32, %arg1: memref<96xi32, #tpu.memory_space<smem>>, %arg2: memref<96xi32, #tpu.memory_space<smem>>) -> (i32, i32) {
    %c0_i32 = arith.constant 0 : i32
    %c0_i32_0 = arith.constant 0 : i32
    %c0_i32_1 = arith.constant 0 : i32
    return %c0_i32, %c0_i32_0 : i32, i32
  }
  func.func @transform_25(%arg0: i32, %arg1: memref<96xi32, #tpu.memory_space<smem>>, %arg2: memref<96xi32, #tpu.memory_space<smem>>) -> (i32, i32) {
    %c0_i32 = arith.constant 0 : i32
    %c0_i32_0 = arith.constant 0 : i32
    %c0_i32_1 = arith.constant 0 : i32
    return %c0_i32, %c0_i32_0 : i32, i32
  }
  func.func @transform_26(%arg0: i32, %arg1: memref<96xi32, #tpu.memory_space<smem>>, %arg2: memref<96xi32, #tpu.memory_space<smem>>) -> (i32, i32) {
    %c0_i32 = arith.constant 0 : i32
    %c0_i32_0 = arith.constant 0 : i32
    %c0_i32_1 = arith.constant 0 : i32
    return %c0_i32, %c0_i32_0 : i32, i32
  }
  func.func @transform_27(%arg0: i32, %arg1: memref<96xi32, #tpu.memory_space<smem>>, %arg2: memref<96xi32, #tpu.memory_space<smem>>) -> (i32, i32) {
    %c0_i32 = arith.constant 0 : i32
    %c0_i32_0 = arith.constant 0 : i32
    %c0_i32_1 = arith.constant 0 : i32
    return %c0_i32, %c0_i32_0 : i32, i32
  }
  func.func @transform_28(%arg0: i32, %arg1: memref<96xi32, #tpu.memory_space<smem>>, %arg2: memref<96xi32, #tpu.memory_space<smem>>) -> (i32, i32) {
    %c0_i32 = arith.constant 0 : i32
    %c0_i32_0 = arith.constant 0 : i32
    %c0_i32_1 = arith.constant 0 : i32
    return %c0_i32, %c0_i32_0 : i32, i32
  }
  func.func @transform_29(%arg0: i32, %arg1: memref<96xi32, #tpu.memory_space<smem>>, %arg2: memref<96xi32, #tpu.memory_space<smem>>) -> (i32, i32) {
    %c0_i32 = arith.constant 0 : i32
    %c0_i32_0 = arith.constant 0 : i32
    %c0_i32_1 = arith.constant 0 : i32
    return %c0_i32, %c0_i32_0 : i32, i32
  }
  func.func @transform_30(%arg0: i32, %arg1: memref<96xi32, #tpu.memory_space<smem>>, %arg2: memref<96xi32, #tpu.memory_space<smem>>) -> (i32, i32) {
    %c0_i32 = arith.constant 0 : i32
    %c0_i32_0 = arith.constant 0 : i32
    %c0_i32_1 = arith.constant 0 : i32
    return %c0_i32, %c0_i32_0 : i32, i32
  }
  func.func @transform_31(%arg0: i32, %arg1: memref<96xi32, #tpu.memory_space<smem>>, %arg2: memref<96xi32, #tpu.memory_space<smem>>) -> (i32, i32) {
    %c0_i32 = arith.constant 0 : i32
    %c0_i32_0 = arith.constant 0 : i32
    %c0_i32_1 = arith.constant 0 : i32
    return %c0_i32, %c0_i32_0 : i32, i32
  }
  func.func @transform_32(%arg0: i32, %arg1: memref<96xi32, #tpu.memory_space<smem>>, %arg2: memref<96xi32, #tpu.memory_space<smem>>) -> (i32, i32) {
    %c0_i32 = arith.constant 0 : i32
    %c0_i32_0 = arith.constant 0 : i32
    %c0_i32_1 = arith.constant 0 : i32
    return %c0_i32, %c0_i32_0 : i32, i32
  }
  func.func @transform_33(%arg0: i32, %arg1: memref<96xi32, #tpu.memory_space<smem>>, %arg2: memref<96xi32, #tpu.memory_space<smem>>) -> (i32, i32) {
    %c0_i32 = arith.constant 0 : i32
    %c0_i32_0 = arith.constant 0 : i32
    %c0_i32_1 = arith.constant 0 : i32
    return %c0_i32, %c0_i32_0 : i32, i32
  }
  func.func @transform_34(%arg0: i32, %arg1: memref<96xi32, #tpu.memory_space<smem>>, %arg2: memref<96xi32, #tpu.memory_space<smem>>) -> (i32, i32) {
    %c0_i32 = arith.constant 0 : i32
    %c0_i32_0 = arith.constant 0 : i32
    %c0_i32_1 = arith.constant 0 : i32
    return %c0_i32, %c0_i32_0 : i32, i32
  }
  func.func @transform_35(%arg0: i32, %arg1: memref<96xi32, #tpu.memory_space<smem>>, %arg2: memref<96xi32, #tpu.memory_space<smem>>) -> (i32, i32) {
    %c0_i32 = arith.constant 0 : i32
    %c0_i32_0 = arith.constant 0 : i32
    %c0_i32_1 = arith.constant 0 : i32
    return %c0_i32, %c0_i32_0 : i32, i32
  }
  func.func @transform_36(%arg0: i32, %arg1: memref<96xi32, #tpu.memory_space<smem>>, %arg2: memref<96xi32, #tpu.memory_space<smem>>) -> (i32, i32) {
    %c0_i32 = arith.constant 0 : i32
    %c0_i32_0 = arith.constant 0 : i32
    %c0_i32_1 = arith.constant 0 : i32
    return %c0_i32, %c0_i32_0 : i32, i32
  }
  func.func @transform_37(%arg0: i32, %arg1: memref<96xi32, #tpu.memory_space<smem>>, %arg2: memref<96xi32, #tpu.memory_space<smem>>) -> (i32, i32) {
    %c0_i32 = arith.constant 0 : i32
    %c0_i32_0 = arith.constant 0 : i32
    %c0_i32_1 = arith.constant 0 : i32
    return %c0_i32, %c0_i32_0 : i32, i32
  }
  func.func @transform_38(%arg0: i32, %arg1: memref<96xi32, #tpu.memory_space<smem>>, %arg2: memref<96xi32, #tpu.memory_space<smem>>) -> (i32, i32) {
    %c0_i32 = arith.constant 0 : i32
    %c0_i32_0 = arith.constant 0 : i32
    %c0_i32_1 = arith.constant 0 : i32
    return %c0_i32, %c0_i32_0 : i32, i32
  }
  func.func @transform_39(%arg0: i32, %arg1: memref<96xi32, #tpu.memory_space<smem>>, %arg2: memref<96xi32, #tpu.memory_space<smem>>) -> (i32, i32) {
    %c0_i32 = arith.constant 0 : i32
    %c0_i32_0 = arith.constant 0 : i32
    %c0_i32_1 = arith.constant 0 : i32
    return %c0_i32, %c0_i32_0 : i32, i32
  }
  func.func @transform_40(%arg0: i32, %arg1: memref<96xi32, #tpu.memory_space<smem>>, %arg2: memref<96xi32, #tpu.memory_space<smem>>) -> (i32, i32) {
    %c0_i32 = arith.constant 0 : i32
    %c0_i32_0 = arith.constant 0 : i32
    %c0_i32_1 = arith.constant 0 : i32
    return %c0_i32, %c0_i32_0 : i32, i32
  }
}

</mosaic_0001>

<llo_original>
// kernel: tpu_custom_call.1
$region0: #{tpu_custom_call.1}
  #allocation0 [shape = 'u32[]', space=smem, size = 0x4, offset = 0x4, fixed_abs, tag = 'smem constant byte address 0x4 - core index']
  #allocation1 [shape = 'u32[144,128]{1,0:T(1,128)}', space=vmem, size = 0x12000, scoped, tag = 'internal scratch']
  #allocation2 [shape = 'f32[32,32]{1,0:T(8,128)}', space=vmem, size = 0x4000, scoped, tag = 'scratch operand']
  #allocation3 [shape = 'f32[32,32]{1,0:T(8,128)}', space=vmem, size = 0x4000, scoped, tag = 'scratch operand']
  #allocation4 [shape = 'f32[96,32]{1,0:T(8,128)}', space=vmem, size = 0xc000, scoped, tag = 'scratch operand']
  #allocation5 [shape = 'f32[96,32]{1,0:T(8,128)}', space=vmem, size = 0xc000, scoped, tag = 'scratch operand']
  #allocation6 [shape = 's32[1]{0}', space=sflag, size = 0x4, scoped, tag = 'scoped memory for tpu_custom_call.1']
  #allocation7 [shape = 'u8[512]{0}', space=smem, size = 0x200, scoped, tag = 'prefetched SMEM operand 0']
  #allocation8 [shape = 'u8[512]{0}', space=smem, size = 0x200, scoped, tag = 'prefetched SMEM operand 1']
  #allocation9 [shape = 'f32[1,1]{1,0:T(1,128)S(1)}', space=vmem, size = 0x200, scoped, tag = 'scoped memory for tpu_custom_call.1']
  %s0 = inlined_call_operand.smem [shape: u32[43], index: -1, kind: input, shape index: {}]
  %s1 = sld [smem:[%s0]]
  %s2 = scalar_lea.smem %s0, 1
  %s3 = sld [smem:[%s2]]
  %s4 = scalar_lea.smem %s0, 2
  %s5 = sld [smem:[%s4]]
  %s6 = scalar_lea.smem %s0, 3
  %s7 = sld [smem:[%s6]]
  %s8 = scalar_lea.smem %s0, 4
  %s9 = sld [smem:[%s8]]
  %s10 = scalar_lea.smem %s0, 5
  %s11 = sld [smem:[%s10]]
  %s12 = scalar_lea.smem %s0, 6
  %s13 = sld [smem:[%s12]]
  %s14 = scalar_lea.smem %s0, 7
  %s15 = sld [smem:[%s14]]
  %s16 = scalar_lea.smem %s0, 8
  %s17 = sld [smem:[%s16]]
  %s18 = scalar_lea.smem %s0, 9
  %s19 = sld [smem:[%s18]]
  %s20 = scalar_lea.smem %s0, 10
  %s21 = sld [smem:[%s20]]
  %s22 = scalar_lea.smem %s0, 11
  %s23 = sld [smem:[%s22]]
  %s24 = scalar_lea.smem %s0, 12
  %s25 = sld [smem:[%s24]]
  %s26 = scalar_lea.smem %s0, 13
  %s27 = sld [smem:[%s26]]
  %s28 = scalar_lea.smem %s0, 14
  %s29 = sld [smem:[%s28]]
  %s30 = scalar_lea.smem %s0, 15
  %s31 = sld [smem:[%s30]]
  %s32 = scalar_lea.smem %s0, 16
  %s33 = sld [smem:[%s32]]
  %s34 = scalar_lea.smem %s0, 17
  %s35 = sld [smem:[%s34]]
  %s36 = scalar_lea.smem %s0, 18
  %s37 = sld [smem:[%s36]]
  %s38 = scalar_lea.smem %s0, 19
  %s39 = sld [smem:[%s38]]
  %s40 = scalar_lea.smem %s0, 20
  %s41 = sld [smem:[%s40]]
  %s42 = scalar_lea.smem %s0, 21
  %s43 = sld [smem:[%s42]]
  %s44 = scalar_lea.smem %s0, 22
  %s45 = sld [smem:[%s44]]
  %s46 = scalar_lea.smem %s0, 23
  %s47 = sld [smem:[%s46]]
  %s48 = scalar_lea.smem %s0, 24
  %s49 = sld [smem:[%s48]]
  %s50 = scalar_lea.smem %s0, 25
  %s51 = sld [smem:[%s50]]
  %s52 = scalar_lea.smem %s0, 26
  %s53 = sld [smem:[%s52]]
  %s54 = scalar_lea.smem %s0, 27
  %s55 = sld [smem:[%s54]]
  %s56 = scalar_lea.smem %s0, 28
  %s57 = sld [smem:[%s56]]
  %s58 = scalar_lea.smem %s0, 29
  %s59 = sld [smem:[%s58]]
  %s60 = scalar_lea.smem %s0, 30
  %s61 = sld [smem:[%s60]]
  %s62 = scalar_lea.smem %s0, 31
  %s63 = sld [smem:[%s62]]
  %s64 = scalar_lea.smem %s0, 32
  %s65 = sld [smem:[%s64]]
  %s66 = scalar_lea.smem %s0, 33
  %s67 = sld [smem:[%s66]]
  %s68 = scalar_lea.smem %s0, 34
  %s69 = sld [smem:[%s68]]
  %s70 = scalar_lea.smem %s0, 35
  %s71 = sld [smem:[%s70]]
  %s72 = scalar_lea.smem %s0, 36
  %s73 = sld [smem:[%s72]]
  %s74 = scalar_lea.smem %s0, 37
  %s75 = sld [smem:[%s74]]
  %s76 = scalar_lea.smem %s0, 38
  %s77 = sld [smem:[%s76]]
  %s78 = scalar_lea.smem %s0, 39
  %s79 = sld [smem:[%s78]]
  %s80 = scalar_lea.smem %s0, 40
  %s81 = sld [smem:[%s80]]
  %s82 = scalar_lea.smem %s0, 41
  %s83 = sld [smem:[%s82]]
  %s84 = scalar_lea.smem %s0, 42
  %s85 = sld [smem:[%s84]]
  %s86 = sld [smem:[#allocation0]]
  $region218: #{tpu_custom_call.1} parent=0
    _
  %s88 = ssub.s32 1, %s86
  %s89 = scalar_select 0, %s88, %s86
  %91 = dma.hbm_to_smem %s1, 16, [#allocation7], [#allocation6]
  %93 = dma.hbm_to_smem %s3, 16, [#allocation8], [#allocation6]
  %v94 = vstv %s43
  %95 = vst [vmem:[#allocation9] sm:$0x1] %v94
  %96 = dma.done [#allocation6], 32
  %97 = sfence
  $region1: #{tpu_custom_call.1} parent=0
    #allocation10 [shape = 'u8[4096]{0}', space=vmem, size = 0x1000, scoped, tag = 'input window, operand 5, single buffered']
    #allocation11 [shape = 's32[1]{0}', space=sflag, size = 0x4, scoped, tag = 'scoped memory for tpu_custom_call.1']
    #allocation12 [shape = 'u8[512]{0}', space=vmem, size = 0x400, scoped, tag = 'input window, operand 6, single buffered']
    #allocation13 [shape = 's32[1]{0}', space=sflag, size = 0x4, scoped, tag = 'scoped memory for tpu_custom_call.1']
    #allocation14 [shape = 'u8[512]{0}', space=vmem, size = 0x400, scoped, tag = 'input window, operand 7, single buffered']
    #allocation15 [shape = 'u8[512]{0}', space=vmem, size = 0x400, scoped, tag = 'input window, operand 8, single buffered']
    #allocation16 [shape = 's32[1]{0}', space=sflag, size = 0x4, scoped, tag = 'scoped memory for tpu_custom_call.1']
    #allocation17 [shape = 'u8[512]{0}', space=vmem, size = 0x400, scoped, tag = 'input window, operand 9, single buffered']
    %98 = vsyncpa [#allocation11], 0
    %99 = vsyncpa [#allocation13], 0
    %100 = vsyncpa [#allocation16], 0
    // Predicated region
    $region2: #{tpu_custom_call.1} parent=1 // pred_check
      _
    $region3: #{tpu_custom_call.1} parent=1 // pred_check_branch
      %102 = sbr.rel (0) target = $region5
    $region4: #{tpu_custom_call.1} parent=1 // pred_region
      _
    $region5: #{tpu_custom_call.1} parent=1 // pred_fallthru
      _
    // Predicated region
    $region6: #{tpu_custom_call.1} parent=1 // pred_check
      _
    $region7: #{tpu_custom_call.1} parent=1 // pred_check_branch
      %104 = sbr.rel (0) target = $region9
    $region8: #{tpu_custom_call.1} parent=1 // pred_region
      _
    $region9: #{tpu_custom_call.1} parent=1 // pred_fallthru
      _
    // Predicated region
    $region10: #{tpu_custom_call.1} parent=1 // pred_check
      _
    $region11: #{tpu_custom_call.1} parent=1 // pred_check_branch
      %106 = sbr.rel (0) target = $region13
    $region12: #{tpu_custom_call.1} parent=1 // pred_region
      _
    $region13: #{tpu_custom_call.1} parent=1 // pred_fallthru
      _
    // Predicated region
    $region14: #{tpu_custom_call.1} parent=1 // pred_check
      _
    $region15: #{tpu_custom_call.1} parent=1 // pred_check_branch
      %108 = sbr.rel (0) target = $region17
    $region16: #{tpu_custom_call.1} parent=1 // pred_region
      %s110 = ssub.s32 128, 128
      %111 = vsyncadd [#allocation11], %s110
      %s113 = sshll.u32 [#allocation10], 4
      %s114 = int_to_ptr.vmem [resolvable:$true] %s113
      %116 = dma.hbm_to_vmem [thread:$0]  %s11, 128, %s114, [#allocation11]
    $region17: #{tpu_custom_call.1} parent=1 // pred_fallthru
      _
    // Predicated region
    $region18: #{tpu_custom_call.1} parent=1 // pred_check
      _
    $region19: #{tpu_custom_call.1} parent=1 // pred_check_branch
      %118 = sbr.rel (0) target = $region21
    $region20: #{tpu_custom_call.1} parent=1 // pred_region
      %s120 = ssub.s32 16, 16
      %121 = vsyncadd [#allocation13], %s120
      %s123 = sshll.u32 [#allocation12], 4
      %s124 = int_to_ptr.vmem [resolvable:$true] %s123
      %126 = dma.hbm_to_vmem [thread:$0]  %s13, 16, %s124, [#allocation13]
    $region21: #{tpu_custom_call.1} parent=1 // pred_fallthru
      _
    // Predicated region
    $region22: #{tpu_custom_call.1} parent=1 // pred_check
      _
    $region23: #{tpu_custom_call.1} parent=1 // pred_check_branch
      %128 = sbr.rel (0) target = $region25
    $region24: #{tpu_custom_call.1} parent=1 // pred_region
      %s130 = ssub.s32 16, 16
      %131 = vsyncadd [#allocation13], %s130
      %s133 = sshll.u32 [#allocation14], 4
      %s134 = int_to_ptr.vmem [resolvable:$true] %s133
      %136 = dma.hbm_to_vmem [thread:$0]  %s15, 16, %s134, [#allocation13]
    $region25: #{tpu_custom_call.1} parent=1 // pred_fallthru
      _
    // Predicated region
    $region26: #{tpu_custom_call.1} parent=1 // pred_check
      _
    $region27: #{tpu_custom_call.1} parent=1 // pred_check_branch
      %138 = sbr.rel (0) target = $region29
    $region28: #{tpu_custom_call.1} parent=1 // pred_region
      %s140 = ssub.s32 16, 16
      %141 = vsyncadd [#allocation16], %s140
      %s143 = sshll.u32 [#allocation15], 4
      %s144 = int_to_ptr.vmem [resolvable:$true] %s143
      %146 = dma.hbm_to_vmem [thread:$0]  %s17, 16, %s144, [#allocation16]
    $region29: #{tpu_custom_call.1} parent=1 // pred_fallthru
      _
    // Predicated region
    $region30: #{tpu_custom_call.1} parent=1 // pred_check
      _
    $region31: #{tpu_custom_call.1} parent=1 // pred_check_branch
      %148 = sbr.rel (0) target = $region33
    $region32: #{tpu_custom_call.1} parent=1 // pred_region
      %s150 = ssub.s32 16, 16
      %151 = vsyncadd [#allocation16], %s150
      %s153 = sshll.u32 [#allocation17], 4
      %s154 = int_to_ptr.vmem [resolvable:$true] %s153
      %156 = dma.hbm_to_vmem [thread:$0]  %s19, 16, %s154, [#allocation16]
    $region33: #{tpu_custom_call.1} parent=1 // pred_fallthru
      _
    // Predicated region
    $region34: #{tpu_custom_call.1} parent=1 // pred_check
      _
    $region35: #{tpu_custom_call.1} parent=1 // pred_check_branch
      %158 = sbr.rel (0) target = $region37
    $region36: #{tpu_custom_call.1} parent=1 // pred_region
      _
    $region37: #{tpu_custom_call.1} parent=1 // pred_fallthru
      _
    // Predicated region
    $region38: #{tpu_custom_call.1} parent=1 // pred_check
      _
    $region39: #{tpu_custom_call.1} parent=1 // pred_check_branch
      %160 = sbr.rel (0) target = $region41
    $region40: #{tpu_custom_call.1} parent=1 // pred_region
      _
    $region41: #{tpu_custom_call.1} parent=1 // pred_fallthru
      _
    // Predicated region
    $region42: #{tpu_custom_call.1} parent=1 // pred_check
      _
    $region43: #{tpu_custom_call.1} parent=1 // pred_check_branch
      %162 = sbr.rel (0) target = $region45
    $region44: #{tpu_custom_call.1} parent=1 // pred_region
      _
    $region45: #{tpu_custom_call.1} parent=1 // pred_fallthru
      _
    // Predicated region
    $region46: #{tpu_custom_call.1} parent=1 // pred_check
      _
    $region47: #{tpu_custom_call.1} parent=1 // pred_check_branch
      %164 = sbr.rel (0) target = $region49
    $region48: #{tpu_custom_call.1} parent=1 // pred_region
      _
    $region49: #{tpu_custom_call.1} parent=1 // pred_fallthru
      _
    // Predicated region
    $region50: #{tpu_custom_call.1} parent=1 // pred_check
      _
    $region51: #{tpu_custom_call.1} parent=1 // pred_check_branch
      %166 = sbr.rel (0) target = $region53
    $region52: #{tpu_custom_call.1} parent=1 // pred_region
      _
    $region53: #{tpu_custom_call.1} parent=1 // pred_fallthru
      _
    // Predicated region
    $region54: #{tpu_custom_call.1} parent=1 // pred_check
      _
    $region55: #{tpu_custom_call.1} parent=1 // pred_check_branch
      %168 = sbr.rel (0) target = $region57
    $region56: #{tpu_custom_call.1} parent=1 // pred_region
      _
    $region57: #{tpu_custom_call.1} parent=1 // pred_fallthru
      _
    // Predicated region
    $region58: #{tpu_custom_call.1} parent=1 // pred_check
      _
    $region59: #{tpu_custom_call.1} parent=1 // pred_check_branch
      %170 = sbr.rel (0) target = $region61
    $region60: #{tpu_custom_call.1} parent=1 // pred_region
      _
    $region61: #{tpu_custom_call.1} parent=1 // pred_fallthru
      _
    // Predicated region
    $region62: #{tpu_custom_call.1} parent=1 // pred_check
      _
    $region63: #{tpu_custom_call.1} parent=1 // pred_check_branch
      %172 = sbr.rel (0) target = $region65
    $region64: #{tpu_custom_call.1} parent=1 // pred_region
      _
    $region65: #{tpu_custom_call.1} parent=1 // pred_fallthru
      _
    // Predicated region
    $region66: #{tpu_custom_call.1} parent=1 // pred_check
      _
    $region67: #{tpu_custom_call.1} parent=1 // pred_check_branch
      %174 = sbr.rel (0) target = $region69
    $region68: #{tpu_custom_call.1} parent=1 // pred_region
      _
    $region69: #{tpu_custom_call.1} parent=1 // pred_fallthru
      _
    // Predicated region
    $region70: #{tpu_custom_call.1} parent=1 // pred_check
      _
    $region71: #{tpu_custom_call.1} parent=1 // pred_check_branch
      %176 = sbr.rel (0) target = $region73
    $region72: #{tpu_custom_call.1} parent=1 // pred_region
      _
    $region73: #{tpu_custom_call.1} parent=1 // pred_fallthru
      _
    // Predicated region
    $region74: #{tpu_custom_call.1} parent=1 // pred_check
      _
    $region75: #{tpu_custom_call.1} parent=1 // pred_check_branch
      %178 = sbr.rel (0) target = $region77
    $region76: #{tpu_custom_call.1} parent=1 // pred_region
      _
    $region77: #{tpu_custom_call.1} parent=1 // pred_fallthru
      _
    // Predicated region
    $region78: #{tpu_custom_call.1} parent=1 // pred_check
      _
    $region79: #{tpu_custom_call.1} parent=1 // pred_check_branch
      %180 = sbr.rel (0) target = $region81
    $region80: #{tpu_custom_call.1} parent=1 // pred_region
      _
    $region81: #{tpu_custom_call.1} parent=1 // pred_fallthru
      _
    // Predicated region
    $region82: #{tpu_custom_call.1} parent=1 // pred_check
      _
    $region83: #{tpu_custom_call.1} parent=1 // pred_check_branch
      %182 = sbr.rel (0) target = $region85
    $region84: #{tpu_custom_call.1} parent=1 // pred_region
      _
    $region85: #{tpu_custom_call.1} parent=1 // pred_fallthru
      _
    // Predicated region
    $region86: #{tpu_custom_call.1} parent=1 // pred_check
      _
    $region87: #{tpu_custom_call.1} parent=1 // pred_check_branch
      %184 = sbr.rel (0) target = $region89
    $region88: #{tpu_custom_call.1} parent=1 // pred_region
      _
    $region89: #{tpu_custom_call.1} parent=1 // pred_fallthru
      _
    // Predicated region
    $region90: #{tpu_custom_call.1} parent=1 // pred_check
      _
    $region91: #{tpu_custom_call.1} parent=1 // pred_check_branch
      %186 = sbr.rel (0) target = $region93
    $region92: #{tpu_custom_call.1} parent=1 // pred_region
      _
    $region93: #{tpu_custom_call.1} parent=1 // pred_fallthru
      _
    // Predicated region
    $region94: #{tpu_custom_call.1} parent=1 // pred_check
      _
    $region95: #{tpu_custom_call.1} parent=1 // pred_check_branch
      %188 = sbr.rel (0) target = $region97
    $region96: #{tpu_custom_call.1} parent=1 // pred_region
      _
    $region97: #{tpu_custom_call.1} parent=1 // pred_fallthru
      _
    // Predicated region
    $region98: #{tpu_custom_call.1} parent=1 // pred_check
      _
    $region99: #{tpu_custom_call.1} parent=1 // pred_check_branch
      %190 = sbr.rel (0) target = $region101
    $region100: #{tpu_custom_call.1} parent=1 // pred_region
      _
    $region101: #{tpu_custom_call.1} parent=1 // pred_fallthru
      _
    // Predicated region
    $region102: #{tpu_custom_call.1} parent=1 // pred_check
      _
    $region103: #{tpu_custom_call.1} parent=1 // pred_check_branch
      %192 = sbr.rel (0) target = $region105
    $region104: #{tpu_custom_call.1} parent=1 // pred_region
      _
    $region105: #{tpu_custom_call.1} parent=1 // pred_fallthru
      _
    // Predicated region
    $region106: #{tpu_custom_call.1} parent=1 // pred_check
      _
    $region107: #{tpu_custom_call.1} parent=1 // pred_check_branch
      %194 = sbr.rel (0) target = $region109
    $region108: #{tpu_custom_call.1} parent=1 // pred_region
      _
    $region109: #{tpu_custom_call.1} parent=1 // pred_fallthru
      _
    // Predicated region
    $region110: #{tpu_custom_call.1} parent=1 // pred_check
      _
    $region111: #{tpu_custom_call.1} parent=1 // pred_check_branch
      %196 = sbr.rel (0) target = $region113
    $region112: #{tpu_custom_call.1} parent=1 // pred_region
      _
    $region113: #{tpu_custom_call.1} parent=1 // pred_fallthru
      _
    // Predicated region
    $region114: #{tpu_custom_call.1} parent=1 // pred_check
      _
    $region115: #{tpu_custom_call.1} parent=1 // pred_check_branch
      %198 = sbr.rel (0) target = $region117
    $region116: #{tpu_custom_call.1} parent=1 // pred_region
      _
    $region117: #{tpu_custom_call.1} parent=1 // pred_fallthru
      _
    // Predicated region
    $region118: #{tpu_custom_call.1} parent=1 // pred_check
      _
    $region119: #{tpu_custom_call.1} parent=1 // pred_check_branch
      %200 = sbr.rel (0) target = $region121
    $region120: #{tpu_custom_call.1} parent=1 // pred_region
      _
    $region121: #{tpu_custom_call.1} parent=1 // pred_fallthru
      _
    // Predicated region
    $region122: #{tpu_custom_call.1} parent=1 // pred_check
      _
    $region123: #{tpu_custom_call.1} parent=1 // pred_check_branch
      %202 = sbr.rel (0) target = $region125
    $region124: #{tpu_custom_call.1} parent=1 // pred_region
      _
    $region125: #{tpu_custom_call.1} parent=1 // pred_fallthru
      _
    // Predicated region
    $region126: #{tpu_custom_call.1} parent=1 // pred_check
      _
    $region127: #{tpu_custom_call.1} parent=1 // pred_check_branch
      %204 = sbr.rel (0) target = $region129
    $region128: #{tpu_custom_call.1} parent=1 // pred_region
      _
    $region129: #{tpu_custom_call.1} parent=1 // pred_fallthru
      _
    // Predicated region
    $region130: #{tpu_custom_call.1} parent=1 // pred_check
      _
    $region131: #{tpu_custom_call.1} parent=1 // pred_check_branch
      %206 = sbr.rel (0) target = $region133
    $region132: #{tpu_custom_call.1} parent=1 // pred_region
      _
    $region133: #{tpu_custom_call.1} parent=1 // pred_fallthru
      _
    // Predicated region
    $region134: #{tpu_custom_call.1} parent=1 // pred_check
      _
    $region135: #{tpu_custom_call.1} parent=1 // pred_check_branch
      %208 = sbr.rel (0) target = $region137
    $region136: #{tpu_custom_call.1} parent=1 // pred_region
      _
    $region137: #{tpu_custom_call.1} parent=1 // pred_fallthru
      _
    // Predicated region
    $region138: #{tpu_custom_call.1} parent=1 // pred_check
      _
    $region139: #{tpu_custom_call.1} parent=1 // pred_check_branch
      %210 = sbr.rel (0) target = $region141
    $region140: #{tpu_custom_call.1} parent=1 // pred_region
      _
    $region141: #{tpu_custom_call.1} parent=1 // pred_fallthru
      _
    // Predicated region
    $region142: #{tpu_custom_call.1} parent=1 // pred_check
      _
    $region143: #{tpu_custom_call.1} parent=1 // pred_check_branch
      %212 = sbr.rel (0) target = $region145
    $region144: #{tpu_custom_call.1} parent=1 // pred_region
      _
    $region145: #{tpu_custom_call.1} parent=1 // pred_fallthru
      _
    // Predicated region
    $region146: #{tpu_custom_call.1} parent=1 // pred_check
      _
    $region147: #{tpu_custom_call.1} parent=1 // pred_check_branch
      %214 = sbr.rel (0) target = $region149
    $region148: #{tpu_custom_call.1} parent=1 // pred_region
      _
    $region149: #{tpu_custom_call.1} parent=1 // pred_fallthru
      _
    // Predicated region
    $region150: #{tpu_custom_call.1} parent=1 // pred_check
      _
    $region151: #{tpu_custom_call.1} parent=1 // pred_check_branch
      %216 = sbr.rel (0) target = $region153
    $region152: #{tpu_custom_call.1} parent=1 // pred_region
      _
    $region153: #{tpu_custom_call.1} parent=1 // pred_fallthru
      _
    // Predicated region
    $region154: #{tpu_custom_call.1} parent=1 // pred_check
      _
    $region155: #{tpu_custom_call.1} parent=1 // pred_check_branch
      %218 = sbr.rel (0) target = $region157
    $region156: #{tpu_custom_call.1} parent=1 // pred_region
      _
    $region157: #{tpu_custom_call.1} parent=1 // pred_fallthru
      _
    // Predicated region
    $region158: #{tpu_custom_call.1} parent=1 // pred_check
      _
    $region159: #{tpu_custom_call.1} parent=1 // pred_check_branch
      %220 = sbr.rel (0) target = $region161
    $region160: #{tpu_custom_call.1} parent=1 // pred_region
      _
    $region161: #{tpu_custom_call.1} parent=1 // pred_fallthru
      _
    // Predicated region
    $region162: #{tpu_custom_call.1} parent=1 // pred_check
      _
    $region163: #{tpu_custom_call.1} parent=1 // pred_check_branch
      %222 = sbr.rel (0) target = $region165
    $region164: #{tpu_custom_call.1} parent=1 // pred_region
      %223 = dma.done [#allocation11], 128
    $region165: #{tpu_custom_call.1} parent=1 // pred_fallthru
      _
    // Predicated region
    $region166: #{tpu_custom_call.1} parent=1 // pred_check
      _
    $region167: #{tpu_custom_call.1} parent=1 // pred_check_branch
      %225 = sbr.rel (0) target = $region169
    $region168: #{tpu_custom_call.1} parent=1 // pred_region
      %226 = dma.done [#allocation13], 16
    $region169: #{tpu_custom_call.1} parent=1 // pred_fallthru
      _
    // Predicated region
    $region170: #{tpu_custom_call.1} parent=1 // pred_check
      _
    $region171: #{tpu_custom_call.1} parent=1 // pred_check_branch
      %228 = sbr.rel (0) target = $region173
    $region172: #{tpu_custom_call.1} parent=1 // pred_region
      %229 = dma.done [#allocation13], 16
    $region173: #{tpu_custom_call.1} parent=1 // pred_fallthru
      _
    // Predicated region
    $region174: #{tpu_custom_call.1} parent=1 // pred_check
      _
    $region175: #{tpu_custom_call.1} parent=1 // pred_check_branch
      %231 = sbr.rel (0) target = $region177
    $region176: #{tpu_custom_call.1} parent=1 // pred_region
      %232 = dma.done [#allocation16], 16
    $region177: #{tpu_custom_call.1} parent=1 // pred_fallthru
      _
    // Predicated region
    $region178: #{tpu_custom_call.1} parent=1 // pred_check
      _
    $region179: #{tpu_custom_call.1} parent=1 // pred_check_branch
      %234 = sbr.rel (0) target = $region181
    $region180: #{tpu_custom_call.1} parent=1 // pred_region
      %235 = dma.done [#allocation16], 16
    $region181: #{tpu_custom_call.1} parent=1 // pred_fallthru
      _
    %v236 = vld [vmem:[%s5] sm:$0xff]
    %v237 = vld [vmem:[%s5 + $0x8] sm:$0xff]
    %v238 = vld [vmem:[%s5 + $0x10] sm:$0xff]
    %v239 = vld [vmem:[%s5 + $0x18] sm:$0xff]
    %v240 = vld [vmem:[#allocation10] sm:$0xff]
    %v241 = vld [vmem:[#allocation12] sm:$0x1]
    %v243 = vlaneseq
    %v244 = vshrl.u32 %v243, 7
    %v245 = vsub.s32 0, %v244
    %v246 = vrot.slane %v241, %v245
    %vm248 = vcmask 64512
    %v250 = vsel %vm248, %v236, 0
    %v253 = vsel %vm248, %v237, 0
    %v256 = vsel %vm248, %v238, 0
    %v259 = vsel %vm248, %v239, 0
    %261 = vmatprep.subr.mxu0 0.0
    %262 = vmatpush1.msra.mxu0 %v240
    %263 = vmatprep.subr.mxu0 0.0
    %264 = vmatpush1.msra.mxu0 0.0
    %265 = vmatprep.subr.mxu0 0.0
    %266 = vmatpush1.msra.mxu0 0.0
    %267 = vmatprep.subr.mxu0 0.0
    %268 = vmatpush1.msra.mxu0 0.0
    %269 = vmatprep.subr.mxu0 0.0
    %270 = vmatpush1.msra.mxu0 0.0
    %271 = vmatprep.subr.mxu0 0.0
    %272 = vmatpush1.msra.mxu0 0.0
    %273 = vmatprep.subr.mxu0 0.0
    %274 = vmatpush1.msra.mxu0 0.0
    %275 = vmatprep.subr.mxu0 0.0
    %276 = vmatpush1.msra.mxu0 0.0
    %277 = vmatprep.subr.mxu0 0.0
    %278 = vmatpush1.msra.mxu0 0.0
    %279 = vmatprep.subr.mxu0 0.0
    %280 = vmatpush1.msra.mxu0 0.0
    %281 = vmatprep.subr.mxu0 0.0
    %282 = vmatpush1.msra.mxu0 0.0
    %283 = vmatprep.subr.mxu0 0.0
    %284 = vmatpush1.msra.mxu0 0.0
    %285 = vmatprep.subr.mxu0 0.0
    %286 = vmatpush1.msra.mxu0 0.0
    %287 = vmatprep.subr.mxu0 0.0
    %288 = vmatpush1.msra.mxu0 0.0
    %289 = vmatprep.subr.mxu0 0.0
    %290 = vmatpush1.msra.mxu0 0.0
    %291 = vmatprep.subr.mxu0 0.0
    %292 = vmatpush1.msra.mxu0 0.0
    %293 = vmatprep.subr.mxu0 0.0
    %294 = vmatpush1.msra.mxu0 0.0
    %295 = vmatprep.subr.mxu0 0.0
    %296 = vmatpush1.msra.mxu0 0.0
    %297 = vmatprep.subr.mxu0 0.0
    %298 = vmatpush1.msra.mxu0 0.0
    %299 = vmatprep.subr.mxu0 0.0
    %300 = vmatpush1.msra.mxu0 0.0
    %301 = vmatprep.subr.mxu0 0.0
    %302 = vmatpush1.msra.mxu0 0.0
    %303 = vmatprep.subr.mxu0 0.0
    %304 = vmatpush1.msra.mxu0 0.0
    %305 = vmatprep.subr.mxu0 0.0
    %306 = vmatpush1.msra.mxu0 0.0
    %307 = vmatprep.subr.mxu0 0.0
    %308 = vmatpush1.msra.mxu0 0.0
    %309 = vmatprep.subr.mxu0 0.0
    %310 = vmatpush1.msra.mxu0 0.0
    %311 = vmatprep.subr.mxu0 0.0
    %312 = vmatpush1.msra.mxu0 0.0
    %313 = vmatprep.subr.mxu0 0.0
    %314 = vmatpush1.msra.mxu0 0.0
    %315 = vmatprep.subr.mxu0 0.0
    %316 = vmatpush1.msra.mxu0 0.0
    %317 = vmatprep.subr.mxu0 0.0
    %318 = vmatpush1.msra.mxu0 0.0
    %319 = vmatprep.subr.mxu0 0.0
    %320 = vmatpush1.msra.mxu0 0.0
    %321 = vmatprep.subr.mxu0 0.0
    %322 = vmatpush1.msra.mxu0 0.0
    %323 = vmatprep.subr.mxu0 0.0
    %324 = vmatpush1.msra.mxu0 0.0
    %325 = vmatprep.mubr.f32.mxu0 0.0
    %326 = vmatmul.mubr.f32.gmra.mrb[0].mxu0 %v250
    %v327 = vpop.f32.mrb[0].mxu0
    %v328 = vadd.f32 %v246, %v327
    %v329 = vpop.f32.mrb[0].mxu0
    %330 = vmatprep.mubr.f32.mxu0 0.0
    %331 = vmatmul.mubr.f32.gmra.mrb[0].mxu0 %v253
    %v332 = vpop.f32.mrb[0].mxu0
    %v333 = vadd.f32 %v246, %v332
    %v334 = vpop.f32.mrb[0].mxu0
    %335 = vmatprep.mubr.f32.mxu0 0.0
    %336 = vmatmul.mubr.f32.gmra.mrb[0].mxu0 %v256
    %v337 = vpop.f32.mrb[0].mxu0
    %v338 = vadd.f32 %v246, %v337
    %v339 = vpop.f32.mrb[0].mxu0
    %340 = vmatprep.mubr.f32.mxu0 0.0
    %341 = vmatmul.mubr.f32.gmra.mrb[0].mxu0 %v259
    %v342 = vpop.f32.mrb[0].mxu0
    %v343 = vadd.f32 %v246, %v342
    %v344 = vpop.f32.mrb[0].mxu0
    %345 = vdwg.mxu0
    %v346 = vld [vmem:[#allocation14] sm:$0x1]
    %v347 = vld [vmem:[#allocation15] sm:$0x1]
    %v348 = vld [vmem:[#allocation17] sm:$0x1]
    %vm349 = vcmask 130048
    %v350 = vsel %vm349, %v328, 0.0
    %v351 = vsel %vm349, %v333, 0.0
    %v352 = vadd.f32 %v350, %v351
    %v353 = vsel %vm349, %v338, 0.0
    %v354 = vadd.f32 %v352, %v353
    %v355 = vsel %vm349, %v343, 0.0
    %v356 = vadd.f32 %v354, %v355
    %v357 = vrot.slane %v356, 4
    %v358 = vadd.f32 %v356, %v357
    %v359 = vrot.slane %v358, 2
    %v360 = vadd.f32 %v358, %v359
    %v361 = vrot.slane %v360, 1
    %v362 = vadd.f32 %v360, %v361
    %v363 = vrcp.pop 32.0
    %v364 = vmul.f32 %v362, %v363
    %v365 = vmul.f32 %v348, %v364
    %v367 = vlaneseq
    %v368 = vshrl.u32 %v367, 7
    %v369 = vsub.s32 0, %v368
    %v370 = vrot.slane %v365, %v369
    %v372 = vsub.f32 %v328, %v370
    %v373 = vsub.f32 %v333, %v370
    %v374 = vsub.f32 %v338, %v370
    %v375 = vsub.f32 %v343, %v370
    %v376 = vmul.f32 %v372, %v372
    %v377 = vmul.f32 %v373, %v373
    %v378 = vmul.f32 %v374, %v374
    %v379 = vmul.f32 %v375, %v375
    %v380 = vsel %vm349, %v376, 0.0
    %v381 = vsel %vm349, %v377, 0.0
    %v382 = vadd.f32 %v380, %v381
    %v383 = vsel %vm349, %v378, 0.0
    %v384 = vadd.f32 %v382, %v383
    %v385 = vsel %vm349, %v379, 0.0
    %v386 = vadd.f32 %v384, %v385
    %v387 = vrot.slane %v386, 4
    %v388 = vadd.f32 %v386, %v387
    %v389 = vrot.slane %v388, 2
    %v390 = vadd.f32 %v388, %v389
    %v391 = vrot.slane %v390, 1
    %v392 = vadd.f32 %v390, %v391
    %v393 = vmul.f32 %v392, %v363
    %v395 = vlaneseq
    %v396 = vshrl.u32 %v395, 7
    %v397 = vsub.s32 0, %v396
    %v398 = vrot.slane %v346, %v397
    %v400 = vmul.f32 %v398, %v372
    %v401 = vmul.f32 %v398, %v373
    %v402 = vmul.f32 %v398, %v374
    %v403 = vmul.f32 %v398, %v375
    %v404 = vadd.f32 %v393, 1e-05
    %v405 = vrsqrt.pop %v404
    %v406 = vmul.f32 %v400, %v405
    %v407 = vmul.f32 %v401, %v405
    %v408 = vmul.f32 %v402, %v405
    %v409 = vmul.f32 %v403, %v405
    %v411 = vlaneseq
    %v412 = vshrl.u32 %v411, 7
    %v413 = vsub.s32 0, %v412
    %v414 = vrot.slane %v347, %v413
    %v416 = vadd.f32 %v406, %v414
    %v417 = vadd.f32 %v407, %v414
    %v418 = vadd.f32 %v408, %v414
    %v419 = vadd.f32 %v409, %v414
    %v420 = vmax.f32 %v416, 0.0
    %v421 = vmax.f32 %v417, 0.0
    %v422 = vmax.f32 %v418, 0.0
    %v423 = vmax.f32 %v419, 0.0
    %v424 = vld [vmem:[%s21] sm:$0xff]
    %v425 = vld [vmem:[%s21 + $0x8] sm:$0xff]
    %v426 = vld [vmem:[%s23] sm:$0x1]
    %v428 = vlaneseq
    %v429 = vshrl.u32 %v428, 7
    %v430 = vsub.s32 0, %v429
    %v431 = vrot.slane %v426, %v430
    %v434 = vsel %vm349, %v420, 0
    %v437 = vsel %vm349, %v421, 0
    %v440 = vsel %vm349, %v422, 0
    %v443 = vsel %vm349, %v423, 0
    %445 = vmatprep.subr.mxu0 0.0
    %446 = vmatpush1.msra.mxu0 %v424
    %447 = vmatprep.subr.mxu0 0.0
    %448 = vmatpush1.msra.mxu0 %v425
    %449 = vmatprep.subr.mxu0 0.0
    %450 = vmatpush1.msra.mxu0 0.0
    %451 = vmatprep.subr.mxu0 0.0
    %452 = vmatpush1.msra.mxu0 0.0
    %453 = vmatprep.subr.mxu0 0.0
    %454 = vmatpush1.msra.mxu0 0.0
    %455 = vmatprep.subr.mxu0 0.0
    %456 = vmatpush1.msra.mxu0 0.0
    %457 = vmatprep.subr.mxu0 0.0
    %458 = vmatpush1.msra.mxu0 0.0
    %459 = vmatprep.subr.mxu0 0.0
    %460 = vmatpush1.msra.mxu0 0.0
    %461 = vmatprep.subr.mxu0 0.0
    %462 = vmatpush1.msra.mxu0 0.0
    %463 = vmatprep.subr.mxu0 0.0
    %464 = vmatpush1.msra.mxu0 0.0
    %465 = vmatprep.subr.mxu0 0.0
    %466 = vmatpush1.msra.mxu0 0.0
    %467 = vmatprep.subr.mxu0 0.0
    %468 = vmatpush1.msra.mxu0 0.0
    %469 = vmatprep.subr.mxu0 0.0
    %470 = vmatpush1.msra.mxu0 0.0
    %471 = vmatprep.subr.mxu0 0.0
    %472 = vmatpush1.msra.mxu0 0.0
    %473 = vmatprep.subr.mxu0 0.0
    %474 = vmatpush1.msra.mxu0 0.0
    %475 = vmatprep.subr.mxu0 0.0
    %476 = vmatpush1.msra.mxu0 0.0
    %477 = vmatprep.subr.mxu0 0.0
    %478 = vmatpush1.msra.mxu0 0.0
    %479 = vmatprep.subr.mxu0 0.0
    %480 = vmatpush1.msra.mxu0 0.0
    %481 = vmatprep.subr.mxu0 0.0
    %482 = vmatpush1.msra.mxu0 0.0
    %483 = vmatprep.subr.mxu0 0.0
    %484 = vmatpush1.msra.mxu0 0.0
    %485 = vmatprep.subr.mxu0 0.0
    %486 = vmatpush1.msra.mxu0 0.0
    %487 = vmatprep.subr.mxu0 0.0
    %488 = vmatpush1.msra.mxu0 0.0
    %489 = vmatprep.subr.mxu0 0.0
    %490 = vmatpush1.msra.mxu0 0.0
    %491 = vmatprep.subr.mxu0 0.0
    %492 = vmatpush1.msra.mxu0 0.0
    %493 = vmatprep.subr.mxu0 0.0
    %494 = vmatpush1.msra.mxu0 0.0
    %495 = vmatprep.subr.mxu0 0.0
    %496 = vmatpush1.msra.mxu0 0.0
    %497 = vmatprep.subr.mxu0 0.0
    %498 = vmatpush1.msra.mxu0 0.0
    %499 = vmatprep.subr.mxu0 0.0
    %500 = vmatpush1.msra.mxu0 0.0
    %501 = vmatprep.subr.mxu0 0.0
    %502 = vmatpush1.msra.mxu0 0.0
    %503 = vmatprep.subr.mxu0 0.0
    %504 = vmatpush1.msra.mxu0 0.0
    %505 = vmatprep.subr.mxu0 0.0
    %506 = vmatpush1.msra.mxu0 0.0
    %507 = vmatprep.subr.mxu0 0.0
    %508 = vmatpush1.msra.mxu0 0.0
    %509 = vmatprep.mubr.f32.mxu0 0.0
    %510 = vmatmul.mubr.f32.gmra.mrb[0].mxu0 %v434
    %v511 = vpop.f32.mrb[0].mxu0
    %v512 = vadd.f32 %v431, %v511
    %v513 = vpop.f32.mrb[0].mxu0
    %514 = vmatprep.mubr.f32.mxu0 0.0
    %515 = vmatmul.mubr.f32.gmra.mrb[0].mxu0 %v437
    %v516 = vpop.f32.mrb[0].mxu0
    %v517 = vadd.f32 %v431, %v516
    %v518 = vpop.f32.mrb[0].mxu0
    %519 = vmatprep.mubr.f32.mxu0 0.0
    %520 = vmatmul.mubr.f32.gmra.mrb[0].mxu0 %v440
    %v521 = vpop.f32.mrb[0].mxu0
    %v522 = vadd.f32 %v431, %v521
    %v523 = vpop.f32.mrb[0].mxu0
    %524 = vmatprep.mubr.f32.mxu0 0.0
    %525 = vmatmul.mubr.f32.gmra.mrb[0].mxu0 %v443
    %v526 = vpop.f32.mrb[0].mxu0
    %v527 = vadd.f32 %v431, %v526
    %v528 = vpop.f32.mrb[0].mxu0
    %529 = vdwg.mxu0
    %v530 = vmax.f32 %v512, 0.0
    %v531 = vmax.f32 %v517, 0.0
    %v532 = vmax.f32 %v522, 0.0
    %v533 = vmax.f32 %v527, 0.0
    %v534 = vld [vmem:[%s25] sm:$0xff]
    %v535 = vld [vmem:[%s25 + $0x8] sm:$0xff]
    %v536 = vld [vmem:[%s27] sm:$0x1]
    %v538 = vlaneseq
    %v539 = vshrl.u32 %v538, 7
    %v540 = vsub.s32 0, %v539
    %v541 = vrot.slane %v536, %v540
    %543 = vmatprep.subr.mxu0 0.0
    %544 = vmatpush1.msra.mxu0 %v534
    %545 = vmatprep.subr.mxu0 0.0
    %546 = vmatpush1.msra.mxu0 %v535
    %547 = vmatprep.subr.mxu0 0.0
    %548 = vmatpush1.msra.mxu0 0.0
    %549 = vmatprep.subr.mxu0 0.0
    %550 = vmatpush1.msra.mxu0 0.0
    %551 = vmatprep.subr.mxu0 0.0
    %552 = vmatpush1.msra.mxu0 0.0
    %553 = vmatprep.subr.mxu0 0.0
    %554 = vmatpush1.msra.mxu0 0.0
    %555 = vmatprep.subr.mxu0 0.0
    %556 = vmatpush1.msra.mxu0 0.0
    %557 = vmatprep.subr.mxu0 0.0
    %558 = vmatpush1.msra.mxu0 0.0
    %559 = vmatprep.subr.mxu0 0.0
    %560 = vmatpush1.msra.mxu0 0.0
    %561 = vmatprep.subr.mxu0 0.0
    %562 = vmatpush1.msra.mxu0 0.0
    %563 = vmatprep.subr.mxu0 0.0
    %564 = vmatpush1.msra.mxu0 0.0
    %565 = vmatprep.subr.mxu0 0.0
    %566 = vmatpush1.msra.mxu0 0.0
    %567 = vmatprep.subr.mxu0 0.0
    %568 = vmatpush1.msra.mxu0 0.0
    %569 = vmatprep.subr.mxu0 0.0
    %570 = vmatpush1.msra.mxu0 0.0
    %571 = vmatprep.subr.mxu0 0.0
    %572 = vmatpush1.msra.mxu0 0.0
    %573 = vmatprep.subr.mxu0 0.0
    %574 = vmatpush1.msra.mxu0 0.0
    %575 = vmatprep.subr.mxu0 0.0
    %576 = vmatpush1.msra.mxu0 0.0
    %577 = vmatprep.subr.mxu0 0.0
    %578 = vmatpush1.msra.mxu0 0.0
    %579 = vmatprep.subr.mxu0 0.0
    %580 = vmatpush1.msra.mxu0 0.0
    %581 = vmatprep.subr.mxu0 0.0
    %582 = vmatpush1.msra.mxu0 0.0
    %583 = vmatprep.subr.mxu0 0.0
    %584 = vmatpush1.msra.mxu0 0.0
    %585 = vmatprep.subr.mxu0 0.0
    %586 = vmatpush1.msra.mxu0 0.0
    %587 = vmatprep.subr.mxu0 0.0
    %588 = vmatpush1.msra.mxu0 0.0
    %589 = vmatprep.subr.mxu0 0.0
    %590 = vmatpush1.msra.mxu0 0.0
    %591 = vmatprep.subr.mxu0 0.0
    %592 = vmatpush1.msra.mxu0 0.0
    %593 = vmatprep.subr.mxu0 0.0
    %594 = vmatpush1.msra.mxu0 0.0
    %595 = vmatprep.subr.mxu0 0.0
    %596 = vmatpush1.msra.mxu0 0.0
    %597 = vmatprep.subr.mxu0 0.0
    %598 = vmatpush1.msra.mxu0 0.0
    %599 = vmatprep.subr.mxu0 0.0
    %600 = vmatpush1.msra.mxu0 0.0
    %601 = vmatprep.subr.mxu0 0.0
    %602 = vmatpush1.msra.mxu0 0.0
    %603 = vmatprep.subr.mxu0 0.0
    %604 = vmatpush1.msra.mxu0 0.0
    %605 = vmatprep.subr.mxu0 0.0
    %606 = vmatpush1.msra.mxu0 0.0
    %607 = vmatprep.mubr.f32.mxu0 0.0
    %608 = vmatmul.mubr.f32.gmra.mrb[0].mxu0 %v434
    %v609 = vpop.f32.mrb[0].mxu0
    %v610 = vadd.f32 %v541, %v609
    %v611 = vpop.f32.mrb[0].mxu0
    %612 = vmatprep.mubr.f32.mxu0 0.0
    %613 = vmatmul.mubr.f32.gmra.mrb[0].mxu0 %v437
    %v614 = vpop.f32.mrb[0].mxu0
    %v615 = vadd.f32 %v541, %v614
    %v616 = vpop.f32.mrb[0].mxu0
    %617 = vmatprep.mubr.f32.mxu0 0.0
    %618 = vmatmul.mubr.f32.gmra.mrb[0].mxu0 %v440
    %v619 = vpop.f32.mrb[0].mxu0
    %v620 = vadd.f32 %v541, %v619
    %v621 = vpop.f32.mrb[0].mxu0
    %622 = vmatprep.mubr.f32.mxu0 0.0
    %623 = vmatmul.mubr.f32.gmra.mrb[0].mxu0 %v443
    %v624 = vpop.f32.mrb[0].mxu0
    %v625 = vadd.f32 %v541, %v624
    %v626 = vpop.f32.mrb[0].mxu0
    %627 = vdwg.mxu0
    %v628 = vmax.f32 %v610, 0.0
    %v629 = vmax.f32 %v615, 0.0
    %v630 = vmax.f32 %v620, 0.0
    %v631 = vmax.f32 %v625, 0.0
    %vm632 = vcmask 261120
    %633 = vst.msk [vmem:[#allocation2] sm:$0xff] %vm632, %v628
    %634 = vst.msk [vmem:[#allocation2 + $0x8] sm:$0xff] %vm632, %v629
    %635 = vst.msk [vmem:[#allocation2 + $0x10] sm:$0xff] %vm632, %v630
    %636 = vst.msk [vmem:[#allocation2 + $0x18] sm:$0xff] %vm632, %v631
    %v637 = vld [vmem:[%s9] sm:$0xff]
    %v638 = vld [vmem:[%s9 + $0x8] sm:$0xff]
    %v639 = vld [vmem:[%s9 + $0x10] sm:$0xff]
    %v640 = vld [vmem:[%s9 + $0x18] sm:$0xff]
    %v641 = vld [vmem:[%s9 + $0x20] sm:$0xff]
    %v642 = vld [vmem:[%s9 + $0x28] sm:$0xff]
    %v643 = vld [vmem:[%s9 + $0x30] sm:$0xff]
    %v644 = vld [vmem:[%s9 + $0x38] sm:$0xff]
    %v645 = vld [vmem:[%s9 + $0x40] sm:$0xff]
    %v646 = vld [vmem:[%s9 + $0x48] sm:$0xff]
    %v647 = vld [vmem:[%s9 + $0x50] sm:$0xff]
    %v648 = vld [vmem:[%s9 + $0x58] sm:$0xff]
    %v649 = vld [vmem:[%s33] sm:$0x1]
    %651 = vset.pattern.permute.xlu0 0
    %652 = vperm.xlu0 %651, %v637
    %v653 = vpop.permute.xlu0 %652
    %656 = vset.pattern.permute.xlu0 0
    %657 = vperm.xlu0 %656, %v638
    %v658 = vpop.permute.xlu0 %657
    %661 = vset.pattern.permute.xlu0 0
    %662 = vperm.xlu0 %661, %v639
    %v663 = vpop.permute.xlu0 %662
    %666 = vset.pattern.permute.xlu0 0
    %667 = vperm.xlu0 %666, %v640
    %v668 = vpop.permute.xlu0 %667
    %671 = vset.pattern.permute.xlu0 0
    %672 = vperm.xlu0 %671, %v641
    %v673 = vpop.permute.xlu0 %672
    %676 = vset.pattern.permute.xlu0 0
    %677 = vperm.xlu0 %676, %v642
    %v678 = vpop.permute.xlu0 %677
    %681 = vset.pattern.permute.xlu0 0
    %682 = vperm.xlu0 %681, %v643
    %v683 = vpop.permute.xlu0 %682
    %686 = vset.pattern.permute.xlu0 0
    %687 = vperm.xlu0 %686, %v644
    %v688 = vpop.permute.xlu0 %687
    %691 = vset.pattern.permute.xlu0 0
    %692 = vperm.xlu0 %691, %v645
    %v693 = vpop.permute.xlu0 %692
    %696 = vset.pattern.permute.xlu0 0
    %697 = vperm.xlu0 %696, %v646
    %v698 = vpop.permute.xlu0 %697
    %701 = vset.pattern.permute.xlu0 0
    %702 = vperm.xlu0 %701, %v647
    %v703 = vpop.permute.xlu0 %702
    %706 = vset.pattern.permute.xlu0 0
    %707 = vperm.xlu0 %706, %v648
    %v708 = vpop.permute.xlu0 %707
    %v711 = vlaneseq
    %v712 = vshrl.u32 %v711, 7
    %v713 = vsub.s32 0, %v712
    %v714 = vrot.slane %v649, %v713
    %v716 = vmul.f32 %v653, %v714
    %v717 = vmul.f32 %v658, %v714
    %v718 = vmul.f32 %v663, %v714
    %v719 = vmul.f32 %v668, %v714
    %v720 = vmul.f32 %v673, %v714
    %v721 = vmul.f32 %v678, %v714
    %v722 = vmul.f32 %v683, %v714
    %v723 = vmul.f32 %v688, %v714
    %v724 = vmul.f32 %v693, %v714
    %v725 = vmul.f32 %v698, %v714
    %v726 = vmul.f32 %v703, %v714
    %v727 = vmul.f32 %v708, %v714
    %v728 = vld [vmem:[%s35] sm:$0x1]
    %v730 = vlaneseq
    %v731 = vshrl.u32 %v730, 7
    %v732 = vsub.s32 0, %v731
    %v733 = vrot.slane %v728, %v732
    %v735 = vadd.f32 %v716, %v733
    %v736 = vadd.f32 %v717, %v733
    %v737 = vadd.f32 %v718, %v733
    %v738 = vadd.f32 %v719, %v733
    %v739 = vadd.f32 %v720, %v733
    %v740 = vadd.f32 %v721, %v733
    %v741 = vadd.f32 %v722, %v733
    %v742 = vadd.f32 %v723, %v733
    %v743 = vadd.f32 %v724, %v733
    %v744 = vadd.f32 %v725, %v733
    %v745 = vadd.f32 %v726, %v733
    %v746 = vadd.f32 %v727, %v733
    %v747 = vld [vmem:[%s7] sm:$0xff]
    %v748 = vld [vmem:[%s7 + $0x8] sm:$0xff]
    %v749 = vld [vmem:[%s7 + $0x10] sm:$0xff]
    %v750 = vld [vmem:[%s7 + $0x18] sm:$0xff]
    %v751 = vld [vmem:[%s7 + $0x20] sm:$0xff]
    %v752 = vld [vmem:[%s7 + $0x28] sm:$0xff]
    %v753 = vld [vmem:[%s7 + $0x30] sm:$0xff]
    %v754 = vld [vmem:[%s7 + $0x38] sm:$0xff]
    %v755 = vld [vmem:[%s7 + $0x40] sm:$0xff]
    %v756 = vld [vmem:[%s7 + $0x48] sm:$0xff]
    %v757 = vld [vmem:[%s7 + $0x50] sm:$0xff]
    %v758 = vld [vmem:[%s7 + $0x58] sm:$0xff]
    %v759 = vld [vmem:[%s63] sm:$0xff]
    %v760 = vld [vmem:[%s63 + $0x8] sm:$0xff]
    %v761 = vld [vmem:[%s63 + $0x10] sm:$0xff]
    %v762 = vld [vmem:[%s63 + $0x18] sm:$0xff]
    %v763 = vld [vmem:[%s67] sm:$0x1]
    %v765 = vlaneseq
    %v766 = vshrl.u32 %v765, 7
    %v767 = vsub.s32 0, %v766
    %v768 = vrot.slane %v763, %v767
    %v771 = vsel %vm632, %v530, 0
    %v774 = vsel %vm632, %v531, 0
    %v777 = vsel %vm632, %v532, 0
    %v780 = vsel %vm632, %v533, 0
    %782 = vmatprep.subr.mxu0 0.0
    %783 = vmatpush1.msra.mxu0 %v759
    %784 = vmatprep.subr.mxu0 0.0
    %785 = vmatpush1.msra.mxu0 %v760
    %786 = vmatprep.subr.mxu0 0.0
    %787 = vmatpush1.msra.mxu0 %v761
    %788 = vmatprep.subr.mxu0 0.0
    %789 = vmatpush1.msra.mxu0 %v762
    %790 = vmatprep.subr.mxu0 0.0
    %791 = vmatpush1.msra.mxu0 0.0
    %792 = vmatprep.subr.mxu0 0.0
    %793 = vmatpush1.msra.mxu0 0.0
    %794 = vmatprep.subr.mxu0 0.0
    %795 = vmatpush1.msra.mxu0 0.0
    %796 = vmatprep.subr.mxu0 0.0
    %797 = vmatpush1.msra.mxu0 0.0
    %798 = vmatprep.subr.mxu0 0.0
    %799 = vmatpush1.msra.mxu0 0.0
    %800 = vmatprep.subr.mxu0 0.0
    %801 = vmatpush1.msra.mxu0 0.0
    %802 = vmatprep.subr.mxu0 0.0
    %803 = vmatpush1.msra.mxu0 0.0
    %804 = vmatprep.subr.mxu0 0.0
    %805 = vmatpush1.msra.mxu0 0.0
    %806 = vmatprep.subr.mxu0 0.0
    %807 = vmatpush1.msra.mxu0 0.0
    %808 = vmatprep.subr.mxu0 0.0
    %809 = vmatpush1.msra.mxu0 0.0
    %810 = vmatprep.subr.mxu0 0.0
    %811 = vmatpush1.msra.mxu0 0.0
    %812 = vmatprep.subr.mxu0 0.0
    %813 = vmatpush1.msra.mxu0 0.0
    %814 = vmatprep.subr.mxu0 0.0
    %815 = vmatpush1.msra.mxu0 0.0
    %816 = vmatprep.subr.mxu0 0.0
    %817 = vmatpush1.msra.mxu0 0.0
    %818 = vmatprep.subr.mxu0 0.0
    %819 = vmatpush1.msra.mxu0 0.0
    %820 = vmatprep.subr.mxu0 0.0
    %821 = vmatpush1.msra.mxu0 0.0
    %822 = vmatprep.subr.mxu0 0.0
    %823 = vmatpush1.msra.mxu0 0.0
    %824 = vmatprep.subr.mxu0 0.0
    %825 = vmatpush1.msra.mxu0 0.0
    %826 = vmatprep.subr.mxu0 0.0
    %827 = vmatpush1.msra.mxu0 0.0
    %828 = vmatprep.subr.mxu0 0.0
    %829 = vmatpush1.msra.mxu0 0.0
    %830 = vmatprep.subr.mxu0 0.0
    %831 = vmatpush1.msra.mxu0 0.0
    %832 = vmatprep.subr.mxu0 0.0
    %833 = vmatpush1.msra.mxu0 0.0
    %834 = vmatprep.subr.mxu0 0.0
    %835 = vmatpush1.msra.mxu0 0.0
    %836 = vmatprep.subr.mxu0 0.0
    %837 = vmatpush1.msra.mxu0 0.0
    %838 = vmatprep.subr.mxu0 0.0
    %839 = vmatpush1.msra.mxu0 0.0
    %840 = vmatprep.subr.mxu0 0.0
    %841 = vmatpush1.msra.mxu0 0.0
    %842 = vmatprep.subr.mxu0 0.0
    %843 = vmatpush1.msra.mxu0 0.0
    %844 = vmatprep.subr.mxu0 0.0
    %845 = vmatpush1.msra.mxu0 0.0
    %846 = vmatprep.mubr.f32.mxu0 0.0
    %847 = vmatmul.mubr.f32.gmra.mrb[0].mxu0 %v771
    %v848 = vpop.f32.mrb[0].mxu0
    %v849 = vadd.f32 %v768, %v848
    %v850 = vpop.f32.mrb[0].mxu0
    %851 = vmatprep.mubr.f32.mxu0 0.0
    %852 = vmatmul.mubr.f32.gmra.mrb[0].mxu0 %v774
    %v853 = vpop.f32.mrb[0].mxu0
    %v854 = vadd.f32 %v768, %v853
    %v855 = vpop.f32.mrb[0].mxu0
    %856 = vmatprep.mubr.f32.mxu0 0.0
    %857 = vmatmul.mubr.f32.gmra.mrb[0].mxu0 %v777
    %v858 = vpop.f32.mrb[0].mxu0
    %v859 = vadd.f32 %v768, %v858
    %v860 = vpop.f32.mrb[0].mxu0
    %861 = vmatprep.mubr.f32.mxu0 0.0
    %862 = vmatmul.mubr.f32.gmra.mrb[0].mxu0 %v780
    %v863 = vpop.f32.mrb[0].mxu0
    %v864 = vadd.f32 %v768, %v863
    %v865 = vpop.f32.mrb[0].mxu0
    %866 = vdwg.mxu0
    loop: start=0, step=1, limit=96
    $region182: #{tpu_custom_call.1} parent=1 // loop_pre_header
      _
    $region183: #{tpu_custom_call.1} parent=1 // loop_header
      %s868 = sphi 0, %s872
      %p869 = scmp.ge.s32.totalorder %s868, 96
    $region184: #{tpu_custom_call.1} parent=1 // loop_header_branch
      %871 = sbr.rel (%p869) target = $region188
    $region185: #{tpu_custom_call.1} parent=1 // loop_body
      %s873 = sld [smem:[#allocation7 + %s868]]
      %s874 = sld [smem:[#allocation8 + %s868]]
      %s875 = scalar_lea.vmem [#allocation2], %s873
      %v876 = vld [vmem:[%s875] sm:$0x1]
      %s877 = scalar_lea.vmem [#allocation4], %s868
      %vm878 = vcmask 253952
      %879 = vst.msk [vmem:[%s877] sm:$0x1] %vm878, %v876
      %s880 = scalar_lea.vmem [#allocation2], %s874
      %v881 = vld [vmem:[%s880] sm:$0x1]
      %s882 = scalar_lea.vmem [#allocation5], %s868
      %883 = vst.msk [vmem:[%s882] sm:$0x1] %vm878, %v881
    $region186: #{tpu_custom_call.1} parent=1 // loop_footer
      %s872 = sadd.s32 1, %s868
    $region187: #{tpu_custom_call.1} parent=1 // loop_footer_branch
      %867 = sbr.rel target = $region183
    $region188: #{tpu_custom_call.1} parent=1 // loop_exit
      _
    %v884 = vld [vmem:[#allocation4] sm:$0xff]
    %v885 = vld [vmem:[#allocation4 + $0x8] sm:$0xff]
    %v886 = vld [vmem:[#allocation4 + $0x10] sm:$0xff]
    %v887 = vld [vmem:[#allocation4 + $0x18] sm:$0xff]
    %v888 = vld [vmem:[#allocation4 + $0x20] sm:$0xff]
    %v889 = vld [vmem:[#allocation4 + $0x28] sm:$0xff]
    %v890 = vld [vmem:[#allocation4 + $0x30] sm:$0xff]
    %v891 = vld [vmem:[#allocation4 + $0x38] sm:$0xff]
    %v892 = vld [vmem:[#allocation4 + $0x40] sm:$0xff]
    %v893 = vld [vmem:[#allocation4 + $0x48] sm:$0xff]
    %v894 = vld [vmem:[#allocation4 + $0x50] sm:$0xff]
    %v895 = vld [vmem:[#allocation4 + $0x58] sm:$0xff]
    %v896 = vld [vmem:[#allocation5] sm:$0xff]
    %v897 = vld [vmem:[#allocation5 + $0x8] sm:$0xff]
    %v898 = vld [vmem:[#allocation5 + $0x10] sm:$0xff]
    %v899 = vld [vmem:[#allocation5 + $0x18] sm:$0xff]
    %v900 = vld [vmem:[#allocation5 + $0x20] sm:$0xff]
    %v901 = vld [vmem:[#allocation5 + $0x28] sm:$0xff]
    %v902 = vld [vmem:[#allocation5 + $0x30] sm:$0xff]
    %v903 = vld [vmem:[#allocation5 + $0x38] sm:$0xff]
    %v904 = vld [vmem:[#allocation5 + $0x40] sm:$0xff]
    %v905 = vld [vmem:[#allocation5 + $0x48] sm:$0xff]
    %v906 = vld [vmem:[#allocation5 + $0x50] sm:$0xff]
    %v907 = vld [vmem:[#allocation5 + $0x58] sm:$0xff]
    %v908 = vld [vmem:[%s29] sm:$0xff]
    %v909 = vld [vmem:[%s29 + $0x8] sm:$0xff]
    %v910 = vld [vmem:[%s29 + $0x10] sm:$0xff]
    %v911 = vld [vmem:[%s29 + $0x18] sm:$0xff]
    %v912 = vld [vmem:[%s31] sm:$0xff]
    %v913 = vld [vmem:[%s31 + $0x8] sm:$0xff]
    %v914 = vld [vmem:[%s31 + $0x10] sm:$0xff]
    %v915 = vld [vmem:[%s31 + $0x18] sm:$0xff]
    %v917 = vsel %vm632, %v884, 0
    %v920 = vsel %vm632, %v885, 0
    %v923 = vsel %vm632, %v886, 0
    %v926 = vsel %vm632, %v887, 0
    %v929 = vsel %vm632, %v888, 0
    %v932 = vsel %vm632, %v889, 0
    %v935 = vsel %vm632, %v890, 0
    %v938 = vsel %vm632, %v891, 0
    %v941 = vsel %vm632, %v892, 0
    %v944 = vsel %vm632, %v893, 0
    %v947 = vsel %vm632, %v894, 0
    %v950 = vsel %vm632, %v895, 0
    %952 = vmatprep.subr.mxu0 0.0
    %953 = vmatpush1.msra.mxu0 %v912
    %954 = vmatprep.subr.mxu0 0.0
    %955 = vmatpush1.msra.mxu0 %v913
    %956 = vmatprep.subr.mxu0 0.0
    %957 = vmatpush1.msra.mxu0 %v914
    %958 = vmatprep.subr.mxu0 0.0
    %959 = vmatpush1.msra.mxu0 %v915
    %960 = vmatprep.subr.mxu0 0.0
    %961 = vmatpush1.msra.mxu0 0.0
    %962 = vmatprep.subr.mxu0 0.0
    %963 = vmatpush1.msra.mxu0 0.0
    %964 = vmatprep.subr.mxu0 0.0
    %965 = vmatpush1.msra.mxu0 0.0
    %966 = vmatprep.subr.mxu0 0.0
    %967 = vmatpush1.msra.mxu0 0.0
    %968 = vmatprep.subr.mxu0 0.0
    %969 = vmatpush1.msra.mxu0 0.0
    %970 = vmatprep.subr.mxu0 0.0
    %971 = vmatpush1.msra.mxu0 0.0
    %972 = vmatprep.subr.mxu0 0.0
    %973 = vmatpush1.msra.mxu0 0.0
    %974 = vmatprep.subr.mxu0 0.0
    %975 = vmatpush1.msra.mxu0 0.0
    %976 = vmatprep.subr.mxu0 0.0
    %977 = vmatpush1.msra.mxu0 0.0
    %978 = vmatprep.subr.mxu0 0.0
    %979 = vmatpush1.msra.mxu0 0.0
    %980 = vmatprep.subr.mxu0 0.0
    %981 = vmatpush1.msra.mxu0 0.0
    %982 = vmatprep.subr.mxu0 0.0
    %983 = vmatpush1.msra.mxu0 0.0
    %984 = vmatprep.subr.mxu0 0.0
    %985 = vmatpush1.msra.mxu0 0.0
    %986 = vmatprep.subr.mxu0 0.0
    %987 = vmatpush1.msra.mxu0 0.0
    %988 = vmatprep.subr.mxu0 0.0
    %989 = vmatpush1.msra.mxu0 0.0
    %990 = vmatprep.subr.mxu0 0.0
    %991 = vmatpush1.msra.mxu0 0.0
    %992 = vmatprep.subr.mxu0 0.0
    %993 = vmatpush1.msra.mxu0 0.0
    %994 = vmatprep.subr.mxu0 0.0
    %995 = vmatpush1.msra.mxu0 0.0
    %996 = vmatprep.subr.mxu0 0.0
    %997 = vmatpush1.msra.mxu0 0.0
    %998 = vmatprep.subr.mxu0 0.0
    %999 = vmatpush1.msra.mxu0 0.0
    %1000 = vmatprep.subr.mxu0 0.0
    %1001 = vmatpush1.msra.mxu0 0.0
    %1002 = vmatprep.subr.mxu0 0.0
    %1003 = vmatpush1.msra.mxu0 0.0
    %1004 = vmatprep.subr.mxu0 0.0
    %1005 = vmatpush1.msra.mxu0 0.0
    %1006 = vmatprep.subr.mxu0 0.0
    %1007 = vmatpush1.msra.mxu0 0.0
    %1008 = vmatprep.subr.mxu0 0.0
    %1009 = vmatpush1.msra.mxu0 0.0
    %1010 = vmatprep.subr.mxu0 0.0
    %1011 = vmatpush1.msra.mxu0 0.0
    %1012 = vmatprep.subr.mxu0 0.0
    %1013 = vmatpush1.msra.mxu0 0.0
    %1014 = vmatprep.subr.mxu0 0.0
    %1015 = vmatpush1.msra.mxu0 0.0
    %1016 = vmatprep.mubr.f32.mxu0 0.0
    %1017 = vmatmul.mubr.f32.gmra.mrb[0].mxu0 %v917
    %v1018 = vpop.f32.mrb[0].mxu0
    %v1019 = vadd.f32 0.0, %v1018
    %v1020 = vpop.f32.mrb[0].mxu0
    %1021 = vmatprep.mubr.f32.mxu0 0.0
    %1022 = vmatmul.mubr.f32.gmra.mrb[0].mxu0 %v920
    %v1023 = vpop.f32.mrb[0].mxu0
    %v1024 = vadd.f32 0.0, %v1023
    %v1025 = vpop.f32.mrb[0].mxu0
    %1026 = vmatprep.mubr.f32.mxu0 0.0
    %1027 = vmatmul.mubr.f32.gmra.mrb[0].mxu0 %v923
    %v1028 = vpop.f32.mrb[0].mxu0
    %v1029 = vadd.f32 0.0, %v1028
    %v1030 = vpop.f32.mrb[0].mxu0
    %1031 = vmatprep.mubr.f32.mxu0 0.0
    %1032 = vmatmul.mubr.f32.gmra.mrb[0].mxu0 %v926
    %v1033 = vpop.f32.mrb[0].mxu0
    %v1034 = vadd.f32 0.0, %v1033
    %v1035 = vpop.f32.mrb[0].mxu0
    %1036 = vmatprep.mubr.f32.mxu0 0.0
    %1037 = vmatmul.mubr.f32.gmra.mrb[0].mxu0 %v929
    %v1038 = vpop.f32.mrb[0].mxu0
    %v1039 = vadd.f32 0.0, %v1038
    %v1040 = vpop.f32.mrb[0].mxu0
    %1041 = vmatprep.mubr.f32.mxu0 0.0
    %1042 = vmatmul.mubr.f32.gmra.mrb[0].mxu0 %v932
    %v1043 = vpop.f32.mrb[0].mxu0
    %v1044 = vadd.f32 0.0, %v1043
    %v1045 = vpop.f32.mrb[0].mxu0
    %1046 = vmatprep.mubr.f32.mxu0 0.0
    %1047 = vmatmul.mubr.f32.gmra.mrb[0].mxu0 %v935
    %v1048 = vpop.f32.mrb[0].mxu0
    %v1049 = vadd.f32 0.0, %v1048
    %v1050 = vpop.f32.mrb[0].mxu0
    %1051 = vmatprep.mubr.f32.mxu0 0.0
    %1052 = vmatmul.mubr.f32.gmra.mrb[0].mxu0 %v938
    %v1053 = vpop.f32.mrb[0].mxu0
    %v1054 = vadd.f32 0.0, %v1053
    %v1055 = vpop.f32.mrb[0].mxu0
    %1056 = vmatprep.mubr.f32.mxu0 0.0
    %1057 = vmatmul.mubr.f32.gmra.mrb[0].mxu0 %v941
    %v1058 = vpop.f32.mrb[0].mxu0
    %v1059 = vadd.f32 0.0, %v1058
    %v1060 = vpop.f32.mrb[0].mxu0
    %1061 = vmatprep.mubr.f32.mxu0 0.0
    %1062 = vmatmul.mubr.f32.gmra.mrb[0].mxu0 %v944
    %v1063 = vpop.f32.mrb[0].mxu0
    %v1064 = vadd.f32 0.0, %v1063
    %v1065 = vpop.f32.mrb[0].mxu0
    %1066 = vmatprep.mubr.f32.mxu0 0.0
    %1067 = vmatmul.mubr.f32.gmra.mrb[0].mxu0 %v947
    %v1068 = vpop.f32.mrb[0].mxu0
    %v1069 = vadd.f32 0.0, %v1068
    %v1070 = vpop.f32.mrb[0].mxu0
    %1071 = vmatprep.mubr.f32.mxu0 0.0
    %1072 = vmatmul.mubr.f32.gmra.mrb[0].mxu0 %v950
    %v1073 = vpop.f32.mrb[0].mxu0
    %v1074 = vadd.f32 0.0, %v1073
    %v1075 = vpop.f32.mrb[0].mxu0
    %1076 = vdwg.mxu0
    %v1078 = vsel %vm632, %v896, 0
    %v1081 = vsel %vm632, %v897, 0
    %v1084 = vsel %vm632, %v898, 0
    %v1087 = vsel %vm632, %v899, 0
    %v1090 = vsel %vm632, %v900, 0
    %v1093 = vsel %vm632, %v901, 0
    %v1096 = vsel %vm632, %v902, 0
    %v1099 = vsel %vm632, %v903, 0
    %v1102 = vsel %vm632, %v904, 0
    %v1105 = vsel %vm632, %v905, 0
    %v1108 = vsel %vm632, %v906, 0
    %v1111 = vsel %vm632, %v907, 0
    %1113 = vmatprep.subr.mxu0 0.0
    %1114 = vmatpush1.msra.mxu0 %v908
    %1115 = vmatprep.subr.mxu0 0.0
    %1116 = vmatpush1.msra.mxu0 %v909
    %1117 = vmatprep.subr.mxu0 0.0
    %1118 = vmatpush1.msra.mxu0 %v910
    %1119 = vmatprep.subr.mxu0 0.0
    %1120 = vmatpush1.msra.mxu0 %v911
    %1121 = vmatprep.subr.mxu0 0.0
    %1122 = vmatpush1.msra.mxu0 0.0
    %1123 = vmatprep.subr.mxu0 0.0
    %1124 = vmatpush1.msra.mxu0 0.0
    %1125 = vmatprep.subr.mxu0 0.0
    %1126 = vmatpush1.msra.mxu0 0.0
    %1127 = vmatprep.subr.mxu0 0.0
    %1128 = vmatpush1.msra.mxu0 0.0
    %1129 = vmatprep.subr.mxu0 0.0
    %1130 = vmatpush1.msra.mxu0 0.0
    %1131 = vmatprep.subr.mxu0 0.0
    %1132 = vmatpush1.msra.mxu0 0.0
    %1133 = vmatprep.subr.mxu0 0.0
    %1134 = vmatpush1.msra.mxu0 0.0
    %1135 = vmatprep.subr.mxu0 0.0
    %1136 = vmatpush1.msra.mxu0 0.0
    %1137 = vmatprep.subr.mxu0 0.0
    %1138 = vmatpush1.msra.mxu0 0.0
    %1139 = vmatprep.subr.mxu0 0.0
    %1140 = vmatpush1.msra.mxu0 0.0
    %1141 = vmatprep.subr.mxu0 0.0
    %1142 = vmatpush1.msra.mxu0 0.0
    %1143 = vmatprep.subr.mxu0 0.0
    %1144 = vmatpush1.msra.mxu0 0.0
    %1145 = vmatprep.subr.mxu0 0.0
    %1146 = vmatpush1.msra.mxu0 0.0
    %1147 = vmatprep.subr.mxu0 0.0
    %1148 = vmatpush1.msra.mxu0 0.0
    %1149 = vmatprep.subr.mxu0 0.0
    %1150 = vmatpush1.msra.mxu0 0.0
    %1151 = vmatprep.subr.mxu0 0.0
    %1152 = vmatpush1.msra.mxu0 0.0
    %1153 = vmatprep.subr.mxu0 0.0
    %1154 = vmatpush1.msra.mxu0 0.0
    %1155 = vmatprep.subr.mxu0 0.0
    %1156 = vmatpush1.msra.mxu0 0.0
    %1157 = vmatprep.subr.mxu0 0.0
    %1158 = vmatpush1.msra.mxu0 0.0
    %1159 = vmatprep.subr.mxu0 0.0
    %1160 = vmatpush1.msra.mxu0 0.0
    %1161 = vmatprep.subr.mxu0 0.0
    %1162 = vmatpush1.msra.mxu0 0.0
    %1163 = vmatprep.subr.mxu0 0.0
    %1164 = vmatpush1.msra.mxu0 0.0
    %1165 = vmatprep.subr.mxu0 0.0
    %1166 = vmatpush1.msra.mxu0 0.0
    %1167 = vmatprep.subr.mxu0 0.0
    %1168 = vmatpush1.msra.mxu0 0.0
    %1169 = vmatprep.subr.mxu0 0.0
    %1170 = vmatpush1.msra.mxu0 0.0
    %1171 = vmatprep.subr.mxu0 0.0
    %1172 = vmatpush1.msra.mxu0 0.0
    %1173 = vmatprep.subr.mxu0 0.0
    %1174 = vmatpush1.msra.mxu0 0.0
    %1175 = vmatprep.subr.mxu0 0.0
    %1176 = vmatpush1.msra.mxu0 0.0
    %1177 = vmatprep.mubr.f32.mxu0 0.0
    %1178 = vmatmul.mubr.f32.gmra.mrb[0].mxu0 %v1078
    %v1179 = vpop.f32.mrb[0].mxu0
    %v1180 = vadd.f32 %v1019, %v1179
    %v1181 = vpop.f32.mrb[0].mxu0
    %1182 = vmatprep.mubr.f32.mxu0 0.0
    %1183 = vmatmul.mubr.f32.gmra.mrb[0].mxu0 %v1081
    %v1184 = vpop.f32.mrb[0].mxu0
    %v1185 = vadd.f32 %v1024, %v1184
    %v1186 = vpop.f32.mrb[0].mxu0
    %1187 = vmatprep.mubr.f32.mxu0 0.0
    %1188 = vmatmul.mubr.f32.gmra.mrb[0].mxu0 %v1084
    %v1189 = vpop.f32.mrb[0].mxu0
    %v1190 = vadd.f32 %v1029, %v1189
    %v1191 = vpop.f32.mrb[0].mxu0
    %1192 = vmatprep.mubr.f32.mxu0 0.0
    %1193 = vmatmul.mubr.f32.gmra.mrb[0].mxu0 %v1087
    %v1194 = vpop.f32.mrb[0].mxu0
    %v1195 = vadd.f32 %v1034, %v1194
    %v1196 = vpop.f32.mrb[0].mxu0
    %1197 = vmatprep.mubr.f32.mxu0 0.0
    %1198 = vmatmul.mubr.f32.gmra.mrb[0].mxu0 %v1090
    %v1199 = vpop.f32.mrb[0].mxu0
    %v1200 = vadd.f32 %v1039, %v1199
    %v1201 = vpop.f32.mrb[0].mxu0
    %1202 = vmatprep.mubr.f32.mxu0 0.0
    %1203 = vmatmul.mubr.f32.gmra.mrb[0].mxu0 %v1093
    %v1204 = vpop.f32.mrb[0].mxu0
    %v1205 = vadd.f32 %v1044, %v1204
    %v1206 = vpop.f32.mrb[0].mxu0
    %1207 = vmatprep.mubr.f32.mxu0 0.0
    %1208 = vmatmul.mubr.f32.gmra.mrb[0].mxu0 %v1096
    %v1209 = vpop.f32.mrb[0].mxu0
    %v1210 = vadd.f32 %v1049, %v1209
    %v1211 = vpop.f32.mrb[0].mxu0
    %1212 = vmatprep.mubr.f32.mxu0 0.0
    %1213 = vmatmul.mubr.f32.gmra.mrb[0].mxu0 %v1099
    %v1214 = vpop.f32.mrb[0].mxu0
    %v1215 = vadd.f32 %v1054, %v1214
    %v1216 = vpop.f32.mrb[0].mxu0
    %1217 = vmatprep.mubr.f32.mxu0 0.0
    %1218 = vmatmul.mubr.f32.gmra.mrb[0].mxu0 %v1102
    %v1219 = vpop.f32.mrb[0].mxu0
    %v1220 = vadd.f32 %v1059, %v1219
    %v1221 = vpop.f32.mrb[0].mxu0
    %1222 = vmatprep.mubr.f32.mxu0 0.0
    %1223 = vmatmul.mubr.f32.gmra.mrb[0].mxu0 %v1105
    %v1224 = vpop.f32.mrb[0].mxu0
    %v1225 = vadd.f32 %v1064, %v1224
    %v1226 = vpop.f32.mrb[0].mxu0
    %1227 = vmatprep.mubr.f32.mxu0 0.0
    %1228 = vmatmul.mubr.f32.gmra.mrb[0].mxu0 %v1108
    %v1229 = vpop.f32.mrb[0].mxu0
    %v1230 = vadd.f32 %v1069, %v1229
    %v1231 = vpop.f32.mrb[0].mxu0
    %1232 = vmatprep.mubr.f32.mxu0 0.0
    %1233 = vmatmul.mubr.f32.gmra.mrb[0].mxu0 %v1111
    %v1234 = vpop.f32.mrb[0].mxu0
    %v1235 = vadd.f32 %v1074, %v1234
    %v1236 = vpop.f32.mrb[0].mxu0
    %1237 = vdwg.mxu0
    %v1238 = vadd.f32 %v1180, %v735
    %v1239 = vadd.f32 %v1185, %v736
    %v1240 = vadd.f32 %v1190, %v737
    %v1241 = vadd.f32 %v1195, %v738
    %v1242 = vadd.f32 %v1200, %v739
    %v1243 = vadd.f32 %v1205, %v740
    %v1244 = vadd.f32 %v1210, %v741
    %v1245 = vadd.f32 %v1215, %v742
    %v1246 = vadd.f32 %v1220, %v743
    %v1247 = vadd.f32 %v1225, %v744
    %v1248 = vadd.f32 %v1230, %v745
    %v1249 = vadd.f32 %v1235, %v746
    %v1250 = vmax.f32 %v1238, 0.0
    %v1251 = vmax.f32 %v1239, 0.0
    %v1252 = vmax.f32 %v1240, 0.0
    %v1253 = vmax.f32 %v1241, 0.0
    %v1254 = vmax.f32 %v1242, 0.0
    %v1255 = vmax.f32 %v1243, 0.0
    %v1256 = vmax.f32 %v1244, 0.0
    %v1257 = vmax.f32 %v1245, 0.0
    %v1258 = vmax.f32 %v1246, 0.0
    %v1259 = vmax.f32 %v1247, 0.0
    %v1260 = vmax.f32 %v1248, 0.0
    %v1261 = vmax.f32 %v1249, 0.0
    %v1262 = vld [vmem:[%s37] sm:$0xff]
    %v1263 = vld [vmem:[%s37 + $0x8] sm:$0xff]
    %v1264 = vld [vmem:[%s39] sm:$0x1]
    %v1266 = vlaneseq
    %v1267 = vshrl.u32 %v1266, 7
    %v1268 = vsub.s32 0, %v1267
    %v1269 = vrot.slane %v1264, %v1268
    %v1272 = vsel %vm349, %v1250, 0
    %v1275 = vsel %vm349, %v1251, 0
    %v1278 = vsel %vm349, %v1252, 0
    %v1281 = vsel %vm349, %v1253, 0
    %v1284 = vsel %vm349, %v1254, 0
    %v1287 = vsel %vm349, %v1255, 0
    %v1290 = vsel %vm349, %v1256, 0
    %v1293 = vsel %vm349, %v1257, 0
    %v1296 = vsel %vm349, %v1258, 0
    %v1299 = vsel %vm349, %v1259, 0
    %v1302 = vsel %vm349, %v1260, 0
    %v1305 = vsel %vm349, %v1261, 0
    %1307 = vmatprep.subr.mxu0 0.0
    %1308 = vmatpush1.msra.mxu0 %v1262
    %1309 = vmatprep.subr.mxu0 0.0
    %1310 = vmatpush1.msra.mxu0 %v1263
    %1311 = vmatprep.subr.mxu0 0.0
    %1312 = vmatpush1.msra.mxu0 0.0
    %1313 = vmatprep.subr.mxu0 0.0
    %1314 = vmatpush1.msra.mxu0 0.0
    %1315 = vmatprep.subr.mxu0 0.0
    %1316 = vmatpush1.msra.mxu0 0.0
    %1317 = vmatprep.subr.mxu0 0.0
    %1318 = vmatpush1.msra.mxu0 0.0
    %1319 = vmatprep.subr.mxu0 0.0
    %1320 = vmatpush1.msra.mxu0 0.0
    %1321 = vmatprep.subr.mxu0 0.0
    %1322 = vmatpush1.msra.mxu0 0.0
    %1323 = vmatprep.subr.mxu0 0.0
    %1324 = vmatpush1.msra.mxu0 0.0
    %1325 = vmatprep.subr.mxu0 0.0
    %1326 = vmatpush1.msra.mxu0 0.0
    %1327 = vmatprep.subr.mxu0 0.0
    %1328 = vmatpush1.msra.mxu0 0.0
    %1329 = vmatprep.subr.mxu0 0.0
    %1330 = vmatpush1.msra.mxu0 0.0
    %1331 = vmatprep.subr.mxu0 0.0
    %1332 = vmatpush1.msra.mxu0 0.0
    %1333 = vmatprep.subr.mxu0 0.0
    %1334 = vmatpush1.msra.mxu0 0.0
    %1335 = vmatprep.subr.mxu0 0.0
    %1336 = vmatpush1.msra.mxu0 0.0
    %1337 = vmatprep.subr.mxu0 0.0
    %1338 = vmatpush1.msra.mxu0 0.0
    %1339 = vmatprep.subr.mxu0 0.0
    %1340 = vmatpush1.msra.mxu0 0.0
    %1341 = vmatprep.subr.mxu0 0.0
    %1342 = vmatpush1.msra.mxu0 0.0
    %1343 = vmatprep.subr.mxu0 0.0
    %1344 = vmatpush1.msra.mxu0 0.0
    %1345 = vmatprep.subr.mxu0 0.0
    %1346 = vmatpush1.msra.mxu0 0.0
    %1347 = vmatprep.subr.mxu0 0.0
    %1348 = vmatpush1.msra.mxu0 0.0
    %1349 = vmatprep.subr.mxu0 0.0
    %1350 = vmatpush1.msra.mxu0 0.0
    %1351 = vmatprep.subr.mxu0 0.0
    %1352 = vmatpush1.msra.mxu0 0.0
    %1353 = vmatprep.subr.mxu0 0.0
    %1354 = vmatpush1.msra.mxu0 0.0
    %1355 = vmatprep.subr.mxu0 0.0
    %1356 = vmatpush1.msra.mxu0 0.0
    %1357 = vmatprep.subr.mxu0 0.0
    %1358 = vmatpush1.msra.mxu0 0.0
    %1359 = vmatprep.subr.mxu0 0.0
    %1360 = vmatpush1.msra.mxu0 0.0
    %1361 = vmatprep.subr.mxu0 0.0
    %1362 = vmatpush1.msra.mxu0 0.0
    %1363 = vmatprep.subr.mxu0 0.0
    %1364 = vmatpush1.msra.mxu0 0.0
    %1365 = vmatprep.subr.mxu0 0.0
    %1366 = vmatpush1.msra.mxu0 0.0
    %1367 = vmatprep.subr.mxu0 0.0
    %1368 = vmatpush1.msra.mxu0 0.0
    %1369 = vmatprep.subr.mxu0 0.0
    %1370 = vmatpush1.msra.mxu0 0.0
    %1371 = vmatprep.mubr.f32.mxu0 0.0
    %1372 = vmatmul.mubr.f32.gmra.mrb[0].mxu0 %v1272
    %v1373 = vpop.f32.mrb[0].mxu0
    %v1374 = vadd.f32 %v1269, %v1373
    %v1375 = vpop.f32.mrb[0].mxu0
    %1376 = vmatprep.mubr.f32.mxu0 0.0
    %1377 = vmatmul.mubr.f32.gmra.mrb[0].mxu0 %v1275
    %v1378 = vpop.f32.mrb[0].mxu0
    %v1379 = vadd.f32 %v1269, %v1378
    %v1380 = vpop.f32.mrb[0].mxu0
    %1381 = vmatprep.mubr.f32.mxu0 0.0
    %1382 = vmatmul.mubr.f32.gmra.mrb[0].mxu0 %v1278
    %v1383 = vpop.f32.mrb[0].mxu0
    %v1384 = vadd.f32 %v1269, %v1383
    %v1385 = vpop.f32.mrb[0].mxu0
    %1386 = vmatprep.mubr.f32.mxu0 0.0
    %1387 = vmatmul.mubr.f32.gmra.mrb[0].mxu0 %v1281
    %v1388 = vpop.f32.mrb[0].mxu0
    %v1389 = vadd.f32 %v1269, %v1388
    %v1390 = vpop.f32.mrb[0].mxu0
    %1391 = vmatprep.mubr.f32.mxu0 0.0
    %1392 = vmatmul.mubr.f32.gmra.mrb[0].mxu0 %v1284
    %v1393 = vpop.f32.mrb[0].mxu0
    %v1394 = vadd.f32 %v1269, %v1393
    %v1395 = vpop.f32.mrb[0].mxu0
    %1396 = vmatprep.mubr.f32.mxu0 0.0
    %1397 = vmatmul.mubr.f32.gmra.mrb[0].mxu0 %v1287
    %v1398 = vpop.f32.mrb[0].mxu0
    %v1399 = vadd.f32 %v1269, %v1398
    %v1400 = vpop.f32.mrb[0].mxu0
    %1401 = vmatprep.mubr.f32.mxu0 0.0
    %1402 = vmatmul.mubr.f32.gmra.mrb[0].mxu0 %v1290
    %v1403 = vpop.f32.mrb[0].mxu0
    %v1404 = vadd.f32 %v1269, %v1403
    %v1405 = vpop.f32.mrb[0].mxu0
    %1406 = vmatprep.mubr.f32.mxu0 0.0
    %1407 = vmatmul.mubr.f32.gmra.mrb[0].mxu0 %v1293
    %v1408 = vpop.f32.mrb[0].mxu0
    %v1409 = vadd.f32 %v1269, %v1408
    %v1410 = vpop.f32.mrb[0].mxu0
    %1411 = vmatprep.mubr.f32.mxu0 0.0
    %1412 = vmatmul.mubr.f32.gmra.mrb[0].mxu0 %v1296
    %v1413 = vpop.f32.mrb[0].mxu0
    %v1414 = vadd.f32 %v1269, %v1413
    %v1415 = vpop.f32.mrb[0].mxu0
    %1416 = vmatprep.mubr.f32.mxu0 0.0
    %1417 = vmatmul.mubr.f32.gmra.mrb[0].mxu0 %v1299
    %v1418 = vpop.f32.mrb[0].mxu0
    %v1419 = vadd.f32 %v1269, %v1418
    %v1420 = vpop.f32.mrb[0].mxu0
    %1421 = vmatprep.mubr.f32.mxu0 0.0
    %1422 = vmatmul.mubr.f32.gmra.mrb[0].mxu0 %v1302
    %v1423 = vpop.f32.mrb[0].mxu0
    %v1424 = vadd.f32 %v1269, %v1423
    %v1425 = vpop.f32.mrb[0].mxu0
    %1426 = vmatprep.mubr.f32.mxu0 0.0
    %1427 = vmatmul.mubr.f32.gmra.mrb[0].mxu0 %v1305
    %v1428 = vpop.f32.mrb[0].mxu0
    %v1429 = vadd.f32 %v1269, %v1428
    %v1430 = vpop.f32.mrb[0].mxu0
    %1431 = vdwg.mxu0
    %v1432 = vmax.f32 %v1374, 0.0
    %v1433 = vmax.f32 %v1379, 0.0
    %v1434 = vmax.f32 %v1384, 0.0
    %v1435 = vmax.f32 %v1389, 0.0
    %v1436 = vmax.f32 %v1394, 0.0
    %v1437 = vmax.f32 %v1399, 0.0
    %v1438 = vmax.f32 %v1404, 0.0
    %v1439 = vmax.f32 %v1409, 0.0
    %v1440 = vmax.f32 %v1414, 0.0
    %v1441 = vmax.f32 %v1419, 0.0
    %v1442 = vmax.f32 %v1424, 0.0
    %v1443 = vmax.f32 %v1429, 0.0
    %v1444 = vld [vmem:[%s41] sm:$0x1]
    %v1446 = vlaneseq
    %v1447 = vshrl.u32 %v1446, 7
    %v1448 = vsub.s32 0, %v1447
    %v1449 = vrot.slane %v1444, %v1448
    %v1451 = vmul.f32 %v1432, %v1449
    %v1452 = vmul.f32 %v1433, %v1449
    %v1453 = vmul.f32 %v1434, %v1449
    %v1454 = vmul.f32 %v1435, %v1449
    %v1455 = vmul.f32 %v1436, %v1449
    %v1456 = vmul.f32 %v1437, %v1449
    %v1457 = vmul.f32 %v1438, %v1449
    %v1458 = vmul.f32 %v1439, %v1449
    %v1459 = vmul.f32 %v1440, %v1449
    %v1460 = vmul.f32 %v1441, %v1449
    %v1461 = vmul.f32 %v1442, %v1449
    %v1462 = vmul.f32 %v1443, %v1449
    %v1463 = vsel %vm349, %v1451, 0.0
    %1464 = vadd.xlane.f32.xlu0 %v1463
    %v1465 = vpop.xlane.xlu0 %1464
    %v1466 = vsel %vm349, %v1452, 0.0
    %1467 = vadd.xlane.f32.xlu0 %v1466
    %v1468 = vpop.xlane.xlu0 %1467
    %v1469 = vsel %vm349, %v1453, 0.0
    %1470 = vadd.xlane.f32.xlu0 %v1469
    %v1471 = vpop.xlane.xlu0 %1470
    %v1472 = vsel %vm349, %v1454, 0.0
    %1473 = vadd.xlane.f32.xlu0 %v1472
    %v1474 = vpop.xlane.xlu0 %1473
    %v1475 = vsel %vm349, %v1455, 0.0
    %1476 = vadd.xlane.f32.xlu0 %v1475
    %v1477 = vpop.xlane.xlu0 %1476
    %v1478 = vsel %vm349, %v1456, 0.0
    %1479 = vadd.xlane.f32.xlu0 %v1478
    %v1480 = vpop.xlane.xlu0 %1479
    %v1481 = vsel %vm349, %v1457, 0.0
    %1482 = vadd.xlane.f32.xlu0 %v1481
    %v1483 = vpop.xlane.xlu0 %1482
    %v1484 = vsel %vm349, %v1458, 0.0
    %1485 = vadd.xlane.f32.xlu0 %v1484
    %v1486 = vpop.xlane.xlu0 %1485
    %v1487 = vsel %vm349, %v1459, 0.0
    %1488 = vadd.xlane.f32.xlu0 %v1487
    %v1489 = vpop.xlane.xlu0 %1488
    %v1490 = vsel %vm349, %v1460, 0.0
    %1491 = vadd.xlane.f32.xlu0 %v1490
    %v1492 = vpop.xlane.xlu0 %1491
    %v1493 = vsel %vm349, %v1461, 0.0
    %1494 = vadd.xlane.f32.xlu0 %v1493
    %v1495 = vpop.xlane.xlu0 %1494
    %v1496 = vsel %vm349, %v1462, 0.0
    %1497 = vadd.xlane.f32.xlu0 %v1496
    %v1498 = vpop.xlane.xlu0 %1497
    %v1499 = vld [vmem:[#allocation9] sm:$0x1]
    %v1501 = vlaneseq
    %v1502 = vshrl.u32 %v1501, 7
    %v1503 = vsub.s32 0, %v1502
    %v1504 = vrot.slane %v1499, %v1503
    %v1506 = vadd.f32 %v1465, %v1504
    %v1507 = vadd.f32 %v1468, %v1504
    %v1508 = vadd.f32 %v1471, %v1504
    %v1509 = vadd.f32 %v1474, %v1504
    %v1510 = vadd.f32 %v1477, %v1504
    %v1511 = vadd.f32 %v1480, %v1504
    %v1512 = vadd.f32 %v1483, %v1504
    %v1513 = vadd.f32 %v1486, %v1504
    %v1514 = vadd.f32 %v1489, %v1504
    %v1515 = vadd.f32 %v1492, %v1504
    %v1516 = vadd.f32 %v1495, %v1504
    %v1517 = vadd.f32 %v1498, %v1504
    %v1518 = vxor.u32 %v1506, 2147483648
    %v1519 = vxor.u32 %v1507, 2147483648
    %v1520 = vxor.u32 %v1508, 2147483648
    %v1521 = vxor.u32 %v1509, 2147483648
    %v1522 = vxor.u32 %v1510, 2147483648
    %v1523 = vxor.u32 %v1511, 2147483648
    %v1524 = vxor.u32 %v1512, 2147483648
    %v1525 = vxor.u32 %v1513, 2147483648
    %v1526 = vxor.u32 %v1514, 2147483648
    %v1527 = vxor.u32 %v1515, 2147483648
    %v1528 = vxor.u32 %v1516, 2147483648
    %v1529 = vxor.u32 %v1517, 2147483648
    %v1530 = vmul.f32 %v1518, 1.442695
    %v1531 = vpow.pop %v1530
    %v1532 = vmul.f32 %v1519, 1.442695
    %v1533 = vpow.pop %v1532
    %v1534 = vmul.f32 %v1520, 1.442695
    %v1535 = vpow.pop %v1534
    %v1536 = vmul.f32 %v1521, 1.442695
    %v1537 = vpow.pop %v1536
    %v1538 = vmul.f32 %v1522, 1.442695
    %v1539 = vpow.pop %v1538
    %v1540 = vmul.f32 %v1523, 1.442695
    %v1541 = vpow.pop %v1540
    %v1542 = vmul.f32 %v1524, 1.442695
    %v1543 = vpow.pop %v1542
    %v1544 = vmul.f32 %v1525, 1.442695
    %v1545 = vpow.pop %v1544
    %v1546 = vmul.f32 %v1526, 1.442695
    %v1547 = vpow.pop %v1546
    %v1548 = vmul.f32 %v1527, 1.442695
    %v1549 = vpow.pop %v1548
    %v1550 = vmul.f32 %v1528, 1.442695
    %v1551 = vpow.pop %v1550
    %v1552 = vmul.f32 %v1529, 1.442695
    %v1553 = vpow.pop %v1552
    %v1554 = vadd.f32 %v1531, 1.0
    %v1555 = vadd.f32 %v1533, 1.0
    %v1556 = vadd.f32 %v1535, 1.0
    %v1557 = vadd.f32 %v1537, 1.0
    %v1558 = vadd.f32 %v1539, 1.0
    %v1559 = vadd.f32 %v1541, 1.0
    %v1560 = vadd.f32 %v1543, 1.0
    %v1561 = vadd.f32 %v1545, 1.0
    %v1562 = vadd.f32 %v1547, 1.0
    %v1563 = vadd.f32 %v1549, 1.0
    %v1564 = vadd.f32 %v1551, 1.0
    %v1565 = vadd.f32 %v1553, 1.0
    %v1566 = vrcp.pop %v1554
    %v1567 = vmul.f32 1.0, %v1566
    %v1568 = vrcp.pop %v1555
    %v1569 = vmul.f32 1.0, %v1568
    %v1570 = vrcp.pop %v1556
    %v1571 = vmul.f32 1.0, %v1570
    %v1572 = vrcp.pop %v1557
    %v1573 = vmul.f32 1.0, %v1572
    %v1574 = vrcp.pop %v1558
    %v1575 = vmul.f32 1.0, %v1574
    %v1576 = vrcp.pop %v1559
    %v1577 = vmul.f32 1.0, %v1576
    %v1578 = vrcp.pop %v1560
    %v1579 = vmul.f32 1.0, %v1578
    %v1580 = vrcp.pop %v1561
    %v1581 = vmul.f32 1.0, %v1580
    %v1582 = vrcp.pop %v1562
    %v1583 = vmul.f32 1.0, %v1582
    %v1584 = vrcp.pop %v1563
    %v1585 = vmul.f32 1.0, %v1584
    %v1586 = vrcp.pop %v1564
    %v1587 = vmul.f32 1.0, %v1586
    %v1588 = vrcp.pop %v1565
    %v1589 = vmul.f32 1.0, %v1588
    %v1590 = vmul.f32 %v1567, %v747
    %v1591 = vmul.f32 %v1569, %v748
    %v1592 = vmul.f32 %v1571, %v749
    %v1593 = vmul.f32 %v1573, %v750
    %v1594 = vmul.f32 %v1575, %v751
    %v1595 = vmul.f32 %v1577, %v752
    %v1596 = vmul.f32 %v1579, %v753
    %v1597 = vmul.f32 %v1581, %v754
    %v1598 = vmul.f32 %v1583, %v755
    %v1599 = vmul.f32 %v1585, %v756
    %v1600 = vmul.f32 %v1587, %v757
    %v1601 = vmul.f32 %v1589, %v758
    %1603 = vset.pattern.permute.xlu0 0
    %1604 = vperm.xlu0 %1603, %v1590
    %v1605 = vpop.permute.xlu0 %1604
    %1608 = vset.pattern.permute.xlu0 0
    %1609 = vperm.xlu0 %1608, %v1591
    %v1610 = vpop.permute.xlu0 %1609
    %1613 = vset.pattern.permute.xlu0 0
    %1614 = vperm.xlu0 %1613, %v1592
    %v1615 = vpop.permute.xlu0 %1614
    %1618 = vset.pattern.permute.xlu0 0
    %1619 = vperm.xlu0 %1618, %v1593
    %v1620 = vpop.permute.xlu0 %1619
    %1623 = vset.pattern.permute.xlu0 0
    %1624 = vperm.xlu0 %1623, %v1594
    %v1625 = vpop.permute.xlu0 %1624
    %1628 = vset.pattern.permute.xlu0 0
    %1629 = vperm.xlu0 %1628, %v1595
    %v1630 = vpop.permute.xlu0 %1629
    %1633 = vset.pattern.permute.xlu0 0
    %1634 = vperm.xlu0 %1633, %v1596
    %v1635 = vpop.permute.xlu0 %1634
    %1638 = vset.pattern.permute.xlu0 0
    %1639 = vperm.xlu0 %1638, %v1597
    %v1640 = vpop.permute.xlu0 %1639
    %1643 = vset.pattern.permute.xlu0 0
    %1644 = vperm.xlu0 %1643, %v1598
    %v1645 = vpop.permute.xlu0 %1644
    %1648 = vset.pattern.permute.xlu0 0
    %1649 = vperm.xlu0 %1648, %v1599
    %v1650 = vpop.permute.xlu0 %1649
    %1653 = vset.pattern.permute.xlu0 0
    %1654 = vperm.xlu0 %1653, %v1600
    %v1655 = vpop.permute.xlu0 %1654
    %1658 = vset.pattern.permute.xlu0 0
    %1659 = vperm.xlu0 %1658, %v1601
    %v1660 = vpop.permute.xlu0 %1659
    %v1662 = vmul.f32 %v1605, %v884
    %v1663 = vmul.f32 %v1610, %v885
    %v1664 = vmul.f32 %v1615, %v886
    %v1665 = vmul.f32 %v1620, %v887
    %v1666 = vmul.f32 %v1625, %v888
    %v1667 = vmul.f32 %v1630, %v889
    %v1668 = vmul.f32 %v1635, %v890
    %v1669 = vmul.f32 %v1640, %v891
    %v1670 = vmul.f32 %v1645, %v892
    %v1671 = vmul.f32 %v1650, %v893
    %v1672 = vmul.f32 %v1655, %v894
    %v1673 = vmul.f32 %v1660, %v895
    %1674 = vst.msk [vmem:[#allocation4] sm:$0xff] %vm632, %v1662
    %1675 = vst.msk [vmem:[#allocation4 + $0x8] sm:$0xff] %vm632, %v1663
    %1676 = vst.msk [vmem:[#allocation4 + $0x10] sm:$0xff] %vm632, %v1664
    %1677 = vst.msk [vmem:[#allocation4 + $0x18] sm:$0xff] %vm632, %v1665
    %1678 = vst.msk [vmem:[#allocation4 + $0x20] sm:$0xff] %vm632, %v1666
    %1679 = vst.msk [vmem:[#allocation4 + $0x28] sm:$0xff] %vm632, %v1667
    %1680 = vst.msk [vmem:[#allocation4 + $0x30] sm:$0xff] %vm632, %v1668
    %1681 = vst.msk [vmem:[#allocation4 + $0x38] sm:$0xff] %vm632, %v1669
    %1682 = vst.msk [vmem:[#allocation4 + $0x40] sm:$0xff] %vm632, %v1670
    %1683 = vst.msk [vmem:[#allocation4 + $0x48] sm:$0xff] %vm632, %v1671
    %1684 = vst.msk [vmem:[#allocation4 + $0x50] sm:$0xff] %vm632, %v1672
    %1685 = vst.msk [vmem:[#allocation4 + $0x58] sm:$0xff] %vm632, %v1673
    %1686 = vst.msk [vmem:[#allocation3] sm:$0xff] %vm632, 0.0
    %1687 = vst.msk [vmem:[#allocation3 + $0x8] sm:$0xff] %vm632, 0.0
    %1688 = vst.msk [vmem:[#allocation3 + $0x10] sm:$0xff] %vm632, 0.0
    %1689 = vst.msk [vmem:[#allocation3 + $0x18] sm:$0xff] %vm632, 0.0
    loop: start=0, step=1, limit=96
    $region189: #{tpu_custom_call.1} parent=1 // loop_pre_header
      _
    $region190: #{tpu_custom_call.1} parent=1 // loop_header
      %s1691 = sphi 0, %s1695
      %p1692 = scmp.ge.s32.totalorder %s1691, 96
    $region191: #{tpu_custom_call.1} parent=1 // loop_header_branch
      %1694 = sbr.rel (%p1692) target = $region195
    $region192: #{tpu_custom_call.1} parent=1 // loop_body
      %s1696 = sld [smem:[#allocation8 + %s1691]]
      %s1697 = scalar_lea.vmem [#allocation3], %s1696
      %v1698 = vld [vmem:[%s1697] sm:$0x1]
      %s1699 = scalar_lea.vmem [#allocation4], %s1691
      %v1700 = vld [vmem:[%s1699] sm:$0x1]
      %v1701 = vadd.f32 %v1698, %v1700
      %vm1702 = vcmask 253952
      %1703 = vst.msk [vmem:[%s1697] sm:$0x1] %vm1702, %v1701
    $region193: #{tpu_custom_call.1} parent=1 // loop_footer
      %s1695 = sadd.s32 1, %s1691
    $region194: #{tpu_custom_call.1} parent=1 // loop_footer_branch
      %1690 = sbr.rel target = $region190
    $region195: #{tpu_custom_call.1} parent=1 // loop_exit
      _
    %v1704 = vld [vmem:[#allocation3] sm:$0xff]
    %v1705 = vld [vmem:[#allocation3 + $0x8] sm:$0xff]
    %v1706 = vld [vmem:[#allocation3 + $0x10] sm:$0xff]
    %v1707 = vld [vmem:[#allocation3 + $0x18] sm:$0xff]
    %v1708 = vld [vmem:[#allocation2] sm:$0xff]
    %v1709 = vld [vmem:[#allocation2 + $0x8] sm:$0xff]
    %v1710 = vld [vmem:[#allocation2 + $0x10] sm:$0xff]
    %v1711 = vld [vmem:[#allocation2 + $0x18] sm:$0xff]
    %v1712 = vld [vmem:[%s45] sm:$0xff]
    %v1713 = vld [vmem:[%s45 + $0x8] sm:$0xff]
    %v1714 = vld [vmem:[%s45 + $0x10] sm:$0xff]
    %v1715 = vld [vmem:[%s45 + $0x18] sm:$0xff]
    %v1716 = vld [vmem:[%s47] sm:$0xff]
    %v1717 = vld [vmem:[%s47 + $0x8] sm:$0xff]
    %v1718 = vld [vmem:[%s47 + $0x10] sm:$0xff]
    %v1719 = vld [vmem:[%s47 + $0x18] sm:$0xff]
    %v1721 = vsel %vm632, %v1704, 0
    %v1724 = vsel %vm632, %v1705, 0
    %v1727 = vsel %vm632, %v1706, 0
    %v1730 = vsel %vm632, %v1707, 0
    %1732 = vmatprep.subr.mxu0 0.0
    %1733 = vmatpush1.msra.mxu0 %v1716
    %1734 = vmatprep.subr.mxu0 0.0
    %1735 = vmatpush1.msra.mxu0 %v1717
    %1736 = vmatprep.subr.mxu0 0.0
    %1737 = vmatpush1.msra.mxu0 %v1718
    %1738 = vmatprep.subr.mxu0 0.0
    %1739 = vmatpush1.msra.mxu0 %v1719
    %1740 = vmatprep.subr.mxu0 0.0
    %1741 = vmatpush1.msra.mxu0 0.0
    %1742 = vmatprep.subr.mxu0 0.0
    %1743 = vmatpush1.msra.mxu0 0.0
    %1744 = vmatprep.subr.mxu0 0.0
    %1745 = vmatpush1.msra.mxu0 0.0
    %1746 = vmatprep.subr.mxu0 0.0
    %1747 = vmatpush1.msra.mxu0 0.0
    %1748 = vmatprep.subr.mxu0 0.0
    %1749 = vmatpush1.msra.mxu0 0.0
    %1750 = vmatprep.subr.mxu0 0.0
    %1751 = vmatpush1.msra.mxu0 0.0
    %1752 = vmatprep.subr.mxu0 0.0
    %1753 = vmatpush1.msra.mxu0 0.0
    %1754 = vmatprep.subr.mxu0 0.0
    %1755 = vmatpush1.msra.mxu0 0.0
    %1756 = vmatprep.subr.mxu0 0.0
    %1757 = vmatpush1.msra.mxu0 0.0
    %1758 = vmatprep.subr.mxu0 0.0
    %1759 = vmatpush1.msra.mxu0 0.0
    %1760 = vmatprep.subr.mxu0 0.0
    %1761 = vmatpush1.msra.mxu0 0.0
    %1762 = vmatprep.subr.mxu0 0.0
    %1763 = vmatpush1.msra.mxu0 0.0
    %1764 = vmatprep.subr.mxu0 0.0
    %1765 = vmatpush1.msra.mxu0 0.0
    %1766 = vmatprep.subr.mxu0 0.0
    %1767 = vmatpush1.msra.mxu0 0.0
    %1768 = vmatprep.subr.mxu0 0.0
    %1769 = vmatpush1.msra.mxu0 0.0
    %1770 = vmatprep.subr.mxu0 0.0
    %1771 = vmatpush1.msra.mxu0 0.0
    %1772 = vmatprep.subr.mxu0 0.0
    %1773 = vmatpush1.msra.mxu0 0.0
    %1774 = vmatprep.subr.mxu0 0.0
    %1775 = vmatpush1.msra.mxu0 0.0
    %1776 = vmatprep.subr.mxu0 0.0
    %1777 = vmatpush1.msra.mxu0 0.0
    %1778 = vmatprep.subr.mxu0 0.0
    %1779 = vmatpush1.msra.mxu0 0.0
    %1780 = vmatprep.subr.mxu0 0.0
    %1781 = vmatpush1.msra.mxu0 0.0
    %1782 = vmatprep.subr.mxu0 0.0
    %1783 = vmatpush1.msra.mxu0 0.0
    %1784 = vmatprep.subr.mxu0 0.0
    %1785 = vmatpush1.msra.mxu0 0.0
    %1786 = vmatprep.subr.mxu0 0.0
    %1787 = vmatpush1.msra.mxu0 0.0
    %1788 = vmatprep.subr.mxu0 0.0
    %1789 = vmatpush1.msra.mxu0 0.0
    %1790 = vmatprep.subr.mxu0 0.0
    %1791 = vmatpush1.msra.mxu0 0.0
    %1792 = vmatprep.subr.mxu0 0.0
    %1793 = vmatpush1.msra.mxu0 0.0
    %1794 = vmatprep.subr.mxu0 0.0
    %1795 = vmatpush1.msra.mxu0 0.0
    %1796 = vmatprep.mubr.f32.mxu0 0.0
    %1797 = vmatmul.mubr.f32.gmra.mrb[0].mxu0 %v1721
    %v1798 = vpop.f32.mrb[0].mxu0
    %v1799 = vadd.f32 0.0, %v1798
    %v1800 = vpop.f32.mrb[0].mxu0
    %1801 = vmatprep.mubr.f32.mxu0 0.0
    %1802 = vmatmul.mubr.f32.gmra.mrb[0].mxu0 %v1724
    %v1803 = vpop.f32.mrb[0].mxu0
    %v1804 = vadd.f32 0.0, %v1803
    %v1805 = vpop.f32.mrb[0].mxu0
    %1806 = vmatprep.mubr.f32.mxu0 0.0
    %1807 = vmatmul.mubr.f32.gmra.mrb[0].mxu0 %v1727
    %v1808 = vpop.f32.mrb[0].mxu0
    %v1809 = vadd.f32 0.0, %v1808
    %v1810 = vpop.f32.mrb[0].mxu0
    %1811 = vmatprep.mubr.f32.mxu0 0.0
    %1812 = vmatmul.mubr.f32.gmra.mrb[0].mxu0 %v1730
    %v1813 = vpop.f32.mrb[0].mxu0
    %v1814 = vadd.f32 0.0, %v1813
    %v1815 = vpop.f32.mrb[0].mxu0
    %1816 = vdwg.mxu0
    %v1818 = vsel %vm632, %v1708, 0
    %v1821 = vsel %vm632, %v1709, 0
    %v1824 = vsel %vm632, %v1710, 0
    %v1827 = vsel %vm632, %v1711, 0
    %1829 = vmatprep.subr.mxu0 0.0
    %1830 = vmatpush1.msra.mxu0 %v1712
    %1831 = vmatprep.subr.mxu0 0.0
    %1832 = vmatpush1.msra.mxu0 %v1713
    %1833 = vmatprep.subr.mxu0 0.0
    %1834 = vmatpush1.msra.mxu0 %v1714
    %1835 = vmatprep.subr.mxu0 0.0
    %1836 = vmatpush1.msra.mxu0 %v1715
    %1837 = vmatprep.subr.mxu0 0.0
    %1838 = vmatpush1.msra.mxu0 0.0
    %1839 = vmatprep.subr.mxu0 0.0
    %1840 = vmatpush1.msra.mxu0 0.0
    %1841 = vmatprep.subr.mxu0 0.0
    %1842 = vmatpush1.msra.mxu0 0.0
    %1843 = vmatprep.subr.mxu0 0.0
    %1844 = vmatpush1.msra.mxu0 0.0
    %1845 = vmatprep.subr.mxu0 0.0
    %1846 = vmatpush1.msra.mxu0 0.0
    %1847 = vmatprep.subr.mxu0 0.0
    %1848 = vmatpush1.msra.mxu0 0.0
    %1849 = vmatprep.subr.mxu0 0.0
    %1850 = vmatpush1.msra.mxu0 0.0
    %1851 = vmatprep.subr.mxu0 0.0
    %1852 = vmatpush1.msra.mxu0 0.0
    %1853 = vmatprep.subr.mxu0 0.0
    %1854 = vmatpush1.msra.mxu0 0.0
    %1855 = vmatprep.subr.mxu0 0.0
    %1856 = vmatpush1.msra.mxu0 0.0
    %1857 = vmatprep.subr.mxu0 0.0
    %1858 = vmatpush1.msra.mxu0 0.0
    %1859 = vmatprep.subr.mxu0 0.0
    %1860 = vmatpush1.msra.mxu0 0.0
    %1861 = vmatprep.subr.mxu0 0.0
    %1862 = vmatpush1.msra.mxu0 0.0
    %1863 = vmatprep.subr.mxu0 0.0
    %1864 = vmatpush1.msra.mxu0 0.0
    %1865 = vmatprep.subr.mxu0 0.0
    %1866 = vmatpush1.msra.mxu0 0.0
    %1867 = vmatprep.subr.mxu0 0.0
    %1868 = vmatpush1.msra.mxu0 0.0
    %1869 = vmatprep.subr.mxu0 0.0
    %1870 = vmatpush1.msra.mxu0 0.0
    %1871 = vmatprep.subr.mxu0 0.0
    %1872 = vmatpush1.msra.mxu0 0.0
    %1873 = vmatprep.subr.mxu0 0.0
    %1874 = vmatpush1.msra.mxu0 0.0
    %1875 = vmatprep.subr.mxu0 0.0
    %1876 = vmatpush1.msra.mxu0 0.0
    %1877 = vmatprep.subr.mxu0 0.0
    %1878 = vmatpush1.msra.mxu0 0.0
    %1879 = vmatprep.subr.mxu0 0.0
    %1880 = vmatpush1.msra.mxu0 0.0
    %1881 = vmatprep.subr.mxu0 0.0
    %1882 = vmatpush1.msra.mxu0 0.0
    %1883 = vmatprep.subr.mxu0 0.0
    %1884 = vmatpush1.msra.mxu0 0.0
    %1885 = vmatprep.subr.mxu0 0.0
    %1886 = vmatpush1.msra.mxu0 0.0
    %1887 = vmatprep.subr.mxu0 0.0
    %1888 = vmatpush1.msra.mxu0 0.0
    %1889 = vmatprep.subr.mxu0 0.0
    %1890 = vmatpush1.msra.mxu0 0.0
    %1891 = vmatprep.subr.mxu0 0.0
    %1892 = vmatpush1.msra.mxu0 0.0
    %1893 = vmatprep.mubr.f32.mxu0 0.0
    %1894 = vmatmul.mubr.f32.gmra.mrb[0].mxu0 %v1818
    %v1895 = vpop.f32.mrb[0].mxu0
    %v1896 = vadd.f32 %v1799, %v1895
    %v1897 = vpop.f32.mrb[0].mxu0
    %1898 = vmatprep.mubr.f32.mxu0 0.0
    %1899 = vmatmul.mubr.f32.gmra.mrb[0].mxu0 %v1821
    %v1900 = vpop.f32.mrb[0].mxu0
    %v1901 = vadd.f32 %v1804, %v1900
    %v1902 = vpop.f32.mrb[0].mxu0
    %1903 = vmatprep.mubr.f32.mxu0 0.0
    %1904 = vmatmul.mubr.f32.gmra.mrb[0].mxu0 %v1824
    %v1905 = vpop.f32.mrb[0].mxu0
    %v1906 = vadd.f32 %v1809, %v1905
    %v1907 = vpop.f32.mrb[0].mxu0
    %1908 = vmatprep.mubr.f32.mxu0 0.0
    %1909 = vmatmul.mubr.f32.gmra.mrb[0].mxu0 %v1827
    %v1910 = vpop.f32.mrb[0].mxu0
    %v1911 = vadd.f32 %v1814, %v1910
    %v1912 = vpop.f32.mrb[0].mxu0
    %1913 = vdwg.mxu0
    %v1914 = vld [vmem:[%s49] sm:$0x1]
    %v1916 = vlaneseq
    %v1917 = vshrl.u32 %v1916, 7
    %v1918 = vsub.s32 0, %v1917
    %v1919 = vrot.slane %v1914, %v1918
    %v1921 = vadd.f32 %v1896, %v1919
    %v1922 = vadd.f32 %v1901, %v1919
    %v1923 = vadd.f32 %v1906, %v1919
    %v1924 = vadd.f32 %v1911, %v1919
    %v1925 = vxor.u32 %v1921, 2147483648
    %v1926 = vxor.u32 %v1922, 2147483648
    %v1927 = vxor.u32 %v1923, 2147483648
    %v1928 = vxor.u32 %v1924, 2147483648
    %v1929 = vmul.f32 %v1925, 1.442695
    %v1930 = vpow.pop %v1929
    %v1931 = vmul.f32 %v1926, 1.442695
    %v1932 = vpow.pop %v1931
    %v1933 = vmul.f32 %v1927, 1.442695
    %v1934 = vpow.pop %v1933
    %v1935 = vmul.f32 %v1928, 1.442695
    %v1936 = vpow.pop %v1935
    %v1937 = vadd.f32 %v1930, 1.0
    %v1938 = vadd.f32 %v1932, 1.0
    %v1939 = vadd.f32 %v1934, 1.0
    %v1940 = vadd.f32 %v1936, 1.0
    %v1941 = vrcp.pop %v1937
    %v1942 = vmul.f32 1.0, %v1941
    %v1943 = vrcp.pop %v1938
    %v1944 = vmul.f32 1.0, %v1943
    %v1945 = vrcp.pop %v1939
    %v1946 = vmul.f32 1.0, %v1945
    %v1947 = vrcp.pop %v1940
    %v1948 = vmul.f32 1.0, %v1947
    %v1949 = vld [vmem:[%s51] sm:$0xff]
    %v1950 = vld [vmem:[%s51 + $0x8] sm:$0xff]
    %v1951 = vld [vmem:[%s51 + $0x10] sm:$0xff]
    %v1952 = vld [vmem:[%s51 + $0x18] sm:$0xff]
    %v1953 = vld [vmem:[%s53] sm:$0xff]
    %v1954 = vld [vmem:[%s53 + $0x8] sm:$0xff]
    %v1955 = vld [vmem:[%s53 + $0x10] sm:$0xff]
    %v1956 = vld [vmem:[%s53 + $0x18] sm:$0xff]
    %1957 = vmatprep.subr.mxu0 0.0
    %1958 = vmatpush1.msra.mxu0 %v1953
    %1959 = vmatprep.subr.mxu0 0.0
    %1960 = vmatpush1.msra.mxu0 %v1954
    %1961 = vmatprep.subr.mxu0 0.0
    %1962 = vmatpush1.msra.mxu0 %v1955
    %1963 = vmatprep.subr.mxu0 0.0
    %1964 = vmatpush1.msra.mxu0 %v1956
    %1965 = vmatprep.subr.mxu0 0.0
    %1966 = vmatpush1.msra.mxu0 0.0
    %1967 = vmatprep.subr.mxu0 0.0
    %1968 = vmatpush1.msra.mxu0 0.0
    %1969 = vmatprep.subr.mxu0 0.0
    %1970 = vmatpush1.msra.mxu0 0.0
    %1971 = vmatprep.subr.mxu0 0.0
    %1972 = vmatpush1.msra.mxu0 0.0
    %1973 = vmatprep.subr.mxu0 0.0
    %1974 = vmatpush1.msra.mxu0 0.0
    %1975 = vmatprep.subr.mxu0 0.0
    %1976 = vmatpush1.msra.mxu0 0.0
    %1977 = vmatprep.subr.mxu0 0.0
    %1978 = vmatpush1.msra.mxu0 0.0
    %1979 = vmatprep.subr.mxu0 0.0
    %1980 = vmatpush1.msra.mxu0 0.0
    %1981 = vmatprep.subr.mxu0 0.0
    %1982 = vmatpush1.msra.mxu0 0.0
    %1983 = vmatprep.subr.mxu0 0.0
    %1984 = vmatpush1.msra.mxu0 0.0
    %1985 = vmatprep.subr.mxu0 0.0
    %1986 = vmatpush1.msra.mxu0 0.0
    %1987 = vmatprep.subr.mxu0 0.0
    %1988 = vmatpush1.msra.mxu0 0.0
    %1989 = vmatprep.subr.mxu0 0.0
    %1990 = vmatpush1.msra.mxu0 0.0
    %1991 = vmatprep.subr.mxu0 0.0
    %1992 = vmatpush1.msra.mxu0 0.0
    %1993 = vmatprep.subr.mxu0 0.0
    %1994 = vmatpush1.msra.mxu0 0.0
    %1995 = vmatprep.subr.mxu0 0.0
    %1996 = vmatpush1.msra.mxu0 0.0
    %1997 = vmatprep.subr.mxu0 0.0
    %1998 = vmatpush1.msra.mxu0 0.0
    %1999 = vmatprep.subr.mxu0 0.0
    %2000 = vmatpush1.msra.mxu0 0.0
    %2001 = vmatprep.subr.mxu0 0.0
    %2002 = vmatpush1.msra.mxu0 0.0
    %2003 = vmatprep.subr.mxu0 0.0
    %2004 = vmatpush1.msra.mxu0 0.0
    %2005 = vmatprep.subr.mxu0 0.0
    %2006 = vmatpush1.msra.mxu0 0.0
    %2007 = vmatprep.subr.mxu0 0.0
    %2008 = vmatpush1.msra.mxu0 0.0
    %2009 = vmatprep.subr.mxu0 0.0
    %2010 = vmatpush1.msra.mxu0 0.0
    %2011 = vmatprep.subr.mxu0 0.0
    %2012 = vmatpush1.msra.mxu0 0.0
    %2013 = vmatprep.subr.mxu0 0.0
    %2014 = vmatpush1.msra.mxu0 0.0
    %2015 = vmatprep.subr.mxu0 0.0
    %2016 = vmatpush1.msra.mxu0 0.0
    %2017 = vmatprep.subr.mxu0 0.0
    %2018 = vmatpush1.msra.mxu0 0.0
    %2019 = vmatprep.subr.mxu0 0.0
    %2020 = vmatpush1.msra.mxu0 0.0
    %2021 = vmatprep.mubr.f32.mxu0 0.0
    %2022 = vmatmul.mubr.f32.gmra.mrb[0].mxu0 %v1721
    %v2023 = vpop.f32.mrb[0].mxu0
    %v2024 = vadd.f32 0.0, %v2023
    %v2025 = vpop.f32.mrb[0].mxu0
    %2026 = vmatprep.mubr.f32.mxu0 0.0
    %2027 = vmatmul.mubr.f32.gmra.mrb[0].mxu0 %v1724
    %v2028 = vpop.f32.mrb[0].mxu0
    %v2029 = vadd.f32 0.0, %v2028
    %v2030 = vpop.f32.mrb[0].mxu0
    %2031 = vmatprep.mubr.f32.mxu0 0.0
    %2032 = vmatmul.mubr.f32.gmra.mrb[0].mxu0 %v1727
    %v2033 = vpop.f32.mrb[0].mxu0
    %v2034 = vadd.f32 0.0, %v2033
    %v2035 = vpop.f32.mrb[0].mxu0
    %2036 = vmatprep.mubr.f32.mxu0 0.0
    %2037 = vmatmul.mubr.f32.gmra.mrb[0].mxu0 %v1730
    %v2038 = vpop.f32.mrb[0].mxu0
    %v2039 = vadd.f32 0.0, %v2038
    %v2040 = vpop.f32.mrb[0].mxu0
    %2041 = vdwg.mxu0
    %2042 = vmatprep.subr.mxu0 0.0
    %2043 = vmatpush1.msra.mxu0 %v1949
    %2044 = vmatprep.subr.mxu0 0.0
    %2045 = vmatpush1.msra.mxu0 %v1950
    %2046 = vmatprep.subr.mxu0 0.0
    %2047 = vmatpush1.msra.mxu0 %v1951
    %2048 = vmatprep.subr.mxu0 0.0
    %2049 = vmatpush1.msra.mxu0 %v1952
    %2050 = vmatprep.subr.mxu0 0.0
    %2051 = vmatpush1.msra.mxu0 0.0
    %2052 = vmatprep.subr.mxu0 0.0
    %2053 = vmatpush1.msra.mxu0 0.0
    %2054 = vmatprep.subr.mxu0 0.0
    %2055 = vmatpush1.msra.mxu0 0.0
    %2056 = vmatprep.subr.mxu0 0.0
    %2057 = vmatpush1.msra.mxu0 0.0
    %2058 = vmatprep.subr.mxu0 0.0
    %2059 = vmatpush1.msra.mxu0 0.0
    %2060 = vmatprep.subr.mxu0 0.0
    %2061 = vmatpush1.msra.mxu0 0.0
    %2062 = vmatprep.subr.mxu0 0.0
    %2063 = vmatpush1.msra.mxu0 0.0
    %2064 = vmatprep.subr.mxu0 0.0
    %2065 = vmatpush1.msra.mxu0 0.0
    %2066 = vmatprep.subr.mxu0 0.0
    %2067 = vmatpush1.msra.mxu0 0.0
    %2068 = vmatprep.subr.mxu0 0.0
    %2069 = vmatpush1.msra.mxu0 0.0
    %2070 = vmatprep.subr.mxu0 0.0
    %2071 = vmatpush1.msra.mxu0 0.0
    %2072 = vmatprep.subr.mxu0 0.0
    %2073 = vmatpush1.msra.mxu0 0.0
    %2074 = vmatprep.subr.mxu0 0.0
    %2075 = vmatpush1.msra.mxu0 0.0
    %2076 = vmatprep.subr.mxu0 0.0
    %2077 = vmatpush1.msra.mxu0 0.0
    %2078 = vmatprep.subr.mxu0 0.0
    %2079 = vmatpush1.msra.mxu0 0.0
    %2080 = vmatprep.subr.mxu0 0.0
    %2081 = vmatpush1.msra.mxu0 0.0
    %2082 = vmatprep.subr.mxu0 0.0
    %2083 = vmatpush1.msra.mxu0 0.0
    %2084 = vmatprep.subr.mxu0 0.0
    %2085 = vmatpush1.msra.mxu0 0.0
    %2086 = vmatprep.subr.mxu0 0.0
    %2087 = vmatpush1.msra.mxu0 0.0
    %2088 = vmatprep.subr.mxu0 0.0
    %2089 = vmatpush1.msra.mxu0 0.0
    %2090 = vmatprep.subr.mxu0 0.0
    %2091 = vmatpush1.msra.mxu0 0.0
    %2092 = vmatprep.subr.mxu0 0.0
    %2093 = vmatpush1.msra.mxu0 0.0
    %2094 = vmatprep.subr.mxu0 0.0
    %2095 = vmatpush1.msra.mxu0 0.0
    %2096 = vmatprep.subr.mxu0 0.0
    %2097 = vmatpush1.msra.mxu0 0.0
    %2098 = vmatprep.subr.mxu0 0.0
    %2099 = vmatpush1.msra.mxu0 0.0
    %2100 = vmatprep.subr.mxu0 0.0
    %2101 = vmatpush1.msra.mxu0 0.0
    %2102 = vmatprep.subr.mxu0 0.0
    %2103 = vmatpush1.msra.mxu0 0.0
    %2104 = vmatprep.subr.mxu0 0.0
    %2105 = vmatpush1.msra.mxu0 0.0
    %2106 = vmatprep.mubr.f32.mxu0 0.0
    %2107 = vmatmul.mubr.f32.gmra.mrb[0].mxu0 %v1818
    %v2108 = vpop.f32.mrb[0].mxu0
    %v2109 = vadd.f32 %v2024, %v2108
    %v2110 = vpop.f32.mrb[0].mxu0
    %2111 = vmatprep.mubr.f32.mxu0 0.0
    %2112 = vmatmul.mubr.f32.gmra.mrb[0].mxu0 %v1821
    %v2113 = vpop.f32.mrb[0].mxu0
    %v2114 = vadd.f32 %v2029, %v2113
    %v2115 = vpop.f32.mrb[0].mxu0
    %2116 = vmatprep.mubr.f32.mxu0 0.0
    %2117 = vmatmul.mubr.f32.gmra.mrb[0].mxu0 %v1824
    %v2118 = vpop.f32.mrb[0].mxu0
    %v2119 = vadd.f32 %v2034, %v2118
    %v2120 = vpop.f32.mrb[0].mxu0
    %2121 = vmatprep.mubr.f32.mxu0 0.0
    %2122 = vmatmul.mubr.f32.gmra.mrb[0].mxu0 %v1827
    %v2123 = vpop.f32.mrb[0].mxu0
    %v2124 = vadd.f32 %v2039, %v2123
    %v2125 = vpop.f32.mrb[0].mxu0
    %2126 = vdwg.mxu0
    %v2127 = vld [vmem:[%s55] sm:$0x1]
    %v2129 = vlaneseq
    %v2130 = vshrl.u32 %v2129, 7
    %v2131 = vsub.s32 0, %v2130
    %v2132 = vrot.slane %v2127, %v2131
    %v2134 = vadd.f32 %v2109, %v2132
    %v2135 = vadd.f32 %v2114, %v2132
    %v2136 = vadd.f32 %v2119, %v2132
    %v2137 = vadd.f32 %v2124, %v2132
    %v2138 = vxor.u32 %v2134, 2147483648
    %v2139 = vxor.u32 %v2135, 2147483648
    %v2140 = vxor.u32 %v2136, 2147483648
    %v2141 = vxor.u32 %v2137, 2147483648
    %v2142 = vmul.f32 %v2138, 1.442695
    %v2143 = vpow.pop %v2142
    %v2144 = vmul.f32 %v2139, 1.442695
    %v2145 = vpow.pop %v2144
    %v2146 = vmul.f32 %v2140, 1.442695
    %v2147 = vpow.pop %v2146
    %v2148 = vmul.f32 %v2141, 1.442695
    %v2149 = vpow.pop %v2148
    %v2150 = vadd.f32 %v2143, 1.0
    %v2151 = vadd.f32 %v2145, 1.0
    %v2152 = vadd.f32 %v2147, 1.0
    %v2153 = vadd.f32 %v2149, 1.0
    %v2154 = vrcp.pop %v2150
    %v2155 = vmul.f32 1.0, %v2154
    %v2156 = vrcp.pop %v2151
    %v2157 = vmul.f32 1.0, %v2156
    %v2158 = vrcp.pop %v2152
    %v2159 = vmul.f32 1.0, %v2158
    %v2160 = vrcp.pop %v2153
    %v2161 = vmul.f32 1.0, %v2160
    %v2162 = vmul.f32 %v2155, %v1708
    %v2163 = vmul.f32 %v2157, %v1709
    %v2164 = vmul.f32 %v2159, %v1710
    %v2165 = vmul.f32 %v2161, %v1711
    %v2166 = vld [vmem:[%s57] sm:$0xff]
    %v2167 = vld [vmem:[%s57 + $0x8] sm:$0xff]
    %v2168 = vld [vmem:[%s57 + $0x10] sm:$0xff]
    %v2169 = vld [vmem:[%s57 + $0x18] sm:$0xff]
    %v2170 = vld [vmem:[%s59] sm:$0xff]
    %v2171 = vld [vmem:[%s59 + $0x8] sm:$0xff]
    %v2172 = vld [vmem:[%s59 + $0x10] sm:$0xff]
    %v2173 = vld [vmem:[%s59 + $0x18] sm:$0xff]
    %2174 = vmatprep.subr.mxu0 0.0
    %2175 = vmatpush1.msra.mxu0 %v2170
    %2176 = vmatprep.subr.mxu0 0.0
    %2177 = vmatpush1.msra.mxu0 %v2171
    %2178 = vmatprep.subr.mxu0 0.0
    %2179 = vmatpush1.msra.mxu0 %v2172
    %2180 = vmatprep.subr.mxu0 0.0
    %2181 = vmatpush1.msra.mxu0 %v2173
    %2182 = vmatprep.subr.mxu0 0.0
    %2183 = vmatpush1.msra.mxu0 0.0
    %2184 = vmatprep.subr.mxu0 0.0
    %2185 = vmatpush1.msra.mxu0 0.0
    %2186 = vmatprep.subr.mxu0 0.0
    %2187 = vmatpush1.msra.mxu0 0.0
    %2188 = vmatprep.subr.mxu0 0.0
    %2189 = vmatpush1.msra.mxu0 0.0
    %2190 = vmatprep.subr.mxu0 0.0
    %2191 = vmatpush1.msra.mxu0 0.0
    %2192 = vmatprep.subr.mxu0 0.0
    %2193 = vmatpush1.msra.mxu0 0.0
    %2194 = vmatprep.subr.mxu0 0.0
    %2195 = vmatpush1.msra.mxu0 0.0
    %2196 = vmatprep.subr.mxu0 0.0
    %2197 = vmatpush1.msra.mxu0 0.0
    %2198 = vmatprep.subr.mxu0 0.0
    %2199 = vmatpush1.msra.mxu0 0.0
    %2200 = vmatprep.subr.mxu0 0.0
    %2201 = vmatpush1.msra.mxu0 0.0
    %2202 = vmatprep.subr.mxu0 0.0
    %2203 = vmatpush1.msra.mxu0 0.0
    %2204 = vmatprep.subr.mxu0 0.0
    %2205 = vmatpush1.msra.mxu0 0.0
    %2206 = vmatprep.subr.mxu0 0.0
    %2207 = vmatpush1.msra.mxu0 0.0
    %2208 = vmatprep.subr.mxu0 0.0
    %2209 = vmatpush1.msra.mxu0 0.0
    %2210 = vmatprep.subr.mxu0 0.0
    %2211 = vmatpush1.msra.mxu0 0.0
    %2212 = vmatprep.subr.mxu0 0.0
    %2213 = vmatpush1.msra.mxu0 0.0
    %2214 = vmatprep.subr.mxu0 0.0
    %2215 = vmatpush1.msra.mxu0 0.0
    %2216 = vmatprep.subr.mxu0 0.0
    %2217 = vmatpush1.msra.mxu0 0.0
    %2218 = vmatprep.subr.mxu0 0.0
    %2219 = vmatpush1.msra.mxu0 0.0
    %2220 = vmatprep.subr.mxu0 0.0
    %2221 = vmatpush1.msra.mxu0 0.0
    %2222 = vmatprep.subr.mxu0 0.0
    %2223 = vmatpush1.msra.mxu0 0.0
    %2224 = vmatprep.subr.mxu0 0.0
    %2225 = vmatpush1.msra.mxu0 0.0
    %2226 = vmatprep.subr.mxu0 0.0
    %2227 = vmatpush1.msra.mxu0 0.0
    %2228 = vmatprep.subr.mxu0 0.0
    %2229 = vmatpush1.msra.mxu0 0.0
    %2230 = vmatprep.subr.mxu0 0.0
    %2231 = vmatpush1.msra.mxu0 0.0
    %2232 = vmatprep.subr.mxu0 0.0
    %2233 = vmatpush1.msra.mxu0 0.0
    %2234 = vmatprep.subr.mxu0 0.0
    %2235 = vmatpush1.msra.mxu0 0.0
    %2236 = vmatprep.subr.mxu0 0.0
    %2237 = vmatpush1.msra.mxu0 0.0
    %2238 = vmatprep.mubr.f32.mxu0 0.0
    %2239 = vmatmul.mubr.f32.gmra.mrb[0].mxu0 %v1721
    %v2240 = vpop.f32.mrb[0].mxu0
    %v2241 = vadd.f32 0.0, %v2240
    %v2242 = vpop.f32.mrb[0].mxu0
    %2243 = vmatprep.mubr.f32.mxu0 0.0
    %2244 = vmatmul.mubr.f32.gmra.mrb[0].mxu0 %v1724
    %v2245 = vpop.f32.mrb[0].mxu0
    %v2246 = vadd.f32 0.0, %v2245
    %v2247 = vpop.f32.mrb[0].mxu0
    %2248 = vmatprep.mubr.f32.mxu0 0.0
    %2249 = vmatmul.mubr.f32.gmra.mrb[0].mxu0 %v1727
    %v2250 = vpop.f32.mrb[0].mxu0
    %v2251 = vadd.f32 0.0, %v2250
    %v2252 = vpop.f32.mrb[0].mxu0
    %2253 = vmatprep.mubr.f32.mxu0 0.0
    %2254 = vmatmul.mubr.f32.gmra.mrb[0].mxu0 %v1730
    %v2255 = vpop.f32.mrb[0].mxu0
    %v2256 = vadd.f32 0.0, %v2255
    %v2257 = vpop.f32.mrb[0].mxu0
    %2258 = vdwg.mxu0
    %v2260 = vsel %vm632, %v2162, 0
    %v2263 = vsel %vm632, %v2163, 0
    %v2266 = vsel %vm632, %v2164, 0
    %v2269 = vsel %vm632, %v2165, 0
    %2271 = vmatprep.subr.mxu0 0.0
    %2272 = vmatpush1.msra.mxu0 %v2166
    %2273 = vmatprep.subr.mxu0 0.0
    %2274 = vmatpush1.msra.mxu0 %v2167
    %2275 = vmatprep.subr.mxu0 0.0
    %2276 = vmatpush1.msra.mxu0 %v2168
    %2277 = vmatprep.subr.mxu0 0.0
    %2278 = vmatpush1.msra.mxu0 %v2169
    %2279 = vmatprep.subr.mxu0 0.0
    %2280 = vmatpush1.msra.mxu0 0.0
    %2281 = vmatprep.subr.mxu0 0.0
    %2282 = vmatpush1.msra.mxu0 0.0
    %2283 = vmatprep.subr.mxu0 0.0
    %2284 = vmatpush1.msra.mxu0 0.0
    %2285 = vmatprep.subr.mxu0 0.0
    %2286 = vmatpush1.msra.mxu0 0.0
    %2287 = vmatprep.subr.mxu0 0.0
    %2288 = vmatpush1.msra.mxu0 0.0
    %2289 = vmatprep.subr.mxu0 0.0
    %2290 = vmatpush1.msra.mxu0 0.0
    %2291 = vmatprep.subr.mxu0 0.0
    %2292 = vmatpush1.msra.mxu0 0.0
    %2293 = vmatprep.subr.mxu0 0.0
    %2294 = vmatpush1.msra.mxu0 0.0
    %2295 = vmatprep.subr.mxu0 0.0
    %2296 = vmatpush1.msra.mxu0 0.0
    %2297 = vmatprep.subr.mxu0 0.0
    %2298 = vmatpush1.msra.mxu0 0.0
    %2299 = vmatprep.subr.mxu0 0.0
    %2300 = vmatpush1.msra.mxu0 0.0
    %2301 = vmatprep.subr.mxu0 0.0
    %2302 = vmatpush1.msra.mxu0 0.0
    %2303 = vmatprep.subr.mxu0 0.0
    %2304 = vmatpush1.msra.mxu0 0.0
    %2305 = vmatprep.subr.mxu0 0.0
    %2306 = vmatpush1.msra.mxu0 0.0
    %2307 = vmatprep.subr.mxu0 0.0
    %2308 = vmatpush1.msra.mxu0 0.0
    %2309 = vmatprep.subr.mxu0 0.0
    %2310 = vmatpush1.msra.mxu0 0.0
    %2311 = vmatprep.subr.mxu0 0.0
    %2312 = vmatpush1.msra.mxu0 0.0
    %2313 = vmatprep.subr.mxu0 0.0
    %2314 = vmatpush1.msra.mxu0 0.0
    %2315 = vmatprep.subr.mxu0 0.0
    %2316 = vmatpush1.msra.mxu0 0.0
    %2317 = vmatprep.subr.mxu0 0.0
    %2318 = vmatpush1.msra.mxu0 0.0
    %2319 = vmatprep.subr.mxu0 0.0
    %2320 = vmatpush1.msra.mxu0 0.0
    %2321 = vmatprep.subr.mxu0 0.0
    %2322 = vmatpush1.msra.mxu0 0.0
    %2323 = vmatprep.subr.mxu0 0.0
    %2324 = vmatpush1.msra.mxu0 0.0
    %2325 = vmatprep.subr.mxu0 0.0
    %2326 = vmatpush1.msra.mxu0 0.0
    %2327 = vmatprep.subr.mxu0 0.0
    %2328 = vmatpush1.msra.mxu0 0.0
    %2329 = vmatprep.subr.mxu0 0.0
    %2330 = vmatpush1.msra.mxu0 0.0
    %2331 = vmatprep.subr.mxu0 0.0
    %2332 = vmatpush1.msra.mxu0 0.0
    %2333 = vmatprep.subr.mxu0 0.0
    %2334 = vmatpush1.msra.mxu0 0.0
    %2335 = vmatprep.mubr.f32.mxu0 0.0
    %2336 = vmatmul.mubr.f32.gmra.mrb[0].mxu0 %v2260
    %v2337 = vpop.f32.mrb[0].mxu0
    %v2338 = vadd.f32 %v2241, %v2337
    %v2339 = vpop.f32.mrb[0].mxu0
    %2340 = vmatprep.mubr.f32.mxu0 0.0
    %2341 = vmatmul.mubr.f32.gmra.mrb[0].mxu0 %v2263
    %v2342 = vpop.f32.mrb[0].mxu0
    %v2343 = vadd.f32 %v2246, %v2342
    %v2344 = vpop.f32.mrb[0].mxu0
    %2345 = vmatprep.mubr.f32.mxu0 0.0
    %2346 = vmatmul.mubr.f32.gmra.mrb[0].mxu0 %v2266
    %v2347 = vpop.f32.mrb[0].mxu0
    %v2348 = vadd.f32 %v2251, %v2347
    %v2349 = vpop.f32.mrb[0].mxu0
    %2350 = vmatprep.mubr.f32.mxu0 0.0
    %2351 = vmatmul.mubr.f32.gmra.mrb[0].mxu0 %v2269
    %v2352 = vpop.f32.mrb[0].mxu0
    %v2353 = vadd.f32 %v2256, %v2352
    %v2354 = vpop.f32.mrb[0].mxu0
    %2355 = vdwg.mxu0
    %v2356 = vld [vmem:[%s61] sm:$0x1]
    %v2358 = vlaneseq
    %v2359 = vshrl.u32 %v2358, 7
    %v2360 = vsub.s32 0, %v2359
    %v2361 = vrot.slane %v2356, %v2360
    %v2363 = vadd.f32 %v2338, %v2361
    %v2364 = vadd.f32 %v2343, %v2361
    %v2365 = vadd.f32 %v2348, %v2361
    %v2366 = vadd.f32 %v2353, %v2361
    %v2367 = vmax.f32 %v2363, 0.0
    %v2368 = vmax.f32 %v2364, 0.0
    %v2369 = vmax.f32 %v2365, 0.0
    %v2370 = vmax.f32 %v2366, 0.0
    %v2371 = vsub.f32 1.0, %v1942
    %v2372 = vsub.f32 1.0, %v1944
    %v2373 = vsub.f32 1.0, %v1946
    %v2374 = vsub.f32 1.0, %v1948
    %v2375 = vmul.f32 %v2371, %v1708
    %v2376 = vmul.f32 %v2372, %v1709
    %v2377 = vmul.f32 %v2373, %v1710
    %v2378 = vmul.f32 %v2374, %v1711
    %v2379 = vmul.f32 %v1942, %v2367
    %v2380 = vmul.f32 %v1944, %v2368
    %v2381 = vmul.f32 %v1946, %v2369
    %v2382 = vmul.f32 %v1948, %v2370
    %v2383 = vadd.f32 %v2375, %v2379
    %v2384 = vadd.f32 %v2376, %v2380
    %v2385 = vadd.f32 %v2377, %v2381
    %v2386 = vadd.f32 %v2378, %v2382
    %v2387 = vld [vmem:[%s65] sm:$0xff]
    %v2388 = vld [vmem:[%s65 + $0x8] sm:$0xff]
    %v2389 = vld [vmem:[%s65 + $0x10] sm:$0xff]
    %v2390 = vld [vmem:[%s65 + $0x18] sm:$0xff]
    %v2392 = vsel %vm632, %v2383, 0
    %v2395 = vsel %vm632, %v2384, 0
    %v2398 = vsel %vm632, %v2385, 0
    %v2401 = vsel %vm632, %v2386, 0
    %2403 = vmatprep.subr.mxu0 0.0
    %2404 = vmatpush1.msra.mxu0 %v2387
    %2405 = vmatprep.subr.mxu0 0.0
    %2406 = vmatpush1.msra.mxu0 %v2388
    %2407 = vmatprep.subr.mxu0 0.0
    %2408 = vmatpush1.msra.mxu0 %v2389
    %2409 = vmatprep.subr.mxu0 0.0
    %2410 = vmatpush1.msra.mxu0 %v2390
    %2411 = vmatprep.subr.mxu0 0.0
    %2412 = vmatpush1.msra.mxu0 0.0
    %2413 = vmatprep.subr.mxu0 0.0
    %2414 = vmatpush1.msra.mxu0 0.0
    %2415 = vmatprep.subr.mxu0 0.0
    %2416 = vmatpush1.msra.mxu0 0.0
    %2417 = vmatprep.subr.mxu0 0.0
    %2418 = vmatpush1.msra.mxu0 0.0
    %2419 = vmatprep.subr.mxu0 0.0
    %2420 = vmatpush1.msra.mxu0 0.0
    %2421 = vmatprep.subr.mxu0 0.0
    %2422 = vmatpush1.msra.mxu0 0.0
    %2423 = vmatprep.subr.mxu0 0.0
    %2424 = vmatpush1.msra.mxu0 0.0
    %2425 = vmatprep.subr.mxu0 0.0
    %2426 = vmatpush1.msra.mxu0 0.0
    %2427 = vmatprep.subr.mxu0 0.0
    %2428 = vmatpush1.msra.mxu0 0.0
    %2429 = vmatprep.subr.mxu0 0.0
    %2430 = vmatpush1.msra.mxu0 0.0
    %2431 = vmatprep.subr.mxu0 0.0
    %2432 = vmatpush1.msra.mxu0 0.0
    %2433 = vmatprep.subr.mxu0 0.0
    %2434 = vmatpush1.msra.mxu0 0.0
    %2435 = vmatprep.subr.mxu0 0.0
    %2436 = vmatpush1.msra.mxu0 0.0
    %2437 = vmatprep.subr.mxu0 0.0
    %2438 = vmatpush1.msra.mxu0 0.0
    %2439 = vmatprep.subr.mxu0 0.0
    %2440 = vmatpush1.msra.mxu0 0.0
    %2441 = vmatprep.subr.mxu0 0.0
    %2442 = vmatpush1.msra.mxu0 0.0
    %2443 = vmatprep.subr.mxu0 0.0
    %2444 = vmatpush1.msra.mxu0 0.0
    %2445 = vmatprep.subr.mxu0 0.0
    %2446 = vmatpush1.msra.mxu0 0.0
    %2447 = vmatprep.subr.mxu0 0.0
    %2448 = vmatpush1.msra.mxu0 0.0
    %2449 = vmatprep.subr.mxu0 0.0
    %2450 = vmatpush1.msra.mxu0 0.0
    %2451 = vmatprep.subr.mxu0 0.0
    %2452 = vmatpush1.msra.mxu0 0.0
    %2453 = vmatprep.subr.mxu0 0.0
    %2454 = vmatpush1.msra.mxu0 0.0
    %2455 = vmatprep.subr.mxu0 0.0
    %2456 = vmatpush1.msra.mxu0 0.0
    %2457 = vmatprep.subr.mxu0 0.0
    %2458 = vmatpush1.msra.mxu0 0.0
    %2459 = vmatprep.subr.mxu0 0.0
    %2460 = vmatpush1.msra.mxu0 0.0
    %2461 = vmatprep.subr.mxu0 0.0
    %2462 = vmatpush1.msra.mxu0 0.0
    %2463 = vmatprep.subr.mxu0 0.0
    %2464 = vmatpush1.msra.mxu0 0.0
    %2465 = vmatprep.subr.mxu0 0.0
    %2466 = vmatpush1.msra.mxu0 0.0
    %2467 = vmatprep.mubr.f32.mxu0 0.0
    %2468 = vmatmul.mubr.f32.gmra.mrb[0].mxu0 %v2392
    %v2469 = vpop.f32.mrb[0].mxu0
    %v2470 = vadd.f32 0.0, %v2469
    %v2471 = vpop.f32.mrb[0].mxu0
    %2472 = vmatprep.mubr.f32.mxu0 0.0
    %2473 = vmatmul.mubr.f32.gmra.mrb[0].mxu0 %v2395
    %v2474 = vpop.f32.mrb[0].mxu0
    %v2475 = vadd.f32 0.0, %v2474
    %v2476 = vpop.f32.mrb[0].mxu0
    %2477 = vmatprep.mubr.f32.mxu0 0.0
    %2478 = vmatmul.mubr.f32.gmra.mrb[0].mxu0 %v2398
    %v2479 = vpop.f32.mrb[0].mxu0
    %v2480 = vadd.f32 0.0, %v2479
    %v2481 = vpop.f32.mrb[0].mxu0
    %2482 = vmatprep.mubr.f32.mxu0 0.0
    %2483 = vmatmul.mubr.f32.gmra.mrb[0].mxu0 %v2401
    %v2484 = vpop.f32.mrb[0].mxu0
    %v2485 = vadd.f32 0.0, %v2484
    %v2486 = vpop.f32.mrb[0].mxu0
    %2487 = vdwg.mxu0
    %v2488 = vadd.f32 %v849, %v2470
    %v2489 = vadd.f32 %v854, %v2475
    %v2490 = vadd.f32 %v859, %v2480
    %v2491 = vadd.f32 %v864, %v2485
    %v2492 = vmax.f32 %v2488, 0.0
    %v2493 = vmax.f32 %v2489, 0.0
    %v2494 = vmax.f32 %v2490, 0.0
    %v2495 = vmax.f32 %v2491, 0.0
    %2496 = vst.msk [vmem:[#allocation2] sm:$0xff] %vm632, %v2492
    %2497 = vst.msk [vmem:[#allocation2 + $0x8] sm:$0xff] %vm632, %v2493
    %2498 = vst.msk [vmem:[#allocation2 + $0x10] sm:$0xff] %vm632, %v2494
    %2499 = vst.msk [vmem:[#allocation2 + $0x18] sm:$0xff] %vm632, %v2495
    loop: start=0, step=1, limit=96
    $region196: #{tpu_custom_call.1} parent=1 // loop_pre_header
      _
    $region197: #{tpu_custom_call.1} parent=1 // loop_header
      %s2501 = sphi 0, %s2505
      %p2502 = scmp.ge.s32.totalorder %s2501, 96
    $region198: #{tpu_custom_call.1} parent=1 // loop_header_branch
      %2504 = sbr.rel (%p2502) target = $region202
    $region199: #{tpu_custom_call.1} parent=1 // loop_body
      %s2506 = sld [smem:[#allocation7 + %s2501]]
      %s2507 = sld [smem:[#allocation8 + %s2501]]
      %s2508 = scalar_lea.vmem [#allocation2], %s2506
      %v2509 = vld [vmem:[%s2508] sm:$0x1]
      %s2510 = scalar_lea.vmem [#allocation4], %s2501
      %vm2511 = vcmask 253952
      %2512 = vst.msk [vmem:[%s2510] sm:$0x1] %vm2511, %v2509
      %s2513 = scalar_lea.vmem [#allocation2], %s2507
      %v2514 = vld [vmem:[%s2513] sm:$0x1]
      %s2515 = scalar_lea.vmem [#allocation5], %s2501
      %2516 = vst.msk [vmem:[%s2515] sm:$0x1] %vm2511, %v2514
    $region200: #{tpu_custom_call.1} parent=1 // loop_footer
      %s2505 = sadd.s32 1, %s2501
    $region201: #{tpu_custom_call.1} parent=1 // loop_footer_branch
      %2500 = sbr.rel target = $region197
    $region202: #{tpu_custom_call.1} parent=1 // loop_exit
      _
    %v2517 = vld [vmem:[#allocation4] sm:$0xff]
    %v2518 = vld [vmem:[#allocation4 + $0x8] sm:$0xff]
    %v2519 = vld [vmem:[#allocation4 + $0x10] sm:$0xff]
    %v2520 = vld [vmem:[#allocation4 + $0x18] sm:$0xff]
    %v2521 = vld [vmem:[#allocation4 + $0x20] sm:$0xff]
    %v2522 = vld [vmem:[#allocation4 + $0x28] sm:$0xff]
    %v2523 = vld [vmem:[#allocation4 + $0x30] sm:$0xff]
    %v2524 = vld [vmem:[#allocation4 + $0x38] sm:$0xff]
    %v2525 = vld [vmem:[#allocation4 + $0x40] sm:$0xff]
    %v2526 = vld [vmem:[#allocation4 + $0x48] sm:$0xff]
    %v2527 = vld [vmem:[#allocation4 + $0x50] sm:$0xff]
    %v2528 = vld [vmem:[#allocation4 + $0x58] sm:$0xff]
    %v2529 = vld [vmem:[#allocation5] sm:$0xff]
    %v2530 = vld [vmem:[#allocation5 + $0x8] sm:$0xff]
    %v2531 = vld [vmem:[#allocation5 + $0x10] sm:$0xff]
    %v2532 = vld [vmem:[#allocation5 + $0x18] sm:$0xff]
    %v2533 = vld [vmem:[#allocation5 + $0x20] sm:$0xff]
    %v2534 = vld [vmem:[#allocation5 + $0x28] sm:$0xff]
    %v2535 = vld [vmem:[#allocation5 + $0x30] sm:$0xff]
    %v2536 = vld [vmem:[#allocation5 + $0x38] sm:$0xff]
    %v2537 = vld [vmem:[#allocation5 + $0x40] sm:$0xff]
    %v2538 = vld [vmem:[#allocation5 + $0x48] sm:$0xff]
    %v2539 = vld [vmem:[#allocation5 + $0x50] sm:$0xff]
    %v2540 = vld [vmem:[#allocation5 + $0x58] sm:$0xff]
    %v2541 = vld [vmem:[%s29] sm:$0xff]
    %v2542 = vld [vmem:[%s29 + $0x8] sm:$0xff]
    %v2543 = vld [vmem:[%s29 + $0x10] sm:$0xff]
    %v2544 = vld [vmem:[%s29 + $0x18] sm:$0xff]
    %v2545 = vld [vmem:[%s31] sm:$0xff]
    %v2546 = vld [vmem:[%s31 + $0x8] sm:$0xff]
    %v2547 = vld [vmem:[%s31 + $0x10] sm:$0xff]
    %v2548 = vld [vmem:[%s31 + $0x18] sm:$0xff]
    %v2550 = vsel %vm632, %v2517, 0
    %v2553 = vsel %vm632, %v2518, 0
    %v2556 = vsel %vm632, %v2519, 0
    %v2559 = vsel %vm632, %v2520, 0
    %v2562 = vsel %vm632, %v2521, 0
    %v2565 = vsel %vm632, %v2522, 0
    %v2568 = vsel %vm632, %v2523, 0
    %v2571 = vsel %vm632, %v2524, 0
    %v2574 = vsel %vm632, %v2525, 0
    %v2577 = vsel %vm632, %v2526, 0
    %v2580 = vsel %vm632, %v2527, 0
    %v2583 = vsel %vm632, %v2528, 0
    %2585 = vmatprep.subr.mxu0 0.0
    %2586 = vmatpush1.msra.mxu0 %v2545
    %2587 = vmatprep.subr.mxu0 0.0
    %2588 = vmatpush1.msra.mxu0 %v2546
    %2589 = vmatprep.subr.mxu0 0.0
    %2590 = vmatpush1.msra.mxu0 %v2547
    %2591 = vmatprep.subr.mxu0 0.0
    %2592 = vmatpush1.msra.mxu0 %v2548
    %2593 = vmatprep.subr.mxu0 0.0
    %2594 = vmatpush1.msra.mxu0 0.0
    %2595 = vmatprep.subr.mxu0 0.0
    %2596 = vmatpush1.msra.mxu0 0.0
    %2597 = vmatprep.subr.mxu0 0.0
    %2598 = vmatpush1.msra.mxu0 0.0
    %2599 = vmatprep.subr.mxu0 0.0
    %2600 = vmatpush1.msra.mxu0 0.0
    %2601 = vmatprep.subr.mxu0 0.0
    %2602 = vmatpush1.msra.mxu0 0.0
    %2603 = vmatprep.subr.mxu0 0.0
    %2604 = vmatpush1.msra.mxu0 0.0
    %2605 = vmatprep.subr.mxu0 0.0
    %2606 = vmatpush1.msra.mxu0 0.0
    %2607 = vmatprep.subr.mxu0 0.0
    %2608 = vmatpush1.msra.mxu0 0.0
    %2609 = vmatprep.subr.mxu0 0.0
    %2610 = vmatpush1.msra.mxu0 0.0
    %2611 = vmatprep.subr.mxu0 0.0
    %2612 = vmatpush1.msra.mxu0 0.0
    %2613 = vmatprep.subr.mxu0 0.0
    %2614 = vmatpush1.msra.mxu0 0.0
    %2615 = vmatprep.subr.mxu0 0.0
    %2616 = vmatpush1.msra.mxu0 0.0
    %2617 = vmatprep.subr.mxu0 0.0
    %2618 = vmatpush1.msra.mxu0 0.0
    %2619 = vmatprep.subr.mxu0 0.0
    %2620 = vmatpush1.msra.mxu0 0.0
    %2621 = vmatprep.subr.mxu0 0.0
    %2622 = vmatpush1.msra.mxu0 0.0
    %2623 = vmatprep.subr.mxu0 0.0
    %2624 = vmatpush1.msra.mxu0 0.0
    %2625 = vmatprep.subr.mxu0 0.0
    %2626 = vmatpush1.msra.mxu0 0.0
    %2627 = vmatprep.subr.mxu0 0.0
    %2628 = vmatpush1.msra.mxu0 0.0
    %2629 = vmatprep.subr.mxu0 0.0
    %2630 = vmatpush1.msra.mxu0 0.0
    %2631 = vmatprep.subr.mxu0 0.0
    %2632 = vmatpush1.msra.mxu0 0.0
    %2633 = vmatprep.subr.mxu0 0.0
    %2634 = vmatpush1.msra.mxu0 0.0
    %2635 = vmatprep.subr.mxu0 0.0
    %2636 = vmatpush1.msra.mxu0 0.0
    %2637 = vmatprep.subr.mxu0 0.0
    %2638 = vmatpush1.msra.mxu0 0.0
    %2639 = vmatprep.subr.mxu0 0.0
    %2640 = vmatpush1.msra.mxu0 0.0
    %2641 = vmatprep.subr.mxu0 0.0
    %2642 = vmatpush1.msra.mxu0 0.0
    %2643 = vmatprep.subr.mxu0 0.0
    %2644 = vmatpush1.msra.mxu0 0.0
    %2645 = vmatprep.subr.mxu0 0.0
    %2646 = vmatpush1.msra.mxu0 0.0
    %2647 = vmatprep.subr.mxu0 0.0
    %2648 = vmatpush1.msra.mxu0 0.0
    %2649 = vmatprep.mubr.f32.mxu0 0.0
    %2650 = vmatmul.mubr.f32.gmra.mrb[0].mxu0 %v2550
    %v2651 = vpop.f32.mrb[0].mxu0
    %v2652 = vadd.f32 0.0, %v2651
    %v2653 = vpop.f32.mrb[0].mxu0
    %2654 = vmatprep.mubr.f32.mxu0 0.0
    %2655 = vmatmul.mubr.f32.gmra.mrb[0].mxu0 %v2553
    %v2656 = vpop.f32.mrb[0].mxu0
    %v2657 = vadd.f32 0.0, %v2656
    %v2658 = vpop.f32.mrb[0].mxu0
    %2659 = vmatprep.mubr.f32.mxu0 0.0
    %2660 = vmatmul.mubr.f32.gmra.mrb[0].mxu0 %v2556
    %v2661 = vpop.f32.mrb[0].mxu0
    %v2662 = vadd.f32 0.0, %v2661
    %v2663 = vpop.f32.mrb[0].mxu0
    %2664 = vmatprep.mubr.f32.mxu0 0.0
    %2665 = vmatmul.mubr.f32.gmra.mrb[0].mxu0 %v2559
    %v2666 = vpop.f32.mrb[0].mxu0
    %v2667 = vadd.f32 0.0, %v2666
    %v2668 = vpop.f32.mrb[0].mxu0
    %2669 = vmatprep.mubr.f32.mxu0 0.0
    %2670 = vmatmul.mubr.f32.gmra.mrb[0].mxu0 %v2562
    %v2671 = vpop.f32.mrb[0].mxu0
    %v2672 = vadd.f32 0.0, %v2671
    %v2673 = vpop.f32.mrb[0].mxu0
    %2674 = vmatprep.mubr.f32.mxu0 0.0
    %2675 = vmatmul.mubr.f32.gmra.mrb[0].mxu0 %v2565
    %v2676 = vpop.f32.mrb[0].mxu0
    %v2677 = vadd.f32 0.0, %v2676
    %v2678 = vpop.f32.mrb[0].mxu0
    %2679 = vmatprep.mubr.f32.mxu0 0.0
    %2680 = vmatmul.mubr.f32.gmra.mrb[0].mxu0 %v2568
    %v2681 = vpop.f32.mrb[0].mxu0
    %v2682 = vadd.f32 0.0, %v2681
    %v2683 = vpop.f32.mrb[0].mxu0
    %2684 = vmatprep.mubr.f32.mxu0 0.0
    %2685 = vmatmul.mubr.f32.gmra.mrb[0].mxu0 %v2571
    %v2686 = vpop.f32.mrb[0].mxu0
    %v2687 = vadd.f32 0.0, %v2686
    %v2688 = vpop.f32.mrb[0].mxu0
    %2689 = vmatprep.mubr.f32.mxu0 0.0
    %2690 = vmatmul.mubr.f32.gmra.mrb[0].mxu0 %v2574
    %v2691 = vpop.f32.mrb[0].mxu0
    %v2692 = vadd.f32 0.0, %v2691
    %v2693 = vpop.f32.mrb[0].mxu0
    %2694 = vmatprep.mubr.f32.mxu0 0.0
    %2695 = vmatmul.mubr.f32.gmra.mrb[0].mxu0 %v2577
    %v2696 = vpop.f32.mrb[0].mxu0
    %v2697 = vadd.f32 0.0, %v2696
    %v2698 = vpop.f32.mrb[0].mxu0
    %2699 = vmatprep.mubr.f32.mxu0 0.0
    %2700 = vmatmul.mubr.f32.gmra.mrb[0].mxu0 %v2580
    %v2701 = vpop.f32.mrb[0].mxu0
    %v2702 = vadd.f32 0.0, %v2701
    %v2703 = vpop.f32.mrb[0].mxu0
    %2704 = vmatprep.mubr.f32.mxu0 0.0
    %2705 = vmatmul.mubr.f32.gmra.mrb[0].mxu0 %v2583
    %v2706 = vpop.f32.mrb[0].mxu0
    %v2707 = vadd.f32 0.0, %v2706
    %v2708 = vpop.f32.mrb[0].mxu0
    %2709 = vdwg.mxu0
    %v2711 = vsel %vm632, %v2529, 0
    %v2714 = vsel %vm632, %v2530, 0
    %v2717 = vsel %vm632, %v2531, 0
    %v2720 = vsel %vm632, %v2532, 0
    %v2723 = vsel %vm632, %v2533, 0
    %v2726 = vsel %vm632, %v2534, 0
    %v2729 = vsel %vm632, %v2535, 0
    %v2732 = vsel %vm632, %v2536, 0
    %v2735 = vsel %vm632, %v2537, 0
    %v2738 = vsel %vm632, %v2538, 0
    %v2741 = vsel %vm632, %v2539, 0
    %v2744 = vsel %vm632, %v2540, 0
    %2746 = vmatprep.subr.mxu0 0.0
    %2747 = vmatpush1.msra.mxu0 %v2541
    %2748 = vmatprep.subr.mxu0 0.0
    %2749 = vmatpush1.msra.mxu0 %v2542
    %2750 = vmatprep.subr.mxu0 0.0
    %2751 = vmatpush1.msra.mxu0 %v2543
    %2752 = vmatprep.subr.mxu0 0.0
    %2753 = vmatpush1.msra.mxu0 %v2544
    %2754 = vmatprep.subr.mxu0 0.0
    %2755 = vmatpush1.msra.mxu0 0.0
    %2756 = vmatprep.subr.mxu0 0.0
    %2757 = vmatpush1.msra.mxu0 0.0
    %2758 = vmatprep.subr.mxu0 0.0
    %2759 = vmatpush1.msra.mxu0 0.0
    %2760 = vmatprep.subr.mxu0 0.0
    %2761 = vmatpush1.msra.mxu0 0.0
    %2762 = vmatprep.subr.mxu0 0.0
    %2763 = vmatpush1.msra.mxu0 0.0
    %2764 = vmatprep.subr.mxu0 0.0
    %2765 = vmatpush1.msra.mxu0 0.0
    %2766 = vmatprep.subr.mxu0 0.0
    %2767 = vmatpush1.msra.mxu0 0.0
    %2768 = vmatprep.subr.mxu0 0.0
    %2769 = vmatpush1.msra.mxu0 0.0
    %2770 = vmatprep.subr.mxu0 0.0
    %2771 = vmatpush1.msra.mxu0 0.0
    %2772 = vmatprep.subr.mxu0 0.0
    %2773 = vmatpush1.msra.mxu0 0.0
    %2774 = vmatprep.subr.mxu0 0.0
    %2775 = vmatpush1.msra.mxu0 0.0
    %2776 = vmatprep.subr.mxu0 0.0
    %2777 = vmatpush1.msra.mxu0 0.0
    %2778 = vmatprep.subr.mxu0 0.0
    %2779 = vmatpush1.msra.mxu0 0.0
    %2780 = vmatprep.subr.mxu0 0.0
    %2781 = vmatpush1.msra.mxu0 0.0
    %2782 = vmatprep.subr.mxu0 0.0
    %2783 = vmatpush1.msra.mxu0 0.0
    %2784 = vmatprep.subr.mxu0 0.0
    %2785 = vmatpush1.msra.mxu0 0.0
    %2786 = vmatprep.subr.mxu0 0.0
    %2787 = vmatpush1.msra.mxu0 0.0
    %2788 = vmatprep.subr.mxu0 0.0
    %2789 = vmatpush1.msra.mxu0 0.0
    %2790 = vmatprep.subr.mxu0 0.0
    %2791 = vmatpush1.msra.mxu0 0.0
    %2792 = vmatprep.subr.mxu0 0.0
    %2793 = vmatpush1.msra.mxu0 0.0
    %2794 = vmatprep.subr.mxu0 0.0
    %2795 = vmatpush1.msra.mxu0 0.0
    %2796 = vmatprep.subr.mxu0 0.0
    %2797 = vmatpush1.msra.mxu0 0.0
    %2798 = vmatprep.subr.mxu0 0.0
    %2799 = vmatpush1.msra.mxu0 0.0
    %2800 = vmatprep.subr.mxu0 0.0
    %2801 = vmatpush1.msra.mxu0 0.0
    %2802 = vmatprep.subr.mxu0 0.0
    %2803 = vmatpush1.msra.mxu0 0.0
    %2804 = vmatprep.subr.mxu0 0.0
    %2805 = vmatpush1.msra.mxu0 0.0
    %2806 = vmatprep.subr.mxu0 0.0
    %2807 = vmatpush1.msra.mxu0 0.0
    %2808 = vmatprep.subr.mxu0 0.0
    %2809 = vmatpush1.msra.mxu0 0.0
    %2810 = vmatprep.mubr.f32.mxu0 0.0
    %2811 = vmatmul.mubr.f32.gmra.mrb[0].mxu0 %v2711
    %v2812 = vpop.f32.mrb[0].mxu0
    %v2813 = vadd.f32 %v2652, %v2812
    %v2814 = vpop.f32.mrb[0].mxu0
    %2815 = vmatprep.mubr.f32.mxu0 0.0
    %2816 = vmatmul.mubr.f32.gmra.mrb[0].mxu0 %v2714
    %v2817 = vpop.f32.mrb[0].mxu0
    %v2818 = vadd.f32 %v2657, %v2817
    %v2819 = vpop.f32.mrb[0].mxu0
    %2820 = vmatprep.mubr.f32.mxu0 0.0
    %2821 = vmatmul.mubr.f32.gmra.mrb[0].mxu0 %v2717
    %v2822 = vpop.f32.mrb[0].mxu0
    %v2823 = vadd.f32 %v2662, %v2822
    %v2824 = vpop.f32.mrb[0].mxu0
    %2825 = vmatprep.mubr.f32.mxu0 0.0
    %2826 = vmatmul.mubr.f32.gmra.mrb[0].mxu0 %v2720
    %v2827 = vpop.f32.mrb[0].mxu0
    %v2828 = vadd.f32 %v2667, %v2827
    %v2829 = vpop.f32.mrb[0].mxu0
    %2830 = vmatprep.mubr.f32.mxu0 0.0
    %2831 = vmatmul.mubr.f32.gmra.mrb[0].mxu0 %v2723
    %v2832 = vpop.f32.mrb[0].mxu0
    %v2833 = vadd.f32 %v2672, %v2832
    %v2834 = vpop.f32.mrb[0].mxu0
    %2835 = vmatprep.mubr.f32.mxu0 0.0
    %2836 = vmatmul.mubr.f32.gmra.mrb[0].mxu0 %v2726
    %v2837 = vpop.f32.mrb[0].mxu0
    %v2838 = vadd.f32 %v2677, %v2837
    %v2839 = vpop.f32.mrb[0].mxu0
    %2840 = vmatprep.mubr.f32.mxu0 0.0
    %2841 = vmatmul.mubr.f32.gmra.mrb[0].mxu0 %v2729
    %v2842 = vpop.f32.mrb[0].mxu0
    %v2843 = vadd.f32 %v2682, %v2842
    %v2844 = vpop.f32.mrb[0].mxu0
    %2845 = vmatprep.mubr.f32.mxu0 0.0
    %2846 = vmatmul.mubr.f32.gmra.mrb[0].mxu0 %v2732
    %v2847 = vpop.f32.mrb[0].mxu0
    %v2848 = vadd.f32 %v2687, %v2847
    %v2849 = vpop.f32.mrb[0].mxu0
    %2850 = vmatprep.mubr.f32.mxu0 0.0
    %2851 = vmatmul.mubr.f32.gmra.mrb[0].mxu0 %v2735
    %v2852 = vpop.f32.mrb[0].mxu0
    %v2853 = vadd.f32 %v2692, %v2852
    %v2854 = vpop.f32.mrb[0].mxu0
    %2855 = vmatprep.mubr.f32.mxu0 0.0
    %2856 = vmatmul.mubr.f32.gmra.mrb[0].mxu0 %v2738
    %v2857 = vpop.f32.mrb[0].mxu0
    %v2858 = vadd.f32 %v2697, %v2857
    %v2859 = vpop.f32.mrb[0].mxu0
    %2860 = vmatprep.mubr.f32.mxu0 0.0
    %2861 = vmatmul.mubr.f32.gmra.mrb[0].mxu0 %v2741
    %v2862 = vpop.f32.mrb[0].mxu0
    %v2863 = vadd.f32 %v2702, %v2862
    %v2864 = vpop.f32.mrb[0].mxu0
    %2865 = vmatprep.mubr.f32.mxu0 0.0
    %2866 = vmatmul.mubr.f32.gmra.mrb[0].mxu0 %v2744
    %v2867 = vpop.f32.mrb[0].mxu0
    %v2868 = vadd.f32 %v2707, %v2867
    %v2869 = vpop.f32.mrb[0].mxu0
    %2870 = vdwg.mxu0
    %v2871 = vadd.f32 %v2813, %v735
    %v2872 = vadd.f32 %v2818, %v736
    %v2873 = vadd.f32 %v2823, %v737
    %v2874 = vadd.f32 %v2828, %v738
    %v2875 = vadd.f32 %v2833, %v739
    %v2876 = vadd.f32 %v2838, %v740
    %v2877 = vadd.f32 %v2843, %v741
    %v2878 = vadd.f32 %v2848, %v742
    %v2879 = vadd.f32 %v2853, %v743
    %v2880 = vadd.f32 %v2858, %v744
    %v2881 = vadd.f32 %v2863, %v745
    %v2882 = vadd.f32 %v2868, %v746
    %v2883 = vmax.f32 %v2871, 0.0
    %v2884 = vmax.f32 %v2872, 0.0
    %v2885 = vmax.f32 %v2873, 0.0
    %v2886 = vmax.f32 %v2874, 0.0
    %v2887 = vmax.f32 %v2875, 0.0
    %v2888 = vmax.f32 %v2876, 0.0
    %v2889 = vmax.f32 %v2877, 0.0
    %v2890 = vmax.f32 %v2878, 0.0
    %v2891 = vmax.f32 %v2879, 0.0
    %v2892 = vmax.f32 %v2880, 0.0
    %v2893 = vmax.f32 %v2881, 0.0
    %v2894 = vmax.f32 %v2882, 0.0
    %v2895 = vld [vmem:[%s37] sm:$0xff]
    %v2896 = vld [vmem:[%s37 + $0x8] sm:$0xff]
    %v2897 = vld [vmem:[%s39] sm:$0x1]
    %v2899 = vlaneseq
    %v2900 = vshrl.u32 %v2899, 7
    %v2901 = vsub.s32 0, %v2900
    %v2902 = vrot.slane %v2897, %v2901
    %v2905 = vsel %vm349, %v2883, 0
    %v2908 = vsel %vm349, %v2884, 0
    %v2911 = vsel %vm349, %v2885, 0
    %v2914 = vsel %vm349, %v2886, 0
    %v2917 = vsel %vm349, %v2887, 0
    %v2920 = vsel %vm349, %v2888, 0
    %v2923 = vsel %vm349, %v2889, 0
    %v2926 = vsel %vm349, %v2890, 0
    %v2929 = vsel %vm349, %v2891, 0
    %v2932 = vsel %vm349, %v2892, 0
    %v2935 = vsel %vm349, %v2893, 0
    %v2938 = vsel %vm349, %v2894, 0
    %2940 = vmatprep.subr.mxu0 0.0
    %2941 = vmatpush1.msra.mxu0 %v2895
    %2942 = vmatprep.subr.mxu0 0.0
    %2943 = vmatpush1.msra.mxu0 %v2896
    %2944 = vmatprep.subr.mxu0 0.0
    %2945 = vmatpush1.msra.mxu0 0.0
    %2946 = vmatprep.subr.mxu0 0.0
    %2947 = vmatpush1.msra.mxu0 0.0
    %2948 = vmatprep.subr.mxu0 0.0
    %2949 = vmatpush1.msra.mxu0 0.0
    %2950 = vmatprep.subr.mxu0 0.0
    %2951 = vmatpush1.msra.mxu0 0.0
    %2952 = vmatprep.subr.mxu0 0.0
    %2953 = vmatpush1.msra.mxu0 0.0
    %2954 = vmatprep.subr.mxu0 0.0
    %2955 = vmatpush1.msra.mxu0 0.0
    %2956 = vmatprep.subr.mxu0 0.0
    %2957 = vmatpush1.msra.mxu0 0.0
    %2958 = vmatprep.subr.mxu0 0.0
    %2959 = vmatpush1.msra.mxu0 0.0
    %2960 = vmatprep.subr.mxu0 0.0
    %2961 = vmatpush1.msra.mxu0 0.0
    %2962 = vmatprep.subr.mxu0 0.0
    %2963 = vmatpush1.msra.mxu0 0.0
    %2964 = vmatprep.subr.mxu0 0.0
    %2965 = vmatpush1.msra.mxu0 0.0
    %2966 = vmatprep.subr.mxu0 0.0
    %2967 = vmatpush1.msra.mxu0 0.0
    %2968 = vmatprep.subr.mxu0 0.0
    %2969 = vmatpush1.msra.mxu0 0.0
    %2970 = vmatprep.subr.mxu0 0.0
    %2971 = vmatpush1.msra.mxu0 0.0
    %2972 = vmatprep.subr.mxu0 0.0
    %2973 = vmatpush1.msra.mxu0 0.0
    %2974 = vmatprep.subr.mxu0 0.0
    %2975 = vmatpush1.msra.mxu0 0.0
    %2976 = vmatprep.subr.mxu0 0.0
    %2977 = vmatpush1.msra.mxu0 0.0
    %2978 = vmatprep.subr.mxu0 0.0
    %2979 = vmatpush1.msra.mxu0 0.0
    %2980 = vmatprep.subr.mxu0 0.0
    %2981 = vmatpush1.msra.mxu0 0.0
    %2982 = vmatprep.subr.mxu0 0.0
    %2983 = vmatpush1.msra.mxu0 0.0
    %2984 = vmatprep.subr.mxu0 0.0
    %2985 = vmatpush1.msra.mxu0 0.0
    %2986 = vmatprep.subr.mxu0 0.0
    %2987 = vmatpush1.msra.mxu0 0.0
    %2988 = vmatprep.subr.mxu0 0.0
    %2989 = vmatpush1.msra.mxu0 0.0
    %2990 = vmatprep.subr.mxu0 0.0
    %2991 = vmatpush1.msra.mxu0 0.0
    %2992 = vmatprep.subr.mxu0 0.0
    %2993 = vmatpush1.msra.mxu0 0.0
    %2994 = vmatprep.subr.mxu0 0.0
    %2995 = vmatpush1.msra.mxu0 0.0
    %2996 = vmatprep.subr.mxu0 0.0
    %2997 = vmatpush1.msra.mxu0 0.0
    %2998 = vmatprep.subr.mxu0 0.0
    %2999 = vmatpush1.msra.mxu0 0.0
    %3000 = vmatprep.subr.mxu0 0.0
    %3001 = vmatpush1.msra.mxu0 0.0
    %3002 = vmatprep.subr.mxu0 0.0
    %3003 = vmatpush1.msra.mxu0 0.0
    %3004 = vmatprep.mubr.f32.mxu0 0.0
    %3005 = vmatmul.mubr.f32.gmra.mrb[0].mxu0 %v2905
    %v3006 = vpop.f32.mrb[0].mxu0
    %v3007 = vadd.f32 %v2902, %v3006
    %v3008 = vpop.f32.mrb[0].mxu0
    %3009 = vmatprep.mubr.f32.mxu0 0.0
    %3010 = vmatmul.mubr.f32.gmra.mrb[0].mxu0 %v2908
    %v3011 = vpop.f32.mrb[0].mxu0
    %v3012 = vadd.f32 %v2902, %v3011
    %v3013 = vpop.f32.mrb[0].mxu0
    %3014 = vmatprep.mubr.f32.mxu0 0.0
    %3015 = vmatmul.mubr.f32.gmra.mrb[0].mxu0 %v2911
    %v3016 = vpop.f32.mrb[0].mxu0
    %v3017 = vadd.f32 %v2902, %v3016
    %v3018 = vpop.f32.mrb[0].mxu0
    %3019 = vmatprep.mubr.f32.mxu0 0.0
    %3020 = vmatmul.mubr.f32.gmra.mrb[0].mxu0 %v2914
    %v3021 = vpop.f32.mrb[0].mxu0
    %v3022 = vadd.f32 %v2902, %v3021
    %v3023 = vpop.f32.mrb[0].mxu0
    %3024 = vmatprep.mubr.f32.mxu0 0.0
    %3025 = vmatmul.mubr.f32.gmra.mrb[0].mxu0 %v2917
    %v3026 = vpop.f32.mrb[0].mxu0
    %v3027 = vadd.f32 %v2902, %v3026
    %v3028 = vpop.f32.mrb[0].mxu0
    %3029 = vmatprep.mubr.f32.mxu0 0.0
    %3030 = vmatmul.mubr.f32.gmra.mrb[0].mxu0 %v2920
    %v3031 = vpop.f32.mrb[0].mxu0
    %v3032 = vadd.f32 %v2902, %v3031
    %v3033 = vpop.f32.mrb[0].mxu0
    %3034 = vmatprep.mubr.f32.mxu0 0.0
    %3035 = vmatmul.mubr.f32.gmra.mrb[0].mxu0 %v2923
    %v3036 = vpop.f32.mrb[0].mxu0
    %v3037 = vadd.f32 %v2902, %v3036
    %v3038 = vpop.f32.mrb[0].mxu0
    %3039 = vmatprep.mubr.f32.mxu0 0.0
    %3040 = vmatmul.mubr.f32.gmra.mrb[0].mxu0 %v2926
    %v3041 = vpop.f32.mrb[0].mxu0
    %v3042 = vadd.f32 %v2902, %v3041
    %v3043 = vpop.f32.mrb[0].mxu0
    %3044 = vmatprep.mubr.f32.mxu0 0.0
    %3045 = vmatmul.mubr.f32.gmra.mrb[0].mxu0 %v2929
    %v3046 = vpop.f32.mrb[0].mxu0
    %v3047 = vadd.f32 %v2902, %v3046
    %v3048 = vpop.f32.mrb[0].mxu0
    %3049 = vmatprep.mubr.f32.mxu0 0.0
    %3050 = vmatmul.mubr.f32.gmra.mrb[0].mxu0 %v2932
    %v3051 = vpop.f32.mrb[0].mxu0
    %v3052 = vadd.f32 %v2902, %v3051
    %v3053 = vpop.f32.mrb[0].mxu0
    %3054 = vmatprep.mubr.f32.mxu0 0.0
    %3055 = vmatmul.mubr.f32.gmra.mrb[0].mxu0 %v2935
    %v3056 = vpop.f32.mrb[0].mxu0
    %v3057 = vadd.f32 %v2902, %v3056
    %v3058 = vpop.f32.mrb[0].mxu0
    %3059 = vmatprep.mubr.f32.mxu0 0.0
    %3060 = vmatmul.mubr.f32.gmra.mrb[0].mxu0 %v2938
    %v3061 = vpop.f32.mrb[0].mxu0
    %v3062 = vadd.f32 %v2902, %v3061
    %v3063 = vpop.f32.mrb[0].mxu0
    %3064 = vdwg.mxu0
    %v3065 = vmax.f32 %v3007, 0.0
    %v3066 = vmax.f32 %v3012, 0.0
    %v3067 = vmax.f32 %v3017, 0.0
    %v3068 = vmax.f32 %v3022, 0.0
    %v3069 = vmax.f32 %v3027, 0.0
    %v3070 = vmax.f32 %v3032, 0.0
    %v3071 = vmax.f32 %v3037, 0.0
    %v3072 = vmax.f32 %v3042, 0.0
    %v3073 = vmax.f32 %v3047, 0.0
    %v3074 = vmax.f32 %v3052, 0.0
    %v3075 = vmax.f32 %v3057, 0.0
    %v3076 = vmax.f32 %v3062, 0.0
    %v3077 = vld [vmem:[%s41] sm:$0x1]
    %v3079 = vlaneseq
    %v3080 = vshrl.u32 %v3079, 7
    %v3081 = vsub.s32 0, %v3080
    %v3082 = vrot.slane %v3077, %v3081
    %v3084 = vmul.f32 %v3065, %v3082
    %v3085 = vmul.f32 %v3066, %v3082
    %v3086 = vmul.f32 %v3067, %v3082
    %v3087 = vmul.f32 %v3068, %v3082
    %v3088 = vmul.f32 %v3069, %v3082
    %v3089 = vmul.f32 %v3070, %v3082
    %v3090 = vmul.f32 %v3071, %v3082
    %v3091 = vmul.f32 %v3072, %v3082
    %v3092 = vmul.f32 %v3073, %v3082
    %v3093 = vmul.f32 %v3074, %v3082
    %v3094 = vmul.f32 %v3075, %v3082
    %v3095 = vmul.f32 %v3076, %v3082
    %v3096 = vsel %vm349, %v3084, 0.0
    %3097 = vadd.xlane.f32.xlu0 %v3096
    %v3098 = vpop.xlane.xlu0 %3097
    %v3099 = vsel %vm349, %v3085, 0.0
    %3100 = vadd.xlane.f32.xlu0 %v3099
    %v3101 = vpop.xlane.xlu0 %3100
    %v3102 = vsel %vm349, %v3086, 0.0
    %3103 = vadd.xlane.f32.xlu0 %v3102
    %v3104 = vpop.xlane.xlu0 %3103
    %v3105 = vsel %vm349, %v3087, 0.0
    %3106 = vadd.xlane.f32.xlu0 %v3105
    %v3107 = vpop.xlane.xlu0 %3106
    %v3108 = vsel %vm349, %v3088, 0.0
    %3109 = vadd.xlane.f32.xlu0 %v3108
    %v3110 = vpop.xlane.xlu0 %3109
    %v3111 = vsel %vm349, %v3089, 0.0
    %3112 = vadd.xlane.f32.xlu0 %v3111
    %v3113 = vpop.xlane.xlu0 %3112
    %v3114 = vsel %vm349, %v3090, 0.0
    %3115 = vadd.xlane.f32.xlu0 %v3114
    %v3116 = vpop.xlane.xlu0 %3115
    %v3117 = vsel %vm349, %v3091, 0.0
    %3118 = vadd.xlane.f32.xlu0 %v3117
    %v3119 = vpop.xlane.xlu0 %3118
    %v3120 = vsel %vm349, %v3092, 0.0
    %3121 = vadd.xlane.f32.xlu0 %v3120
    %v3122 = vpop.xlane.xlu0 %3121
    %v3123 = vsel %vm349, %v3093, 0.0
    %3124 = vadd.xlane.f32.xlu0 %v3123
    %v3125 = vpop.xlane.xlu0 %3124
    %v3126 = vsel %vm349, %v3094, 0.0
    %3127 = vadd.xlane.f32.xlu0 %v3126
    %v3128 = vpop.xlane.xlu0 %3127
    %v3129 = vsel %vm349, %v3095, 0.0
    %3130 = vadd.xlane.f32.xlu0 %v3129
    %v3131 = vpop.xlane.xlu0 %3130
    %v3132 = vld [vmem:[#allocation9] sm:$0x1]
    %v3134 = vlaneseq
    %v3135 = vshrl.u32 %v3134, 7
    %v3136 = vsub.s32 0, %v3135
    %v3137 = vrot.slane %v3132, %v3136
    %v3139 = vadd.f32 %v3098, %v3137
    %v3140 = vadd.f32 %v3101, %v3137
    %v3141 = vadd.f32 %v3104, %v3137
    %v3142 = vadd.f32 %v3107, %v3137
    %v3143 = vadd.f32 %v3110, %v3137
    %v3144 = vadd.f32 %v3113, %v3137
    %v3145 = vadd.f32 %v3116, %v3137
    %v3146 = vadd.f32 %v3119, %v3137
    %v3147 = vadd.f32 %v3122, %v3137
    %v3148 = vadd.f32 %v3125, %v3137
    %v3149 = vadd.f32 %v3128, %v3137
    %v3150 = vadd.f32 %v3131, %v3137
    %v3151 = vxor.u32 %v3139, 2147483648
    %v3152 = vxor.u32 %v3140, 2147483648
    %v3153 = vxor.u32 %v3141, 2147483648
    %v3154 = vxor.u32 %v3142, 2147483648
    %v3155 = vxor.u32 %v3143, 2147483648
    %v3156 = vxor.u32 %v3144, 2147483648
    %v3157 = vxor.u32 %v3145, 2147483648
    %v3158 = vxor.u32 %v3146, 2147483648
    %v3159 = vxor.u32 %v3147, 2147483648
    %v3160 = vxor.u32 %v3148, 2147483648
    %v3161 = vxor.u32 %v3149, 2147483648
    %v3162 = vxor.u32 %v3150, 2147483648
    %v3163 = vmul.f32 %v3151, 1.442695
    %v3164 = vpow.pop %v3163
    %v3165 = vmul.f32 %v3152, 1.442695
    %v3166 = vpow.pop %v3165
    %v3167 = vmul.f32 %v3153, 1.442695
    %v3168 = vpow.pop %v3167
    %v3169 = vmul.f32 %v3154, 1.442695
    %v3170 = vpow.pop %v3169
    %v3171 = vmul.f32 %v3155, 1.442695
    %v3172 = vpow.pop %v3171
    %v3173 = vmul.f32 %v3156, 1.442695
    %v3174 = vpow.pop %v3173
    %v3175 = vmul.f32 %v3157, 1.442695
    %v3176 = vpow.pop %v3175
    %v3177 = vmul.f32 %v3158, 1.442695
    %v3178 = vpow.pop %v3177
    %v3179 = vmul.f32 %v3159, 1.442695
    %v3180 = vpow.pop %v3179
    %v3181 = vmul.f32 %v3160, 1.442695
    %v3182 = vpow.pop %v3181
    %v3183 = vmul.f32 %v3161, 1.442695
    %v3184 = vpow.pop %v3183
    %v3185 = vmul.f32 %v3162, 1.442695
    %v3186 = vpow.pop %v3185
    %v3187 = vadd.f32 %v3164, 1.0
    %v3188 = vadd.f32 %v3166, 1.0
    %v3189 = vadd.f32 %v3168, 1.0
    %v3190 = vadd.f32 %v3170, 1.0
    %v3191 = vadd.f32 %v3172, 1.0
    %v3192 = vadd.f32 %v3174, 1.0
    %v3193 = vadd.f32 %v3176, 1.0
    %v3194 = vadd.f32 %v3178, 1.0
    %v3195 = vadd.f32 %v3180, 1.0
    %v3196 = vadd.f32 %v3182, 1.0
    %v3197 = vadd.f32 %v3184, 1.0
    %v3198 = vadd.f32 %v3186, 1.0
    %v3199 = vrcp.pop %v3187
    %v3200 = vmul.f32 1.0, %v3199
    %v3201 = vrcp.pop %v3188
    %v3202 = vmul.f32 1.0, %v3201
    %v3203 = vrcp.pop %v3189
    %v3204 = vmul.f32 1.0, %v3203
    %v3205 = vrcp.pop %v3190
    %v3206 = vmul.f32 1.0, %v3205
    %v3207 = vrcp.pop %v3191
    %v3208 = vmul.f32 1.0, %v3207
    %v3209 = vrcp.pop %v3192
    %v3210 = vmul.f32 1.0, %v3209
    %v3211 = vrcp.pop %v3193
    %v3212 = vmul.f32 1.0, %v3211
    %v3213 = vrcp.pop %v3194
    %v3214 = vmul.f32 1.0, %v3213
    %v3215 = vrcp.pop %v3195
    %v3216 = vmul.f32 1.0, %v3215
    %v3217 = vrcp.pop %v3196
    %v3218 = vmul.f32 1.0, %v3217
    %v3219 = vrcp.pop %v3197
    %v3220 = vmul.f32 1.0, %v3219
    %v3221 = vrcp.pop %v3198
    %v3222 = vmul.f32 1.0, %v3221
    %v3223 = vmul.f32 %v3200, %v747
    %v3224 = vmul.f32 %v3202, %v748
    %v3225 = vmul.f32 %v3204, %v749
    %v3226 = vmul.f32 %v3206, %v750
    %v3227 = vmul.f32 %v3208, %v751
    %v3228 = vmul.f32 %v3210, %v752
    %v3229 = vmul.f32 %v3212, %v753
    %v3230 = vmul.f32 %v3214, %v754
    %v3231 = vmul.f32 %v3216, %v755
    %v3232 = vmul.f32 %v3218, %v756
    %v3233 = vmul.f32 %v3220, %v757
    %v3234 = vmul.f32 %v3222, %v758
    %3236 = vset.pattern.permute.xlu0 0
    %3237 = vperm.xlu0 %3236, %v3223
    %v3238 = vpop.permute.xlu0 %3237
    %3241 = vset.pattern.permute.xlu0 0
    %3242 = vperm.xlu0 %3241, %v3224
    %v3243 = vpop.permute.xlu0 %3242
    %3246 = vset.pattern.permute.xlu0 0
    %3247 = vperm.xlu0 %3246, %v3225
    %v3248 = vpop.permute.xlu0 %3247
    %3251 = vset.pattern.permute.xlu0 0
    %3252 = vperm.xlu0 %3251, %v3226
    %v3253 = vpop.permute.xlu0 %3252
    %3256 = vset.pattern.permute.xlu0 0
    %3257 = vperm.xlu0 %3256, %v3227
    %v3258 = vpop.permute.xlu0 %3257
    %3261 = vset.pattern.permute.xlu0 0
    %3262 = vperm.xlu0 %3261, %v3228
    %v3263 = vpop.permute.xlu0 %3262
    %3266 = vset.pattern.permute.xlu0 0
    %3267 = vperm.xlu0 %3266, %v3229
    %v3268 = vpop.permute.xlu0 %3267
    %3271 = vset.pattern.permute.xlu0 0
    %3272 = vperm.xlu0 %3271, %v3230
    %v3273 = vpop.permute.xlu0 %3272
    %3276 = vset.pattern.permute.xlu0 0
    %3277 = vperm.xlu0 %3276, %v3231
    %v3278 = vpop.permute.xlu0 %3277
    %3281 = vset.pattern.permute.xlu0 0
    %3282 = vperm.xlu0 %3281, %v3232
    %v3283 = vpop.permute.xlu0 %3282
    %3286 = vset.pattern.permute.xlu0 0
    %3287 = vperm.xlu0 %3286, %v3233
    %v3288 = vpop.permute.xlu0 %3287
    %3291 = vset.pattern.permute.xlu0 0
    %3292 = vperm.xlu0 %3291, %v3234
    %v3293 = vpop.permute.xlu0 %3292
    %v3295 = vmul.f32 %v3238, %v2517
    %v3296 = vmul.f32 %v3243, %v2518
    %v3297 = vmul.f32 %v3248, %v2519
    %v3298 = vmul.f32 %v3253, %v2520
    %v3299 = vmul.f32 %v3258, %v2521
    %v3300 = vmul.f32 %v3263, %v2522
    %v3301 = vmul.f32 %v3268, %v2523
    %v3302 = vmul.f32 %v3273, %v2524
    %v3303 = vmul.f32 %v3278, %v2525
    %v3304 = vmul.f32 %v3283, %v2526
    %v3305 = vmul.f32 %v3288, %v2527
    %v3306 = vmul.f32 %v3293, %v2528
    %3307 = vst.msk [vmem:[#allocation4] sm:$0xff] %vm632, %v3295
    %3308 = vst.msk [vmem:[#allocation4 + $0x8] sm:$0xff] %vm632, %v3296
    %3309 = vst.msk [vmem:[#allocation4 + $0x10] sm:$0xff] %vm632, %v3297
    %3310 = vst.msk [vmem:[#allocation4 + $0x18] sm:$0xff] %vm632, %v3298
    %3311 = vst.msk [vmem:[#allocation4 + $0x20] sm:$0xff] %vm632, %v3299
    %3312 = vst.msk [vmem:[#allocation4 + $0x28] sm:$0xff] %vm632, %v3300
    %3313 = vst.msk [vmem:[#allocation4 + $0x30] sm:$0xff] %vm632, %v3301
    %3314 = vst.msk [vmem:[#allocation4 + $0x38] sm:$0xff] %vm632, %v3302
    %3315 = vst.msk [vmem:[#allocation4 + $0x40] sm:$0xff] %vm632, %v3303
    %3316 = vst.msk [vmem:[#allocation4 + $0x48] sm:$0xff] %vm632, %v3304
    %3317 = vst.msk [vmem:[#allocation4 + $0x50] sm:$0xff] %vm632, %v3305
    %3318 = vst.msk [vmem:[#allocation4 + $0x58] sm:$0xff] %vm632, %v3306
    %3319 = vst.msk [vmem:[#allocation3] sm:$0xff] %vm632, 0.0
    %3320 = vst.msk [vmem:[#allocation3 + $0x8] sm:$0xff] %vm632, 0.0
    %3321 = vst.msk [vmem:[#allocation3 + $0x10] sm:$0xff] %vm632, 0.0
    %3322 = vst.msk [vmem:[#allocation3 + $0x18] sm:$0xff] %vm632, 0.0
    loop: start=0, step=1, limit=96
    $region203: #{tpu_custom_call.1} parent=1 // loop_pre_header
      _
    $region204: #{tpu_custom_call.1} parent=1 // loop_header
      %s3324 = sphi 0, %s3328
      %p3325 = scmp.ge.s32.totalorder %s3324, 96
    $region205: #{tpu_custom_call.1} parent=1 // loop_header_branch
      %3327 = sbr.rel (%p3325) target = $region209
    $region206: #{tpu_custom_call.1} parent=1 // loop_body
      %s3329 = sld [smem:[#allocation8 + %s3324]]
      %s3330 = scalar_lea.vmem [#allocation3], %s3329
      %v3331 = vld [vmem:[%s3330] sm:$0x1]
      %s3332 = scalar_lea.vmem [#allocation4], %s3324
      %v3333 = vld [vmem:[%s3332] sm:$0x1]
      %v3334 = vadd.f32 %v3331, %v3333
      %vm3335 = vcmask 253952
      %3336 = vst.msk [vmem:[%s3330] sm:$0x1] %vm3335, %v3334
    $region207: #{tpu_custom_call.1} parent=1 // loop_footer
      %s3328 = sadd.s32 1, %s3324
    $region208: #{tpu_custom_call.1} parent=1 // loop_footer_branch
      %3323 = sbr.rel target = $region204
    $region209: #{tpu_custom_call.1} parent=1 // loop_exit
      _
    %v3337 = vld [vmem:[#allocation3] sm:$0xff]
    %v3338 = vld [vmem:[#allocation3 + $0x8] sm:$0xff]
    %v3339 = vld [vmem:[#allocation3 + $0x10] sm:$0xff]
    %v3340 = vld [vmem:[#allocation3 + $0x18] sm:$0xff]
    %v3341 = vld [vmem:[#allocation2] sm:$0xff]
    %v3342 = vld [vmem:[#allocation2 + $0x8] sm:$0xff]
    %v3343 = vld [vmem:[#allocation2 + $0x10] sm:$0xff]
    %v3344 = vld [vmem:[#allocation2 + $0x18] sm:$0xff]
    %v3345 = vld [vmem:[%s45] sm:$0xff]
    %v3346 = vld [vmem:[%s45 + $0x8] sm:$0xff]
    %v3347 = vld [vmem:[%s45 + $0x10] sm:$0xff]
    %v3348 = vld [vmem:[%s45 + $0x18] sm:$0xff]
    %v3349 = vld [vmem:[%s47] sm:$0xff]
    %v3350 = vld [vmem:[%s47 + $0x8] sm:$0xff]
    %v3351 = vld [vmem:[%s47 + $0x10] sm:$0xff]
    %v3352 = vld [vmem:[%s47 + $0x18] sm:$0xff]
    %v3354 = vsel %vm632, %v3337, 0
    %v3357 = vsel %vm632, %v3338, 0
    %v3360 = vsel %vm632, %v3339, 0
    %v3363 = vsel %vm632, %v3340, 0
    %3365 = vmatprep.subr.mxu0 0.0
    %3366 = vmatpush1.msra.mxu0 %v3349
    %3367 = vmatprep.subr.mxu0 0.0
    %3368 = vmatpush1.msra.mxu0 %v3350
    %3369 = vmatprep.subr.mxu0 0.0
    %3370 = vmatpush1.msra.mxu0 %v3351
    %3371 = vmatprep.subr.mxu0 0.0
    %3372 = vmatpush1.msra.mxu0 %v3352
    %3373 = vmatprep.subr.mxu0 0.0
    %3374 = vmatpush1.msra.mxu0 0.0
    %3375 = vmatprep.subr.mxu0 0.0
    %3376 = vmatpush1.msra.mxu0 0.0
    %3377 = vmatprep.subr.mxu0 0.0
    %3378 = vmatpush1.msra.mxu0 0.0
    %3379 = vmatprep.subr.mxu0 0.0
    %3380 = vmatpush1.msra.mxu0 0.0
    %3381 = vmatprep.subr.mxu0 0.0
    %3382 = vmatpush1.msra.mxu0 0.0
    %3383 = vmatprep.subr.mxu0 0.0
    %3384 = vmatpush1.msra.mxu0 0.0
    %3385 = vmatprep.subr.mxu0 0.0
    %3386 = vmatpush1.msra.mxu0 0.0
    %3387 = vmatprep.subr.mxu0 0.0
    %3388 = vmatpush1.msra.mxu0 0.0
    %3389 = vmatprep.subr.mxu0 0.0
    %3390 = vmatpush1.msra.mxu0 0.0
    %3391 = vmatprep.subr.mxu0 0.0
    %3392 = vmatpush1.msra.mxu0 0.0
    %3393 = vmatprep.subr.mxu0 0.0
    %3394 = vmatpush1.msra.mxu0 0.0
    %3395 = vmatprep.subr.mxu0 0.0
    %3396 = vmatpush1.msra.mxu0 0.0
    %3397 = vmatprep.subr.mxu0 0.0
    %3398 = vmatpush1.msra.mxu0 0.0
    %3399 = vmatprep.subr.mxu0 0.0
    %3400 = vmatpush1.msra.mxu0 0.0
    %3401 = vmatprep.subr.mxu0 0.0
    %3402 = vmatpush1.msra.mxu0 0.0
    %3403 = vmatprep.subr.mxu0 0.0
    %3404 = vmatpush1.msra.mxu0 0.0
    %3405 = vmatprep.subr.mxu0 0.0
    %3406 = vmatpush1.msra.mxu0 0.0
    %3407 = vmatprep.subr.mxu0 0.0
    %3408 = vmatpush1.msra.mxu0 0.0
    %3409 = vmatprep.subr.mxu0 0.0
    %3410 = vmatpush1.msra.mxu0 0.0
    %3411 = vmatprep.subr.mxu0 0.0
    %3412 = vmatpush1.msra.mxu0 0.0
    %3413 = vmatprep.subr.mxu0 0.0
    %3414 = vmatpush1.msra.mxu0 0.0
    %3415 = vmatprep.subr.mxu0 0.0
    %3416 = vmatpush1.msra.mxu0 0.0
    %3417 = vmatprep.subr.mxu0 0.0
    %3418 = vmatpush1.msra.mxu0 0.0
    %3419 = vmatprep.subr.mxu0 0.0
    %3420 = vmatpush1.msra.mxu0 0.0
    %3421 = vmatprep.subr.mxu0 0.0
    %3422 = vmatpush1.msra.mxu0 0.0
    %3423 = vmatprep.subr.mxu0 0.0
    %3424 = vmatpush1.msra.mxu0 0.0
    %3425 = vmatprep.subr.mxu0 0.0
    %3426 = vmatpush1.msra.mxu0 0.0
    %3427 = vmatprep.subr.mxu0 0.0
    %3428 = vmatpush1.msra.mxu0 0.0
    %3429 = vmatprep.mubr.f32.mxu0 0.0
    %3430 = vmatmul.mubr.f32.gmra.mrb[0].mxu0 %v3354
    %v3431 = vpop.f32.mrb[0].mxu0
    %v3432 = vadd.f32 0.0, %v3431
    %v3433 = vpop.f32.mrb[0].mxu0
    %3434 = vmatprep.mubr.f32.mxu0 0.0
    %3435 = vmatmul.mubr.f32.gmra.mrb[0].mxu0 %v3357
    %v3436 = vpop.f32.mrb[0].mxu0
    %v3437 = vadd.f32 0.0, %v3436
    %v3438 = vpop.f32.mrb[0].mxu0
    %3439 = vmatprep.mubr.f32.mxu0 0.0
    %3440 = vmatmul.mubr.f32.gmra.mrb[0].mxu0 %v3360
    %v3441 = vpop.f32.mrb[0].mxu0
    %v3442 = vadd.f32 0.0, %v3441
    %v3443 = vpop.f32.mrb[0].mxu0
    %3444 = vmatprep.mubr.f32.mxu0 0.0
    %3445 = vmatmul.mubr.f32.gmra.mrb[0].mxu0 %v3363
    %v3446 = vpop.f32.mrb[0].mxu0
    %v3447 = vadd.f32 0.0, %v3446
    %v3448 = vpop.f32.mrb[0].mxu0
    %3449 = vdwg.mxu0
    %v3451 = vsel %vm632, %v3341, 0
    %v3454 = vsel %vm632, %v3342, 0
    %v3457 = vsel %vm632, %v3343, 0
    %v3460 = vsel %vm632, %v3344, 0
    %3462 = vmatprep.subr.mxu0 0.0
    %3463 = vmatpush1.msra.mxu0 %v3345
    %3464 = vmatprep.subr.mxu0 0.0
    %3465 = vmatpush1.msra.mxu0 %v3346
    %3466 = vmatprep.subr.mxu0 0.0
    %3467 = vmatpush1.msra.mxu0 %v3347
    %3468 = vmatprep.subr.mxu0 0.0
    %3469 = vmatpush1.msra.mxu0 %v3348
    %3470 = vmatprep.subr.mxu0 0.0
    %3471 = vmatpush1.msra.mxu0 0.0
    %3472 = vmatprep.subr.mxu0 0.0
    %3473 = vmatpush1.msra.mxu0 0.0
    %3474 = vmatprep.subr.mxu0 0.0
    %3475 = vmatpush1.msra.mxu0 0.0
    %3476 = vmatprep.subr.mxu0 0.0
    %3477 = vmatpush1.msra.mxu0 0.0
    %3478 = vmatprep.subr.mxu0 0.0
    %3479 = vmatpush1.msra.mxu0 0.0
    %3480 = vmatprep.subr.mxu0 0.0
    %3481 = vmatpush1.msra.mxu0 0.0
    %3482 = vmatprep.subr.mxu0 0.0
    %3483 = vmatpush1.msra.mxu0 0.0
    %3484 = vmatprep.subr.mxu0 0.0
    %3485 = vmatpush1.msra.mxu0 0.0
    %3486 = vmatprep.subr.mxu0 0.0
    %3487 = vmatpush1.msra.mxu0 0.0
    %3488 = vmatprep.subr.mxu0 0.0
    %3489 = vmatpush1.msra.mxu0 0.0
    %3490 = vmatprep.subr.mxu0 0.0
    %3491 = vmatpush1.msra.mxu0 0.0
    %3492 = vmatprep.subr.mxu0 0.0
    %3493 = vmatpush1.msra.mxu0 0.0
    %3494 = vmatprep.subr.mxu0 0.0
    %3495 = vmatpush1.msra.mxu0 0.0
    %3496 = vmatprep.subr.mxu0 0.0
    %3497 = vmatpush1.msra.mxu0 0.0
    %3498 = vmatprep.subr.mxu0 0.0
    %3499 = vmatpush1.msra.mxu0 0.0
    %3500 = vmatprep.subr.mxu0 0.0
    %3501 = vmatpush1.msra.mxu0 0.0
    %3502 = vmatprep.subr.mxu0 0.0
    %3503 = vmatpush1.msra.mxu0 0.0
    %3504 = vmatprep.subr.mxu0 0.0
    %3505 = vmatpush1.msra.mxu0 0.0
    %3506 = vmatprep.subr.mxu0 0.0
    %3507 = vmatpush1.msra.mxu0 0.0
    %3508 = vmatprep.subr.mxu0 0.0
    %3509 = vmatpush1.msra.mxu0 0.0
    %3510 = vmatprep.subr.mxu0 0.0
    %3511 = vmatpush1.msra.mxu0 0.0
    %3512 = vmatprep.subr.mxu0 0.0
    %3513 = vmatpush1.msra.mxu0 0.0
    %3514 = vmatprep.subr.mxu0 0.0
    %3515 = vmatpush1.msra.mxu0 0.0
    %3516 = vmatprep.subr.mxu0 0.0
    %3517 = vmatpush1.msra.mxu0 0.0
    %3518 = vmatprep.subr.mxu0 0.0
    %3519 = vmatpush1.msra.mxu0 0.0
    %3520 = vmatprep.subr.mxu0 0.0
    %3521 = vmatpush1.msra.mxu0 0.0
    %3522 = vmatprep.subr.mxu0 0.0
    %3523 = vmatpush1.msra.mxu0 0.0
    %3524 = vmatprep.subr.mxu0 0.0
    %3525 = vmatpush1.msra.mxu0 0.0
    %3526 = vmatprep.mubr.f32.mxu0 0.0
    %3527 = vmatmul.mubr.f32.gmra.mrb[0].mxu0 %v3451
    %v3528 = vpop.f32.mrb[0].mxu0
    %v3529 = vadd.f32 %v3432, %v3528
    %v3530 = vpop.f32.mrb[0].mxu0
    %3531 = vmatprep.mubr.f32.mxu0 0.0
    %3532 = vmatmul.mubr.f32.gmra.mrb[0].mxu0 %v3454
    %v3533 = vpop.f32.mrb[0].mxu0
    %v3534 = vadd.f32 %v3437, %v3533
    %v3535 = vpop.f32.mrb[0].mxu0
    %3536 = vmatprep.mubr.f32.mxu0 0.0
    %3537 = vmatmul.mubr.f32.gmra.mrb[0].mxu0 %v3457
    %v3538 = vpop.f32.mrb[0].mxu0
    %v3539 = vadd.f32 %v3442, %v3538
    %v3540 = vpop.f32.mrb[0].mxu0
    %3541 = vmatprep.mubr.f32.mxu0 0.0
    %3542 = vmatmul.mubr.f32.gmra.mrb[0].mxu0 %v3460
    %v3543 = vpop.f32.mrb[0].mxu0
    %v3544 = vadd.f32 %v3447, %v3543
    %v3545 = vpop.f32.mrb[0].mxu0
    %3546 = vdwg.mxu0
    %v3547 = vld [vmem:[%s49] sm:$0x1]
    %v3549 = vlaneseq
    %v3550 = vshrl.u32 %v3549, 7
    %v3551 = vsub.s32 0, %v3550
    %v3552 = vrot.slane %v3547, %v3551
    %v3554 = vadd.f32 %v3529, %v3552
    %v3555 = vadd.f32 %v3534, %v3552
    %v3556 = vadd.f32 %v3539, %v3552
    %v3557 = vadd.f32 %v3544, %v3552
    %v3558 = vxor.u32 %v3554, 2147483648
    %v3559 = vxor.u32 %v3555, 2147483648
    %v3560 = vxor.u32 %v3556, 2147483648
    %v3561 = vxor.u32 %v3557, 2147483648
    %v3562 = vmul.f32 %v3558, 1.442695
    %v3563 = vpow.pop %v3562
    %v3564 = vmul.f32 %v3559, 1.442695
    %v3565 = vpow.pop %v3564
    %v3566 = vmul.f32 %v3560, 1.442695
    %v3567 = vpow.pop %v3566
    %v3568 = vmul.f32 %v3561, 1.442695
    %v3569 = vpow.pop %v3568
    %v3570 = vadd.f32 %v3563, 1.0
    %v3571 = vadd.f32 %v3565, 1.0
    %v3572 = vadd.f32 %v3567, 1.0
    %v3573 = vadd.f32 %v3569, 1.0
    %v3574 = vrcp.pop %v3570
    %v3575 = vmul.f32 1.0, %v3574
    %v3576 = vrcp.pop %v3571
    %v3577 = vmul.f32 1.0, %v3576
    %v3578 = vrcp.pop %v3572
    %v3579 = vmul.f32 1.0, %v3578
    %v3580 = vrcp.pop %v3573
    %v3581 = vmul.f32 1.0, %v3580
    %v3582 = vld [vmem:[%s51] sm:$0xff]
    %v3583 = vld [vmem:[%s51 + $0x8] sm:$0xff]
    %v3584 = vld [vmem:[%s51 + $0x10] sm:$0xff]
    %v3585 = vld [vmem:[%s51 + $0x18] sm:$0xff]
    %v3586 = vld [vmem:[%s53] sm:$0xff]
    %v3587 = vld [vmem:[%s53 + $0x8] sm:$0xff]
    %v3588 = vld [vmem:[%s53 + $0x10] sm:$0xff]
    %v3589 = vld [vmem:[%s53 + $0x18] sm:$0xff]
    %3590 = vmatprep.subr.mxu0 0.0
    %3591 = vmatpush1.msra.mxu0 %v3586
    %3592 = vmatprep.subr.mxu0 0.0
    %3593 = vmatpush1.msra.mxu0 %v3587
    %3594 = vmatprep.subr.mxu0 0.0
    %3595 = vmatpush1.msra.mxu0 %v3588
    %3596 = vmatprep.subr.mxu0 0.0
    %3597 = vmatpush1.msra.mxu0 %v3589
    %3598 = vmatprep.subr.mxu0 0.0
    %3599 = vmatpush1.msra.mxu0 0.0
    %3600 = vmatprep.subr.mxu0 0.0
    %3601 = vmatpush1.msra.mxu0 0.0
    %3602 = vmatprep.subr.mxu0 0.0
    %3603 = vmatpush1.msra.mxu0 0.0
    %3604 = vmatprep.subr.mxu0 0.0
    %3605 = vmatpush1.msra.mxu0 0.0
    %3606 = vmatprep.subr.mxu0 0.0
    %3607 = vmatpush1.msra.mxu0 0.0
    %3608 = vmatprep.subr.mxu0 0.0
    %3609 = vmatpush1.msra.mxu0 0.0
    %3610 = vmatprep.subr.mxu0 0.0
    %3611 = vmatpush1.msra.mxu0 0.0
    %3612 = vmatprep.subr.mxu0 0.0
    %3613 = vmatpush1.msra.mxu0 0.0
    %3614 = vmatprep.subr.mxu0 0.0
    %3615 = vmatpush1.msra.mxu0 0.0
    %3616 = vmatprep.subr.mxu0 0.0
    %3617 = vmatpush1.msra.mxu0 0.0
    %3618 = vmatprep.subr.mxu0 0.0
    %3619 = vmatpush1.msra.mxu0 0.0
    %3620 = vmatprep.subr.mxu0 0.0
    %3621 = vmatpush1.msra.mxu0 0.0
    %3622 = vmatprep.subr.mxu0 0.0
    %3623 = vmatpush1.msra.mxu0 0.0
    %3624 = vmatprep.subr.mxu0 0.0
    %3625 = vmatpush1.msra.mxu0 0.0
    %3626 = vmatprep.subr.mxu0 0.0
    %3627 = vmatpush1.msra.mxu0 0.0
    %3628 = vmatprep.subr.mxu0 0.0
    %3629 = vmatpush1.msra.mxu0 0.0
    %3630 = vmatprep.subr.mxu0 0.0
    %3631 = vmatpush1.msra.mxu0 0.0
    %3632 = vmatprep.subr.mxu0 0.0
    %3633 = vmatpush1.msra.mxu0 0.0
    %3634 = vmatprep.subr.mxu0 0.0
    %3635 = vmatpush1.msra.mxu0 0.0
    %3636 = vmatprep.subr.mxu0 0.0
    %3637 = vmatpush1.msra.mxu0 0.0
    %3638 = vmatprep.subr.mxu0 0.0
    %3639 = vmatpush1.msra.mxu0 0.0
    %3640 = vmatprep.subr.mxu0 0.0
    %3641 = vmatpush1.msra.mxu0 0.0
    %3642 = vmatprep.subr.mxu0 0.0
    %3643 = vmatpush1.msra.mxu0 0.0
    %3644 = vmatprep.subr.mxu0 0.0
    %3645 = vmatpush1.msra.mxu0 0.0
    %3646 = vmatprep.subr.mxu0 0.0
    %3647 = vmatpush1.msra.mxu0 0.0
    %3648 = vmatprep.subr.mxu0 0.0
    %3649 = vmatpush1.msra.mxu0 0.0
    %3650 = vmatprep.subr.mxu0 0.0
    %3651 = vmatpush1.msra.mxu0 0.0
    %3652 = vmatprep.subr.mxu0 0.0
    %3653 = vmatpush1.msra.mxu0 0.0
    %3654 = vmatprep.mubr.f32.mxu0 0.0
    %3655 = vmatmul.mubr.f32.gmra.mrb[0].mxu0 %v3354
    %v3656 = vpop.f32.mrb[0].mxu0
    %v3657 = vadd.f32 0.0, %v3656
    %v3658 = vpop.f32.mrb[0].mxu0
    %3659 = vmatprep.mubr.f32.mxu0 0.0
    %3660 = vmatmul.mubr.f32.gmra.mrb[0].mxu0 %v3357
    %v3661 = vpop.f32.mrb[0].mxu0
    %v3662 = vadd.f32 0.0, %v3661
    %v3663 = vpop.f32.mrb[0].mxu0
    %3664 = vmatprep.mubr.f32.mxu0 0.0
    %3665 = vmatmul.mubr.f32.gmra.mrb[0].mxu0 %v3360
    %v3666 = vpop.f32.mrb[0].mxu0
    %v3667 = vadd.f32 0.0, %v3666
    %v3668 = vpop.f32.mrb[0].mxu0
    %3669 = vmatprep.mubr.f32.mxu0 0.0
    %3670 = vmatmul.mubr.f32.gmra.mrb[0].mxu0 %v3363
    %v3671 = vpop.f32.mrb[0].mxu0
    %v3672 = vadd.f32 0.0, %v3671
    %v3673 = vpop.f32.mrb[0].mxu0
    %3674 = vdwg.mxu0
    %3675 = vmatprep.subr.mxu0 0.0
    %3676 = vmatpush1.msra.mxu0 %v3582
    %3677 = vmatprep.subr.mxu0 0.0
    %3678 = vmatpush1.msra.mxu0 %v3583
    %3679 = vmatprep.subr.mxu0 0.0
    %3680 = vmatpush1.msra.mxu0 %v3584
    %3681 = vmatprep.subr.mxu0 0.0
    %3682 = vmatpush1.msra.mxu0 %v3585
    %3683 = vmatprep.subr.mxu0 0.0
    %3684 = vmatpush1.msra.mxu0 0.0
    %3685 = vmatprep.subr.mxu0 0.0
    %3686 = vmatpush1.msra.mxu0 0.0
    %3687 = vmatprep.subr.mxu0 0.0
    %3688 = vmatpush1.msra.mxu0 0.0
    %3689 = vmatprep.subr.mxu0 0.0
    %3690 = vmatpush1.msra.mxu0 0.0
    %3691 = vmatprep.subr.mxu0 0.0
    %3692 = vmatpush1.msra.mxu0 0.0
    %3693 = vmatprep.subr.mxu0 0.0
    %3694 = vmatpush1.msra.mxu0 0.0
    %3695 = vmatprep.subr.mxu0 0.0
    %3696 = vmatpush1.msra.mxu0 0.0
    %3697 = vmatprep.subr.mxu0 0.0
    %3698 = vmatpush1.msra.mxu0 0.0
    %3699 = vmatprep.subr.mxu0 0.0
    %3700 = vmatpush1.msra.mxu0 0.0
    %3701 = vmatprep.subr.mxu0 0.0
    %3702 = vmatpush1.msra.mxu0 0.0
    %3703 = vmatprep.subr.mxu0 0.0
    %3704 = vmatpush1.msra.mxu0 0.0
    %3705 = vmatprep.subr.mxu0 0.0
    %3706 = vmatpush1.msra.mxu0 0.0
    %3707 = vmatprep.subr.mxu0 0.0
    %3708 = vmatpush1.msra.mxu0 0.0
    %3709 = vmatprep.subr.mxu0 0.0
    %3710 = vmatpush1.msra.mxu0 0.0
    %3711 = vmatprep.subr.mxu0 0.0
    %3712 = vmatpush1.msra.mxu0 0.0
    %3713 = vmatprep.subr.mxu0 0.0
    %3714 = vmatpush1.msra.mxu0 0.0
    %3715 = vmatprep.subr.mxu0 0.0
    %3716 = vmatpush1.msra.mxu0 0.0
    %3717 = vmatprep.subr.mxu0 0.0
    %3718 = vmatpush1.msra.mxu0 0.0
    %3719 = vmatprep.subr.mxu0 0.0
    %3720 = vmatpush1.msra.mxu0 0.0
    %3721 = vmatprep.subr.mxu0 0.0
    %3722 = vmatpush1.msra.mxu0 0.0
    %3723 = vmatprep.subr.mxu0 0.0
    %3724 = vmatpush1.msra.mxu0 0.0
    %3725 = vmatprep.subr.mxu0 0.0
    %3726 = vmatpush1.msra.mxu0 0.0
    %3727 = vmatprep.subr.mxu0 0.0
    %3728 = vmatpush1.msra.mxu0 0.0
    %3729 = vmatprep.subr.mxu0 0.0
    %3730 = vmatpush1.msra.mxu0 0.0
    %3731 = vmatprep.subr.mxu0 0.0
    %3732 = vmatpush1.msra.mxu0 0.0
    %3733 = vmatprep.subr.mxu0 0.0
    %3734 = vmatpush1.msra.mxu0 0.0
    %3735 = vmatprep.subr.mxu0 0.0
    %3736 = vmatpush1.msra.mxu0 0.0
    %3737 = vmatprep.subr.mxu0 0.0
    %3738 = vmatpush1.msra.mxu0 0.0
    %3739 = vmatprep.mubr.f32.mxu0 0.0
    %3740 = vmatmul.mubr.f32.gmra.mrb[0].mxu0 %v3451
    %v3741 = vpop.f32.mrb[0].mxu0
    %v3742 = vadd.f32 %v3657, %v3741
    %v3743 = vpop.f32.mrb[0].mxu0
    %3744 = vmatprep.mubr.f32.mxu0 0.0
    %3745 = vmatmul.mubr.f32.gmra.mrb[0].mxu0 %v3454
    %v3746 = vpop.f32.mrb[0].mxu0
    %v3747 = vadd.f32 %v3662, %v3746
    %v3748 = vpop.f32.mrb[0].mxu0
    %3749 = vmatprep.mubr.f32.mxu0 0.0
    %3750 = vmatmul.mubr.f32.gmra.mrb[0].mxu0 %v3457
    %v3751 = vpop.f32.mrb[0].mxu0
    %v3752 = vadd.f32 %v3667, %v3751
    %v3753 = vpop.f32.mrb[0].mxu0
    %3754 = vmatprep.mubr.f32.mxu0 0.0
    %3755 = vmatmul.mubr.f32.gmra.mrb[0].mxu0 %v3460
    %v3756 = vpop.f32.mrb[0].mxu0
    %v3757 = vadd.f32 %v3672, %v3756
    %v3758 = vpop.f32.mrb[0].mxu0
    %3759 = vdwg.mxu0
    %v3760 = vld [vmem:[%s55] sm:$0x1]
    %v3762 = vlaneseq
    %v3763 = vshrl.u32 %v3762, 7
    %v3764 = vsub.s32 0, %v3763
    %v3765 = vrot.slane %v3760, %v3764
    %v3767 = vadd.f32 %v3742, %v3765
    %v3768 = vadd.f32 %v3747, %v3765
    %v3769 = vadd.f32 %v3752, %v3765
    %v3770 = vadd.f32 %v3757, %v3765
    %v3771 = vxor.u32 %v3767, 2147483648
    %v3772 = vxor.u32 %v3768, 2147483648
    %v3773 = vxor.u32 %v3769, 2147483648
    %v3774 = vxor.u32 %v3770, 2147483648
    %v3775 = vmul.f32 %v3771, 1.442695
    %v3776 = vpow.pop %v3775
    %v3777 = vmul.f32 %v3772, 1.442695
    %v3778 = vpow.pop %v3777
    %v3779 = vmul.f32 %v3773, 1.442695
    %v3780 = vpow.pop %v3779
    %v3781 = vmul.f32 %v3774, 1.442695
    %v3782 = vpow.pop %v3781
    %v3783 = vadd.f32 %v3776, 1.0
    %v3784 = vadd.f32 %v3778, 1.0
    %v3785 = vadd.f32 %v3780, 1.0
    %v3786 = vadd.f32 %v3782, 1.0
    %v3787 = vrcp.pop %v3783
    %v3788 = vmul.f32 1.0, %v3787
    %v3789 = vrcp.pop %v3784
    %v3790 = vmul.f32 1.0, %v3789
    %v3791 = vrcp.pop %v3785
    %v3792 = vmul.f32 1.0, %v3791
    %v3793 = vrcp.pop %v3786
    %v3794 = vmul.f32 1.0, %v3793
    %v3795 = vmul.f32 %v3788, %v3341
    %v3796 = vmul.f32 %v3790, %v3342
    %v3797 = vmul.f32 %v3792, %v3343
    %v3798 = vmul.f32 %v3794, %v3344
    %v3799 = vld [vmem:[%s57] sm:$0xff]
    %v3800 = vld [vmem:[%s57 + $0x8] sm:$0xff]
    %v3801 = vld [vmem:[%s57 + $0x10] sm:$0xff]
    %v3802 = vld [vmem:[%s57 + $0x18] sm:$0xff]
    %v3803 = vld [vmem:[%s59] sm:$0xff]
    %v3804 = vld [vmem:[%s59 + $0x8] sm:$0xff]
    %v3805 = vld [vmem:[%s59 + $0x10] sm:$0xff]
    %v3806 = vld [vmem:[%s59 + $0x18] sm:$0xff]
    %3807 = vmatprep.subr.mxu0 0.0
    %3808 = vmatpush1.msra.mxu0 %v3803
    %3809 = vmatprep.subr.mxu0 0.0
    %3810 = vmatpush1.msra.mxu0 %v3804
    %3811 = vmatprep.subr.mxu0 0.0
    %3812 = vmatpush1.msra.mxu0 %v3805
    %3813 = vmatprep.subr.mxu0 0.0
    %3814 = vmatpush1.msra.mxu0 %v3806
    %3815 = vmatprep.subr.mxu0 0.0
    %3816 = vmatpush1.msra.mxu0 0.0
    %3817 = vmatprep.subr.mxu0 0.0
    %3818 = vmatpush1.msra.mxu0 0.0
    %3819 = vmatprep.subr.mxu0 0.0
    %3820 = vmatpush1.msra.mxu0 0.0
    %3821 = vmatprep.subr.mxu0 0.0
    %3822 = vmatpush1.msra.mxu0 0.0
    %3823 = vmatprep.subr.mxu0 0.0
    %3824 = vmatpush1.msra.mxu0 0.0
    %3825 = vmatprep.subr.mxu0 0.0
    %3826 = vmatpush1.msra.mxu0 0.0
    %3827 = vmatprep.subr.mxu0 0.0
    %3828 = vmatpush1.msra.mxu0 0.0
    %3829 = vmatprep.subr.mxu0 0.0
    %3830 = vmatpush1.msra.mxu0 0.0
    %3831 = vmatprep.subr.mxu0 0.0
    %3832 = vmatpush1.msra.mxu0 0.0
    %3833 = vmatprep.subr.mxu0 0.0
    %3834 = vmatpush1.msra.mxu0 0.0
    %3835 = vmatprep.subr.mxu0 0.0
    %3836 = vmatpush1.msra.mxu0 0.0
    %3837 = vmatprep.subr.mxu0 0.0
    %3838 = vmatpush1.msra.mxu0 0.0
    %3839 = vmatprep.subr.mxu0 0.0
    %3840 = vmatpush1.msra.mxu0 0.0
    %3841 = vmatprep.subr.mxu0 0.0
    %3842 = vmatpush1.msra.mxu0 0.0
    %3843 = vmatprep.subr.mxu0 0.0
    %3844 = vmatpush1.msra.mxu0 0.0
    %3845 = vmatprep.subr.mxu0 0.0
    %3846 = vmatpush1.msra.mxu0 0.0
    %3847 = vmatprep.subr.mxu0 0.0
    %3848 = vmatpush1.msra.mxu0 0.0
    %3849 = vmatprep.subr.mxu0 0.0
    %3850 = vmatpush1.msra.mxu0 0.0
    %3851 = vmatprep.subr.mxu0 0.0
    %3852 = vmatpush1.msra.mxu0 0.0
    %3853 = vmatprep.subr.mxu0 0.0
    %3854 = vmatpush1.msra.mxu0 0.0
    %3855 = vmatprep.subr.mxu0 0.0
    %3856 = vmatpush1.msra.mxu0 0.0
    %3857 = vmatprep.subr.mxu0 0.0
    %3858 = vmatpush1.msra.mxu0 0.0
    %3859 = vmatprep.subr.mxu0 0.0
    %3860 = vmatpush1.msra.mxu0 0.0
    %3861 = vmatprep.subr.mxu0 0.0
    %3862 = vmatpush1.msra.mxu0 0.0
    %3863 = vmatprep.subr.mxu0 0.0
    %3864 = vmatpush1.msra.mxu0 0.0
    %3865 = vmatprep.subr.mxu0 0.0
    %3866 = vmatpush1.msra.mxu0 0.0
    %3867 = vmatprep.subr.mxu0 0.0
    %3868 = vmatpush1.msra.mxu0 0.0
    %3869 = vmatprep.subr.mxu0 0.0
    %3870 = vmatpush1.msra.mxu0 0.0
    %3871 = vmatprep.mubr.f32.mxu0 0.0
    %3872 = vmatmul.mubr.f32.gmra.mrb[0].mxu0 %v3354
    %v3873 = vpop.f32.mrb[0].mxu0
    %v3874 = vadd.f32 0.0, %v3873
    %v3875 = vpop.f32.mrb[0].mxu0
    %3876 = vmatprep.mubr.f32.mxu0 0.0
    %3877 = vmatmul.mubr.f32.gmra.mrb[0].mxu0 %v3357
    %v3878 = vpop.f32.mrb[0].mxu0
    %v3879 = vadd.f32 0.0, %v3878
    %v3880 = vpop.f32.mrb[0].mxu0
    %3881 = vmatprep.mubr.f32.mxu0 0.0
    %3882 = vmatmul.mubr.f32.gmra.mrb[0].mxu0 %v3360
    %v3883 = vpop.f32.mrb[0].mxu0
    %v3884 = vadd.f32 0.0, %v3883
    %v3885 = vpop.f32.mrb[0].mxu0
    %3886 = vmatprep.mubr.f32.mxu0 0.0
    %3887 = vmatmul.mubr.f32.gmra.mrb[0].mxu0 %v3363
    %v3888 = vpop.f32.mrb[0].mxu0
    %v3889 = vadd.f32 0.0, %v3888
    %v3890 = vpop.f32.mrb[0].mxu0
    %3891 = vdwg.mxu0
    %v3893 = vsel %vm632, %v3795, 0
    %v3896 = vsel %vm632, %v3796, 0
    %v3899 = vsel %vm632, %v3797, 0
    %v3902 = vsel %vm632, %v3798, 0
    %3904 = vmatprep.subr.mxu0 0.0
    %3905 = vmatpush1.msra.mxu0 %v3799
    %3906 = vmatprep.subr.mxu0 0.0
    %3907 = vmatpush1.msra.mxu0 %v3800
    %3908 = vmatprep.subr.mxu0 0.0
    %3909 = vmatpush1.msra.mxu0 %v3801
    %3910 = vmatprep.subr.mxu0 0.0
    %3911 = vmatpush1.msra.mxu0 %v3802
    %3912 = vmatprep.subr.mxu0 0.0
    %3913 = vmatpush1.msra.mxu0 0.0
    %3914 = vmatprep.subr.mxu0 0.0
    %3915 = vmatpush1.msra.mxu0 0.0
    %3916 = vmatprep.subr.mxu0 0.0
    %3917 = vmatpush1.msra.mxu0 0.0
    %3918 = vmatprep.subr.mxu0 0.0
    %3919 = vmatpush1.msra.mxu0 0.0
    %3920 = vmatprep.subr.mxu0 0.0
    %3921 = vmatpush1.msra.mxu0 0.0
    %3922 = vmatprep.subr.mxu0 0.0
    %3923 = vmatpush1.msra.mxu0 0.0
    %3924 = vmatprep.subr.mxu0 0.0
    %3925 = vmatpush1.msra.mxu0 0.0
    %3926 = vmatprep.subr.mxu0 0.0
    %3927 = vmatpush1.msra.mxu0 0.0
    %3928 = vmatprep.subr.mxu0 0.0
    %3929 = vmatpush1.msra.mxu0 0.0
    %3930 = vmatprep.subr.mxu0 0.0
    %3931 = vmatpush1.msra.mxu0 0.0
    %3932 = vmatprep.subr.mxu0 0.0
    %3933 = vmatpush1.msra.mxu0 0.0
    %3934 = vmatprep.subr.mxu0 0.0
    %3935 = vmatpush1.msra.mxu0 0.0
    %3936 = vmatprep.subr.mxu0 0.0
    %3937 = vmatpush1.msra.mxu0 0.0
    %3938 = vmatprep.subr.mxu0 0.0
    %3939 = vmatpush1.msra.mxu0 0.0
    %3940 = vmatprep.subr.mxu0 0.0
    %3941 = vmatpush1.msra.mxu0 0.0
    %3942 = vmatprep.subr.mxu0 0.0
    %3943 = vmatpush1.msra.mxu0 0.0
    %3944 = vmatprep.subr.mxu0 0.0
    %3945 = vmatpush1.msra.mxu0 0.0
    %3946 = vmatprep.subr.mxu0 0.0
    %3947 = vmatpush1.msra.mxu0 0.0
    %3948 = vmatprep.subr.mxu0 0.0
    %3949 = vmatpush1.msra.mxu0 0.0
    %3950 = vmatprep.subr.mxu0 0.0
    %3951 = vmatpush1.msra.mxu0 0.0
    %3952 = vmatprep.subr.mxu0 0.0
    %3953 = vmatpush1.msra.mxu0 0.0
    %3954 = vmatprep.subr.mxu0 0.0
    %3955 = vmatpush1.msra.mxu0 0.0
    %3956 = vmatprep.subr.mxu0 0.0
    %3957 = vmatpush1.msra.mxu0 0.0
    %3958 = vmatprep.subr.mxu0 0.0
    %3959 = vmatpush1.msra.mxu0 0.0
    %3960 = vmatprep.subr.mxu0 0.0
    %3961 = vmatpush1.msra.mxu0 0.0
    %3962 = vmatprep.subr.mxu0 0.0
    %3963 = vmatpush1.msra.mxu0 0.0
    %3964 = vmatprep.subr.mxu0 0.0
    %3965 = vmatpush1.msra.mxu0 0.0
    %3966 = vmatprep.subr.mxu0 0.0
    %3967 = vmatpush1.msra.mxu0 0.0
    %3968 = vmatprep.mubr.f32.mxu0 0.0
    %3969 = vmatmul.mubr.f32.gmra.mrb[0].mxu0 %v3893
    %v3970 = vpop.f32.mrb[0].mxu0
    %v3971 = vadd.f32 %v3874, %v3970
    %v3972 = vpop.f32.mrb[0].mxu0
    %3973 = vmatprep.mubr.f32.mxu0 0.0
    %3974 = vmatmul.mubr.f32.gmra.mrb[0].mxu0 %v3896
    %v3975 = vpop.f32.mrb[0].mxu0
    %v3976 = vadd.f32 %v3879, %v3975
    %v3977 = vpop.f32.mrb[0].mxu0
    %3978 = vmatprep.mubr.f32.mxu0 0.0
    %3979 = vmatmul.mubr.f32.gmra.mrb[0].mxu0 %v3899
    %v3980 = vpop.f32.mrb[0].mxu0
    %v3981 = vadd.f32 %v3884, %v3980
    %v3982 = vpop.f32.mrb[0].mxu0
    %3983 = vmatprep.mubr.f32.mxu0 0.0
    %3984 = vmatmul.mubr.f32.gmra.mrb[0].mxu0 %v3902
    %v3985 = vpop.f32.mrb[0].mxu0
    %v3986 = vadd.f32 %v3889, %v3985
    %v3987 = vpop.f32.mrb[0].mxu0
    %3988 = vdwg.mxu0
    %v3989 = vld [vmem:[%s61] sm:$0x1]
    %v3991 = vlaneseq
    %v3992 = vshrl.u32 %v3991, 7
    %v3993 = vsub.s32 0, %v3992
    %v3994 = vrot.slane %v3989, %v3993
    %v3996 = vadd.f32 %v3971, %v3994
    %v3997 = vadd.f32 %v3976, %v3994
    %v3998 = vadd.f32 %v3981, %v3994
    %v3999 = vadd.f32 %v3986, %v3994
    %v4000 = vmax.f32 %v3996, 0.0
    %v4001 = vmax.f32 %v3997, 0.0
    %v4002 = vmax.f32 %v3998, 0.0
    %v4003 = vmax.f32 %v3999, 0.0
    %v4004 = vsub.f32 1.0, %v3575
    %v4005 = vsub.f32 1.0, %v3577
    %v4006 = vsub.f32 1.0, %v3579
    %v4007 = vsub.f32 1.0, %v3581
    %v4008 = vmul.f32 %v4004, %v3341
    %v4009 = vmul.f32 %v4005, %v3342
    %v4010 = vmul.f32 %v4006, %v3343
    %v4011 = vmul.f32 %v4007, %v3344
    %v4012 = vmul.f32 %v3575, %v4000
    %v4013 = vmul.f32 %v3577, %v4001
    %v4014 = vmul.f32 %v3579, %v4002
    %v4015 = vmul.f32 %v3581, %v4003
    %v4016 = vadd.f32 %v4008, %v4012
    %v4017 = vadd.f32 %v4009, %v4013
    %v4018 = vadd.f32 %v4010, %v4014
    %v4019 = vadd.f32 %v4011, %v4015
    %v4020 = vld [vmem:[%s65] sm:$0xff]
    %v4021 = vld [vmem:[%s65 + $0x8] sm:$0xff]
    %v4022 = vld [vmem:[%s65 + $0x10] sm:$0xff]
    %v4023 = vld [vmem:[%s65 + $0x18] sm:$0xff]
    %v4025 = vsel %vm632, %v4016, 0
    %v4028 = vsel %vm632, %v4017, 0
    %v4031 = vsel %vm632, %v4018, 0
    %v4034 = vsel %vm632, %v4019, 0
    %4036 = vmatprep.subr.mxu0 0.0
    %4037 = vmatpush1.msra.mxu0 %v4020
    %4038 = vmatprep.subr.mxu0 0.0
    %4039 = vmatpush1.msra.mxu0 %v4021
    %4040 = vmatprep.subr.mxu0 0.0
    %4041 = vmatpush1.msra.mxu0 %v4022
    %4042 = vmatprep.subr.mxu0 0.0
    %4043 = vmatpush1.msra.mxu0 %v4023
    %4044 = vmatprep.subr.mxu0 0.0
    %4045 = vmatpush1.msra.mxu0 0.0
    %4046 = vmatprep.subr.mxu0 0.0
    %4047 = vmatpush1.msra.mxu0 0.0
    %4048 = vmatprep.subr.mxu0 0.0
    %4049 = vmatpush1.msra.mxu0 0.0
    %4050 = vmatprep.subr.mxu0 0.0
    %4051 = vmatpush1.msra.mxu0 0.0
    %4052 = vmatprep.subr.mxu0 0.0
    %4053 = vmatpush1.msra.mxu0 0.0
    %4054 = vmatprep.subr.mxu0 0.0
    %4055 = vmatpush1.msra.mxu0 0.0
    %4056 = vmatprep.subr.mxu0 0.0
    %4057 = vmatpush1.msra.mxu0 0.0
    %4058 = vmatprep.subr.mxu0 0.0
    %4059 = vmatpush1.msra.mxu0 0.0
    %4060 = vmatprep.subr.mxu0 0.0
    %4061 = vmatpush1.msra.mxu0 0.0
    %4062 = vmatprep.subr.mxu0 0.0
    %4063 = vmatpush1.msra.mxu0 0.0
    %4064 = vmatprep.subr.mxu0 0.0
    %4065 = vmatpush1.msra.mxu0 0.0
    %4066 = vmatprep.subr.mxu0 0.0
    %4067 = vmatpush1.msra.mxu0 0.0
    %4068 = vmatprep.subr.mxu0 0.0
    %4069 = vmatpush1.msra.mxu0 0.0
    %4070 = vmatprep.subr.mxu0 0.0
    %4071 = vmatpush1.msra.mxu0 0.0
    %4072 = vmatprep.subr.mxu0 0.0
    %4073 = vmatpush1.msra.mxu0 0.0
    %4074 = vmatprep.subr.mxu0 0.0
    %4075 = vmatpush1.msra.mxu0 0.0
    %4076 = vmatprep.subr.mxu0 0.0
    %4077 = vmatpush1.msra.mxu0 0.0
    %4078 = vmatprep.subr.mxu0 0.0
    %4079 = vmatpush1.msra.mxu0 0.0
    %4080 = vmatprep.subr.mxu0 0.0
    %4081 = vmatpush1.msra.mxu0 0.0
    %4082 = vmatprep.subr.mxu0 0.0
    %4083 = vmatpush1.msra.mxu0 0.0
    %4084 = vmatprep.subr.mxu0 0.0
    %4085 = vmatpush1.msra.mxu0 0.0
    %4086 = vmatprep.subr.mxu0 0.0
    %4087 = vmatpush1.msra.mxu0 0.0
    %4088 = vmatprep.subr.mxu0 0.0
    %4089 = vmatpush1.msra.mxu0 0.0
    %4090 = vmatprep.subr.mxu0 0.0
    %4091 = vmatpush1.msra.mxu0 0.0
    %4092 = vmatprep.subr.mxu0 0.0
    %4093 = vmatpush1.msra.mxu0 0.0
    %4094 = vmatprep.subr.mxu0 0.0
    %4095 = vmatpush1.msra.mxu0 0.0
    %4096 = vmatprep.subr.mxu0 0.0
    %4097 = vmatpush1.msra.mxu0 0.0
    %4098 = vmatprep.subr.mxu0 0.0
    %4099 = vmatpush1.msra.mxu0 0.0
    %4100 = vmatprep.mubr.f32.mxu0 0.0
    %4101 = vmatmul.mubr.f32.gmra.mrb[0].mxu0 %v4025
    %v4102 = vpop.f32.mrb[0].mxu0
    %v4103 = vadd.f32 0.0, %v4102
    %v4104 = vpop.f32.mrb[0].mxu0
    %4105 = vmatprep.mubr.f32.mxu0 0.0
    %4106 = vmatmul.mubr.f32.gmra.mrb[0].mxu0 %v4028
    %v4107 = vpop.f32.mrb[0].mxu0
    %v4108 = vadd.f32 0.0, %v4107
    %v4109 = vpop.f32.mrb[0].mxu0
    %4110 = vmatprep.mubr.f32.mxu0 0.0
    %4111 = vmatmul.mubr.f32.gmra.mrb[0].mxu0 %v4031
    %v4112 = vpop.f32.mrb[0].mxu0
    %v4113 = vadd.f32 0.0, %v4112
    %v4114 = vpop.f32.mrb[0].mxu0
    %4115 = vmatprep.mubr.f32.mxu0 0.0
    %4116 = vmatmul.mubr.f32.gmra.mrb[0].mxu0 %v4034
    %v4117 = vpop.f32.mrb[0].mxu0
    %v4118 = vadd.f32 0.0, %v4117
    %v4119 = vpop.f32.mrb[0].mxu0
    %4120 = vdwg.mxu0
    %v4121 = vadd.f32 %v849, %v4103
    %v4122 = vadd.f32 %v854, %v4108
    %v4123 = vadd.f32 %v859, %v4113
    %v4124 = vadd.f32 %v864, %v4118
    %v4125 = vmax.f32 %v4121, 0.0
    %v4126 = vmax.f32 %v4122, 0.0
    %v4127 = vmax.f32 %v4123, 0.0
    %v4128 = vmax.f32 %v4124, 0.0
    %4129 = vst.msk [vmem:[#allocation2] sm:$0xff] %vm632, %v4125
    %4130 = vst.msk [vmem:[#allocation2 + $0x8] sm:$0xff] %vm632, %v4126
    %4131 = vst.msk [vmem:[#allocation2 + $0x10] sm:$0xff] %vm632, %v4127
    %4132 = vst.msk [vmem:[#allocation2 + $0x18] sm:$0xff] %vm632, %v4128
    %v4133 = vld [vmem:[#allocation2] sm:$0xff]
    %v4134 = vld [vmem:[#allocation2 + $0x8] sm:$0xff]
    %v4135 = vld [vmem:[#allocation2 + $0x10] sm:$0xff]
    %v4136 = vld [vmem:[#allocation2 + $0x18] sm:$0xff]
    %v4137 = vld [vmem:[%s69] sm:$0xff]
    %v4138 = vld [vmem:[%s69 + $0x8] sm:$0xff]
    %v4139 = vld [vmem:[%s69 + $0x10] sm:$0xff]
    %v4140 = vld [vmem:[%s69 + $0x18] sm:$0xff]
    %v4141 = vld [vmem:[%s71] sm:$0xff]
    %v4142 = vld [vmem:[%s71 + $0x8] sm:$0xff]
    %v4143 = vld [vmem:[%s71 + $0x10] sm:$0xff]
    %v4144 = vld [vmem:[%s71 + $0x18] sm:$0xff]
    %v4146 = vsel %vm632, %v4133, 0
    %v4149 = vsel %vm632, %v4134, 0
    %v4152 = vsel %vm632, %v4135, 0
    %v4155 = vsel %vm632, %v4136, 0
    %4157 = vmatprep.subr.mxu0 0.0
    %4158 = vmatpush1.msra.mxu0 %v4141
    %4159 = vmatprep.subr.mxu0 0.0
    %4160 = vmatpush1.msra.mxu0 %v4142
    %4161 = vmatprep.subr.mxu0 0.0
    %4162 = vmatpush1.msra.mxu0 %v4143
    %4163 = vmatprep.subr.mxu0 0.0
    %4164 = vmatpush1.msra.mxu0 %v4144
    %4165 = vmatprep.subr.mxu0 0.0
    %4166 = vmatpush1.msra.mxu0 0.0
    %4167 = vmatprep.subr.mxu0 0.0
    %4168 = vmatpush1.msra.mxu0 0.0
    %4169 = vmatprep.subr.mxu0 0.0
    %4170 = vmatpush1.msra.mxu0 0.0
    %4171 = vmatprep.subr.mxu0 0.0
    %4172 = vmatpush1.msra.mxu0 0.0
    %4173 = vmatprep.subr.mxu0 0.0
    %4174 = vmatpush1.msra.mxu0 0.0
    %4175 = vmatprep.subr.mxu0 0.0
    %4176 = vmatpush1.msra.mxu0 0.0
    %4177 = vmatprep.subr.mxu0 0.0
    %4178 = vmatpush1.msra.mxu0 0.0
    %4179 = vmatprep.subr.mxu0 0.0
    %4180 = vmatpush1.msra.mxu0 0.0
    %4181 = vmatprep.subr.mxu0 0.0
    %4182 = vmatpush1.msra.mxu0 0.0
    %4183 = vmatprep.subr.mxu0 0.0
    %4184 = vmatpush1.msra.mxu0 0.0
    %4185 = vmatprep.subr.mxu0 0.0
    %4186 = vmatpush1.msra.mxu0 0.0
    %4187 = vmatprep.subr.mxu0 0.0
    %4188 = vmatpush1.msra.mxu0 0.0
    %4189 = vmatprep.subr.mxu0 0.0
    %4190 = vmatpush1.msra.mxu0 0.0
    %4191 = vmatprep.subr.mxu0 0.0
    %4192 = vmatpush1.msra.mxu0 0.0
    %4193 = vmatprep.subr.mxu0 0.0
    %4194 = vmatpush1.msra.mxu0 0.0
    %4195 = vmatprep.subr.mxu0 0.0
    %4196 = vmatpush1.msra.mxu0 0.0
    %4197 = vmatprep.subr.mxu0 0.0
    %4198 = vmatpush1.msra.mxu0 0.0
    %4199 = vmatprep.subr.mxu0 0.0
    %4200 = vmatpush1.msra.mxu0 0.0
    %4201 = vmatprep.subr.mxu0 0.0
    %4202 = vmatpush1.msra.mxu0 0.0
    %4203 = vmatprep.subr.mxu0 0.0
    %4204 = vmatpush1.msra.mxu0 0.0
    %4205 = vmatprep.subr.mxu0 0.0
    %4206 = vmatpush1.msra.mxu0 0.0
    %4207 = vmatprep.subr.mxu0 0.0
    %4208 = vmatpush1.msra.mxu0 0.0
    %4209 = vmatprep.subr.mxu0 0.0
    %4210 = vmatpush1.msra.mxu0 0.0
    %4211 = vmatprep.subr.mxu0 0.0
    %4212 = vmatpush1.msra.mxu0 0.0
    %4213 = vmatprep.subr.mxu0 0.0
    %4214 = vmatpush1.msra.mxu0 0.0
    %4215 = vmatprep.subr.mxu0 0.0
    %4216 = vmatpush1.msra.mxu0 0.0
    %4217 = vmatprep.subr.mxu0 0.0
    %4218 = vmatpush1.msra.mxu0 0.0
    %4219 = vmatprep.subr.mxu0 0.0
    %4220 = vmatpush1.msra.mxu0 0.0
    %4221 = vmatprep.mubr.f32.mxu0 0.0
    %4222 = vmatmul.mubr.f32.gmra.mrb[0].mxu0 %v4146
    %v4223 = vpop.f32.mrb[0].mxu0
    %v4224 = vadd.f32 0.0, %v4223
    %v4225 = vpop.f32.mrb[0].mxu0
    %4226 = vmatprep.mubr.f32.mxu0 0.0
    %4227 = vmatmul.mubr.f32.gmra.mrb[0].mxu0 %v4149
    %v4228 = vpop.f32.mrb[0].mxu0
    %v4229 = vadd.f32 0.0, %v4228
    %v4230 = vpop.f32.mrb[0].mxu0
    %4231 = vmatprep.mubr.f32.mxu0 0.0
    %4232 = vmatmul.mubr.f32.gmra.mrb[0].mxu0 %v4152
    %v4233 = vpop.f32.mrb[0].mxu0
    %v4234 = vadd.f32 0.0, %v4233
    %v4235 = vpop.f32.mrb[0].mxu0
    %4236 = vmatprep.mubr.f32.mxu0 0.0
    %4237 = vmatmul.mubr.f32.gmra.mrb[0].mxu0 %v4155
    %v4238 = vpop.f32.mrb[0].mxu0
    %v4239 = vadd.f32 0.0, %v4238
    %v4240 = vpop.f32.mrb[0].mxu0
    %4241 = vdwg.mxu0
    %4242 = vmatprep.subr.mxu0 0.0
    %4243 = vmatpush1.msra.mxu0 %v4137
    %4244 = vmatprep.subr.mxu0 0.0
    %4245 = vmatpush1.msra.mxu0 %v4138
    %4246 = vmatprep.subr.mxu0 0.0
    %4247 = vmatpush1.msra.mxu0 %v4139
    %4248 = vmatprep.subr.mxu0 0.0
    %4249 = vmatpush1.msra.mxu0 %v4140
    %4250 = vmatprep.subr.mxu0 0.0
    %4251 = vmatpush1.msra.mxu0 0.0
    %4252 = vmatprep.subr.mxu0 0.0
    %4253 = vmatpush1.msra.mxu0 0.0
    %4254 = vmatprep.subr.mxu0 0.0
    %4255 = vmatpush1.msra.mxu0 0.0
    %4256 = vmatprep.subr.mxu0 0.0
    %4257 = vmatpush1.msra.mxu0 0.0
    %4258 = vmatprep.subr.mxu0 0.0
    %4259 = vmatpush1.msra.mxu0 0.0
    %4260 = vmatprep.subr.mxu0 0.0
    %4261 = vmatpush1.msra.mxu0 0.0
    %4262 = vmatprep.subr.mxu0 0.0
    %4263 = vmatpush1.msra.mxu0 0.0
    %4264 = vmatprep.subr.mxu0 0.0
    %4265 = vmatpush1.msra.mxu0 0.0
    %4266 = vmatprep.subr.mxu0 0.0
    %4267 = vmatpush1.msra.mxu0 0.0
    %4268 = vmatprep.subr.mxu0 0.0
    %4269 = vmatpush1.msra.mxu0 0.0
    %4270 = vmatprep.subr.mxu0 0.0
    %4271 = vmatpush1.msra.mxu0 0.0
    %4272 = vmatprep.subr.mxu0 0.0
    %4273 = vmatpush1.msra.mxu0 0.0
    %4274 = vmatprep.subr.mxu0 0.0
    %4275 = vmatpush1.msra.mxu0 0.0
    %4276 = vmatprep.subr.mxu0 0.0
    %4277 = vmatpush1.msra.mxu0 0.0
    %4278 = vmatprep.subr.mxu0 0.0
    %4279 = vmatpush1.msra.mxu0 0.0
    %4280 = vmatprep.subr.mxu0 0.0
    %4281 = vmatpush1.msra.mxu0 0.0
    %4282 = vmatprep.subr.mxu0 0.0
    %4283 = vmatpush1.msra.mxu0 0.0
    %4284 = vmatprep.subr.mxu0 0.0
    %4285 = vmatpush1.msra.mxu0 0.0
    %4286 = vmatprep.subr.mxu0 0.0
    %4287 = vmatpush1.msra.mxu0 0.0
    %4288 = vmatprep.subr.mxu0 0.0
    %4289 = vmatpush1.msra.mxu0 0.0
    %4290 = vmatprep.subr.mxu0 0.0
    %4291 = vmatpush1.msra.mxu0 0.0
    %4292 = vmatprep.subr.mxu0 0.0
    %4293 = vmatpush1.msra.mxu0 0.0
    %4294 = vmatprep.subr.mxu0 0.0
    %4295 = vmatpush1.msra.mxu0 0.0
    %4296 = vmatprep.subr.mxu0 0.0
    %4297 = vmatpush1.msra.mxu0 0.0
    %4298 = vmatprep.subr.mxu0 0.0
    %4299 = vmatpush1.msra.mxu0 0.0
    %4300 = vmatprep.subr.mxu0 0.0
    %4301 = vmatpush1.msra.mxu0 0.0
    %4302 = vmatprep.subr.mxu0 0.0
    %4303 = vmatpush1.msra.mxu0 0.0
    %4304 = vmatprep.subr.mxu0 0.0
    %4305 = vmatpush1.msra.mxu0 0.0
    %4306 = vmatprep.mubr.f32.mxu0 0.0
    %4307 = vmatmul.mubr.f32.gmra.mrb[0].mxu0 %v771
    %v4308 = vpop.f32.mrb[0].mxu0
    %v4309 = vadd.f32 %v4224, %v4308
    %v4310 = vpop.f32.mrb[0].mxu0
    %4311 = vmatprep.mubr.f32.mxu0 0.0
    %4312 = vmatmul.mubr.f32.gmra.mrb[0].mxu0 %v774
    %v4313 = vpop.f32.mrb[0].mxu0
    %v4314 = vadd.f32 %v4229, %v4313
    %v4315 = vpop.f32.mrb[0].mxu0
    %4316 = vmatprep.mubr.f32.mxu0 0.0
    %4317 = vmatmul.mubr.f32.gmra.mrb[0].mxu0 %v777
    %v4318 = vpop.f32.mrb[0].mxu0
    %v4319 = vadd.f32 %v4234, %v4318
    %v4320 = vpop.f32.mrb[0].mxu0
    %4321 = vmatprep.mubr.f32.mxu0 0.0
    %4322 = vmatmul.mubr.f32.gmra.mrb[0].mxu0 %v780
    %v4323 = vpop.f32.mrb[0].mxu0
    %v4324 = vadd.f32 %v4239, %v4323
    %v4325 = vpop.f32.mrb[0].mxu0
    %4326 = vdwg.mxu0
    %v4327 = vld [vmem:[%s73] sm:$0x1]
    %v4329 = vlaneseq
    %v4330 = vshrl.u32 %v4329, 7
    %v4331 = vsub.s32 0, %v4330
    %v4332 = vrot.slane %v4327, %v4331
    %v4334 = vadd.f32 %v4309, %v4332
    %v4335 = vadd.f32 %v4314, %v4332
    %v4336 = vadd.f32 %v4319, %v4332
    %v4337 = vadd.f32 %v4324, %v4332
    %v4338 = vld [vmem:[%s75] sm:$0x1]
    %v4339 = vld [vmem:[%s77] sm:$0x1]
    %v4340 = vld [vmem:[%s79] sm:$0x1]
    %v4341 = vsel %vm632, %v4334, 0.0
    %v4342 = vsel %vm632, %v4335, 0.0
    %v4343 = vadd.f32 %v4341, %v4342
    %v4344 = vsel %vm632, %v4336, 0.0
    %v4345 = vadd.f32 %v4343, %v4344
    %v4346 = vsel %vm632, %v4337, 0.0
    %v4347 = vadd.f32 %v4345, %v4346
    %v4348 = vrot.slane %v4347, 4
    %v4349 = vadd.f32 %v4347, %v4348
    %v4350 = vrot.slane %v4349, 2
    %v4351 = vadd.f32 %v4349, %v4350
    %v4352 = vrot.slane %v4351, 1
    %v4353 = vadd.f32 %v4351, %v4352
    %v4354 = vmul.f32 %v4353, %v363
    %v4355 = vmul.f32 %v4340, %v4354
    %v4357 = vlaneseq
    %v4358 = vshrl.u32 %v4357, 7
    %v4359 = vsub.s32 0, %v4358
    %v4360 = vrot.slane %v4355, %v4359
    %v4362 = vsub.f32 %v4334, %v4360
    %v4363 = vsub.f32 %v4335, %v4360
    %v4364 = vsub.f32 %v4336, %v4360
    %v4365 = vsub.f32 %v4337, %v4360
    %v4366 = vmul.f32 %v4362, %v4362
    %v4367 = vmul.f32 %v4363, %v4363
    %v4368 = vmul.f32 %v4364, %v4364
    %v4369 = vmul.f32 %v4365, %v4365
    %v4370 = vsel %vm632, %v4366, 0.0
    %v4371 = vsel %vm632, %v4367, 0.0
    %v4372 = vadd.f32 %v4370, %v4371
    %v4373 = vsel %vm632, %v4368, 0.0
    %v4374 = vadd.f32 %v4372, %v4373
    %v4375 = vsel %vm632, %v4369, 0.0
    %v4376 = vadd.f32 %v4374, %v4375
    %v4377 = vrot.slane %v4376, 4
    %v4378 = vadd.f32 %v4376, %v4377
    %v4379 = vrot.slane %v4378, 2
    %v4380 = vadd.f32 %v4378, %v4379
    %v4381 = vrot.slane %v4380, 1
    %v4382 = vadd.f32 %v4380, %v4381
    %v4383 = vmul.f32 %v4382, %v363
    %v4385 = vlaneseq
    %v4386 = vshrl.u32 %v4385, 7
    %v4387 = vsub.s32 0, %v4386
    %v4388 = vrot.slane %v4338, %v4387
    %v4390 = vmul.f32 %v4388, %v4362
    %v4391 = vmul.f32 %v4388, %v4363
    %v4392 = vmul.f32 %v4388, %v4364
    %v4393 = vmul.f32 %v4388, %v4365
    %v4394 = vadd.f32 %v4383, 1e-05
    %v4395 = vrsqrt.pop %v4394
    %v4396 = vmul.f32 %v4390, %v4395
    %v4397 = vmul.f32 %v4391, %v4395
    %v4398 = vmul.f32 %v4392, %v4395
    %v4399 = vmul.f32 %v4393, %v4395
    %v4401 = vlaneseq
    %v4402 = vshrl.u32 %v4401, 7
    %v4403 = vsub.s32 0, %v4402
    %v4404 = vrot.slane %v4339, %v4403
    %v4406 = vadd.f32 %v4396, %v4404
    %v4407 = vadd.f32 %v4397, %v4404
    %v4408 = vadd.f32 %v4398, %v4404
    %v4409 = vadd.f32 %v4399, %v4404
    %v4410 = vmax.f32 %v4406, 0.0
    %v4411 = vmax.f32 %v4407, 0.0
    %v4412 = vmax.f32 %v4408, 0.0
    %v4413 = vmax.f32 %v4409, 0.0
    %v4414 = vld [vmem:[%s81] sm:$0xff]
    %v4415 = vld [vmem:[%s81 + $0x8] sm:$0xff]
    %v4416 = vld [vmem:[%s81 + $0x10] sm:$0xff]
    %v4417 = vld [vmem:[%s81 + $0x18] sm:$0xff]
    %v4418 = vld [vmem:[%s83] sm:$0x1]
    %v4420 = vlaneseq
    %v4421 = vshrl.u32 %v4420, 7
    %v4422 = vsub.s32 0, %v4421
    %v4423 = vrot.slane %v4418, %v4422
    %v4426 = vsel %vm632, %v4410, 0
    %v4429 = vsel %vm632, %v4411, 0
    %v4432 = vsel %vm632, %v4412, 0
    %v4435 = vsel %vm632, %v4413, 0
    %4437 = vmatprep.subr.mxu0 0.0
    %4438 = vmatpush1.msra.mxu0 %v4414
    %4439 = vmatprep.subr.mxu0 0.0
    %4440 = vmatpush1.msra.mxu0 %v4415
    %4441 = vmatprep.subr.mxu0 0.0
    %4442 = vmatpush1.msra.mxu0 %v4416
    %4443 = vmatprep.subr.mxu0 0.0
    %4444 = vmatpush1.msra.mxu0 %v4417
    %4445 = vmatprep.subr.mxu0 0.0
    %4446 = vmatpush1.msra.mxu0 0.0
    %4447 = vmatprep.subr.mxu0 0.0
    %4448 = vmatpush1.msra.mxu0 0.0
    %4449 = vmatprep.subr.mxu0 0.0
    %4450 = vmatpush1.msra.mxu0 0.0
    %4451 = vmatprep.subr.mxu0 0.0
    %4452 = vmatpush1.msra.mxu0 0.0
    %4453 = vmatprep.subr.mxu0 0.0
    %4454 = vmatpush1.msra.mxu0 0.0
    %4455 = vmatprep.subr.mxu0 0.0
    %4456 = vmatpush1.msra.mxu0 0.0
    %4457 = vmatprep.subr.mxu0 0.0
    %4458 = vmatpush1.msra.mxu0 0.0
    %4459 = vmatprep.subr.mxu0 0.0
    %4460 = vmatpush1.msra.mxu0 0.0
    %4461 = vmatprep.subr.mxu0 0.0
    %4462 = vmatpush1.msra.mxu0 0.0
    %4463 = vmatprep.subr.mxu0 0.0
    %4464 = vmatpush1.msra.mxu0 0.0
    %4465 = vmatprep.subr.mxu0 0.0
    %4466 = vmatpush1.msra.mxu0 0.0
    %4467 = vmatprep.subr.mxu0 0.0
    %4468 = vmatpush1.msra.mxu0 0.0
    %4469 = vmatprep.subr.mxu0 0.0
    %4470 = vmatpush1.msra.mxu0 0.0
    %4471 = vmatprep.subr.mxu0 0.0
    %4472 = vmatpush1.msra.mxu0 0.0
    %4473 = vmatprep.subr.mxu0 0.0
    %4474 = vmatpush1.msra.mxu0 0.0
    %4475 = vmatprep.subr.mxu0 0.0
    %4476 = vmatpush1.msra.mxu0 0.0
    %4477 = vmatprep.subr.mxu0 0.0
    %4478 = vmatpush1.msra.mxu0 0.0
    %4479 = vmatprep.subr.mxu0 0.0
    %4480 = vmatpush1.msra.mxu0 0.0
    %4481 = vmatprep.subr.mxu0 0.0
    %4482 = vmatpush1.msra.mxu0 0.0
    %4483 = vmatprep.subr.mxu0 0.0
    %4484 = vmatpush1.msra.mxu0 0.0
    %4485 = vmatprep.subr.mxu0 0.0
    %4486 = vmatpush1.msra.mxu0 0.0
    %4487 = vmatprep.subr.mxu0 0.0
    %4488 = vmatpush1.msra.mxu0 0.0
    %4489 = vmatprep.subr.mxu0 0.0
    %4490 = vmatpush1.msra.mxu0 0.0
    %4491 = vmatprep.subr.mxu0 0.0
    %4492 = vmatpush1.msra.mxu0 0.0
    %4493 = vmatprep.subr.mxu0 0.0
    %4494 = vmatpush1.msra.mxu0 0.0
    %4495 = vmatprep.subr.mxu0 0.0
    %4496 = vmatpush1.msra.mxu0 0.0
    %4497 = vmatprep.subr.mxu0 0.0
    %4498 = vmatpush1.msra.mxu0 0.0
    %4499 = vmatprep.subr.mxu0 0.0
    %4500 = vmatpush1.msra.mxu0 0.0
    %4501 = vmatprep.mubr.f32.mxu0 0.0
    %4502 = vmatmul.mubr.f32.gmra.mrb[0].mxu0 %v4426
    %v4503 = vpop.f32.mrb[0].mxu0
    %v4504 = vadd.f32 %v4423, %v4503
    %v4505 = vpop.f32.mrb[0].mxu0
    %4506 = vmatprep.mubr.f32.mxu0 0.0
    %4507 = vmatmul.mubr.f32.gmra.mrb[0].mxu0 %v4429
    %v4508 = vpop.f32.mrb[0].mxu0
    %v4509 = vadd.f32 %v4423, %v4508
    %v4510 = vpop.f32.mrb[0].mxu0
    %4511 = vmatprep.mubr.f32.mxu0 0.0
    %4512 = vmatmul.mubr.f32.gmra.mrb[0].mxu0 %v4432
    %v4513 = vpop.f32.mrb[0].mxu0
    %v4514 = vadd.f32 %v4423, %v4513
    %v4515 = vpop.f32.mrb[0].mxu0
    %4516 = vmatprep.mubr.f32.mxu0 0.0
    %4517 = vmatmul.mubr.f32.gmra.mrb[0].mxu0 %v4435
    %v4518 = vpop.f32.mrb[0].mxu0
    %v4519 = vadd.f32 %v4423, %v4518
    %v4520 = vpop.f32.mrb[0].mxu0
    %4521 = vdwg.mxu0
    %vm4522 = vcmask 15360
    %4523 = vst.msk [vmem:[%s85] sm:$0xff] %vm4522, %v4504
    %4524 = vst.msk [vmem:[%s85 + $0x8] sm:$0xff] %vm4522, %v4509
    %4525 = vst.msk [vmem:[%s85 + $0x10] sm:$0xff] %vm4522, %v4514
    %4526 = vst.msk [vmem:[%s85 + $0x18] sm:$0xff] %vm4522, %v4519
    // Predicated region
    $region210: #{tpu_custom_call.1} parent=1 // pred_check
      _
    $region211: #{tpu_custom_call.1} parent=1 // pred_check_branch
      %4528 = sbr.rel (0) target = $region213
    $region212: #{tpu_custom_call.1} parent=1 // pred_region
      _
    $region213: #{tpu_custom_call.1} parent=1 // pred_fallthru
      _
    // Predicated region
    $region214: #{tpu_custom_call.1} parent=1 // pred_check
      _
    $region215: #{tpu_custom_call.1} parent=1 // pred_check_branch
      %4530 = sbr.rel (0) target = $region217
    $region216: #{tpu_custom_call.1} parent=1 // pred_region
      _
    $region217: #{tpu_custom_call.1} parent=1 // pred_fallthru
      _
    %4531 = vsyncpa [#allocation11], 1
    %4532 = vsyncpa [#allocation13], 1
    %4533 = vsyncpa [#allocation16], 1

</llo_original>
